<compile_context>
chip_gen: v6e
topology: v6e:2x2x1
jax: 0.10.0
libtpu: 0.0.40
codegen_flags: <defaults>
</compile_context>

<pallas_src>
import functools

import jax
import jax.numpy as jnp
from jax import lax
from jax.experimental import pallas as pl
from jax.experimental.pallas import tpu as pltpu


# ----------------------------- Pallas kernel ---------------------------------


def _make_lstm_kernel(num_layers, seq_len, batch, input_dim, hidden_dim, ff_dim):
    H = hidden_dim
    B = batch

    def kernel(*refs):
        # refs layout:
        #   x_ref (T*B, D),
        #   [wih_l, whh_l, b_l] * num_layers,
        #   fc1_w, fc1_b, fc_w, fc_b,
        #   out_ref,
        #   h_scr, c_scr, seq_scr, pre_scr, hfin_scr
        x_ref = refs[0]
        layer_refs = refs[1 : 1 + 3 * num_layers]
        fc1_w_ref, fc1_b_ref, fc_w_ref, fc_b_ref = refs[
            1 + 3 * num_layers : 5 + 3 * num_layers
        ]
        out_ref = refs[5 + 3 * num_layers]
        h_scr, c_scr, seq_scr, pre_scr, hfin_scr = refs[6 + 3 * num_layers :]

        for l in range(num_layers):
            wih = layer_refs[3 * l][...]      # (D_l, 4H)
            whh = layer_refs[3 * l + 1][...]  # (H, 4H)
            b = layer_refs[3 * l + 2][...]    # (1, 4H)  (b_ih + b_hh combined)

            # ---- hoisted input projection + bias for ALL timesteps at once ----
            # One big matmul instead of T tiny ones inside the recurrence.
            if l == 0:
                x_flat = x_ref[...]           # (T*B, D)
            else:
                x_flat = seq_scr[...]         # (T*B, H) = previous layer outputs
            pre_scr[...] = (
                jnp.dot(x_flat, wih, preferred_element_type=jnp.float32) + b
            )                                 # (T*B, 4H)

            h_scr[...] = jnp.zeros_like(h_scr)
            c_scr[...] = jnp.zeros_like(c_scr)

            write_seq = l < num_layers - 1    # last layer's sequence is unused

            def step(t, carry, _whh=whh, _write_seq=write_seq):
                row = pl.multiple_of(t * B, B)
                h = h_scr[...]
                c = c_scr[...]
                # Only the recurrent matmul is on the serial critical path.
                gates = pre_scr[pl.ds(row, B), :] + jnp.dot(
                    h, _whh, preferred_element_type=jnp.float32
                )                                           # (B, 4H)
                # Two full-vreg EUP pushes, then pick the 32-lane gate pieces.
                sg = jax.nn.sigmoid(gates)
                tg = jnp.tanh(gates)
                i_g = sg[:, 0:H]              # PyTorch gate order i, f, g, o
                f_g = sg[:, H : 2 * H]
                g_g = tg[:, 2 * H : 3 * H]
                o_g = sg[:, 3 * H : 4 * H]
                c_new = f_g * c + i_g * g_g
                h_new = o_g * jnp.tanh(c_new)
                c_scr[...] = c_new
                h_scr[...] = h_new
                if _write_seq:
                    seq_scr[pl.ds(row, B), :] = h_new
                return carry

            # Short fixed trip count: fully unroll for scheduler visibility.
            lax.fori_loop(0, seq_len, step, 0, unroll=True)

            # Stash tanh(h_final) of this layer; head is applied once at the end.
            hfin_scr[l * B : (l + 1) * B, :] = jnp.tanh(h_scr[...])

        # ---- batched fc head over all layers' final hidden states ----
        h_fin = hfin_scr[...]                                       # (L*B, H)
        z = jnp.tanh(
            jnp.dot(h_fin, fc1_w_ref[...], preferred_element_type=jnp.float32)
            + fc1_b_ref[...]
        )                                                           # (L*B, 128)
        out_ref[...] = (
            jnp.dot(z, fc_w_ref[...], preferred_element_type=jnp.float32)
            + fc_b_ref[...]
        )                                                           # (L*B, 1)

    return kernel


# ------------------------------ wrapper ---------------------------------------


@functools.partial(jax.jit, static_argnames=("num_layers", "hidden_dim", "ff_dim"))
def lstm_forward(x, params, *, num_layers, hidden_dim, ff_dim):
    B, T, D = x.shape
    # (batch, seq, D) -> (seq, batch, D) -> (seq*batch, D):
    # timestep t lives at rows [t*B, (t+1)*B), so the kernel needs no reshapes.
    x_flat = jnp.transpose(x, (1, 0, 2)).reshape(T * B, D)

    inputs = [x_flat]
    for l in range(num_layers):
        inputs += [params[f"wih{l}"], params[f"whh{l}"], params[f"b{l}"]]
    inputs += [params["fc1_w"], params["fc1_b"], params["fc_w"], params["fc_b"]]

    kernel = _make_lstm_kernel(num_layers, T, B, D, hidden_dim, ff_dim)

    out = pl.pallas_call(
        kernel,
        out_shape=jax.ShapeDtypeStruct((num_layers * B, 1), jnp.float32),
        in_specs=[pl.BlockSpec(memory_space=pltpu.MemorySpace.VMEM)] * len(inputs),
        out_specs=pl.BlockSpec(memory_space=pltpu.MemorySpace.VMEM),
        scratch_shapes=[
            pltpu.VMEM((B, hidden_dim), jnp.float32),                 # h state
            pltpu.VMEM((B, hidden_dim), jnp.float32),                 # c state
            pltpu.VMEM((T * B, hidden_dim), jnp.float32),             # layer outputs
            pltpu.VMEM((T * B, 4 * hidden_dim), jnp.float32),         # x@Wih + b
            pltpu.VMEM((num_layers * B, hidden_dim), jnp.float32),    # tanh(h_final)
        ],
    )(*inputs)
    return out


# ------------------------- params & pure-JAX reference ------------------------


def init_params(key, input_dim, hidden_dim, num_layers, ff_dim=128):
    params = {}
    k = 1.0 / jnp.sqrt(hidden_dim)
    keys = jax.random.split(key, 4 * num_layers + 4)
    ki = 0
    for l in range(num_layers):
        d_in = input_dim if l == 0 else hidden_dim
        params[f"wih{l}"] = jax.random.uniform(
            keys[ki], (d_in, 4 * hidden_dim), jnp.float32, -k, k
        )
        params[f"whh{l}"] = jax.random.uniform(
            keys[ki + 1], (hidden_dim, 4 * hidden_dim), jnp.float32, -k, k
        )
        b_ih = jax.random.uniform(keys[ki + 2], (1, 4 * hidden_dim), jnp.float32, -k, k)
        b_hh = jax.random.uniform(keys[ki + 3], (1, 4 * hidden_dim), jnp.float32, -k, k)
        params[f"b{l}"] = b_ih + b_hh
        ki += 4
    params["fc1_w"] = jax.random.uniform(
        keys[ki], (hidden_dim, ff_dim), jnp.float32, -k, k
    )
    params["fc1_b"] = jax.random.uniform(keys[ki + 1], (1, ff_dim), jnp.float32, -k, k)
    kf = 1.0 / jnp.sqrt(ff_dim)
    params["fc_w"] = jax.random.uniform(keys[ki + 2], (ff_dim, 1), jnp.float32, -kf, kf)
    params["fc_b"] = jax.random.uniform(keys[ki + 3], (1, 1), jnp.float32, -kf, kf)
    return params


def lstm_reference(x, params, num_layers, hidden_dim):
    B, T, _ = x.shape
    H = hidden_dim
    seq = x
    h_all = []
    for l in range(num_layers):
        wih, whh, b = params[f"wih{l}"], params[f"whh{l}"], params[f"b{l}"]
        h = jnp.zeros((B, H), jnp.float32)
        c = jnp.zeros((B, H), jnp.float32)
        outs = []
        for t in range(T):
            gates = seq[:, t, :] @ wih + h @ whh + b
            i_g = jax.nn.sigmoid(gates[:, :H])
            f_g = jax.nn.sigmoid(gates[:, H : 2 * H])
            g_g = jnp.tanh(gates[:, 2 * H : 3 * H])
            o_g = jax.nn.sigmoid(gates[:, 3 * H :])
            c = f_g * c + i_g * g_g
            h = o_g * jnp.tanh(c)
            outs.append(h)
        seq = jnp.stack(outs, axis=1)
        h_all.append(h)
    h_out = jnp.concatenate(h_all, axis=0)  # (num_layers*B, H) == h_out.view(-1, H)
    z = jnp.tanh(jnp.tanh(h_out) @ params["fc1_w"] + params["fc1_b"])
    return z @ params["fc_w"] + params["fc_b"]


# --------------------------------- main ----------------------------------------


if __name__ == "__main__":
    INPUT_DIM = 16
    HIDDEN_DIM = 32
    NUM_LAYERS = 2
    FF_DIM = 128
    BATCH = 8
    SEQ = 8

    key = jax.random.PRNGKey(0)
    k_x, k_p = jax.random.split(key)
    x = jax.random.normal(k_x, (BATCH, SEQ, INPUT_DIM), jnp.float32)
    params = init_params(k_p, INPUT_DIM, HIDDEN_DIM, NUM_LAYERS, FF_DIM)

    out = lstm_forward(
        x, params, num_layers=NUM_LAYERS, hidden_dim=HIDDEN_DIM, ff_dim=FF_DIM
    )
    out = jax.block_until_ready(out)

    ref = lstm_reference(x, params, NUM_LAYERS, HIDDEN_DIM)
    assert out.shape == (NUM_LAYERS * BATCH, 1), out.shape
    assert jnp.allclose(out, ref, atol=5e-5, rtol=5e-5), (
        float(jnp.max(jnp.abs(out - ref)))
    )
    print("KERNEL_OK")
</pallas_src>

<mosaic_0001>
module attributes {stable_mosaic.version = 11 : i64} {
  func.func @kernel(%arg0: memref<64x16xf32, #tpu.memory_space<vmem>>, %arg1: memref<16x128xf32, #tpu.memory_space<vmem>>, %arg2: memref<32x128xf32, #tpu.memory_space<vmem>>, %arg3: memref<1x128xf32, #tpu.memory_space<vmem>>, %arg4: memref<32x128xf32, #tpu.memory_space<vmem>>, %arg5: memref<32x128xf32, #tpu.memory_space<vmem>>, %arg6: memref<1x128xf32, #tpu.memory_space<vmem>>, %arg7: memref<32x128xf32, #tpu.memory_space<vmem>>, %arg8: memref<1x128xf32, #tpu.memory_space<vmem>>, %arg9: memref<128x1xf32, #tpu.memory_space<vmem>>, %arg10: memref<1x1xf32, #tpu.memory_space<vmem>>, %arg11: memref<16x1xf32, #tpu.memory_space<vmem>>, %arg12: memref<8x32xf32, #tpu.memory_space<vmem>>, %arg13: memref<8x32xf32, #tpu.memory_space<vmem>>, %arg14: memref<64x32xf32, #tpu.memory_space<vmem>>, %arg15: memref<64x128xf32, #tpu.memory_space<vmem>>, %arg16: memref<16x32xf32, #tpu.memory_space<vmem>>) attributes {dimension_semantics = [], scalar_prefetch = 0 : i64, scratch_operands = 5 : i64, tpu.core_type = #tpu.core_type<tc>} {
    %c0 = arith.constant 0 : index
    %c0_0 = arith.constant 0 : index
    %0 = vector.load %arg1[%c0, %c0_0] : memref<16x128xf32, #tpu.memory_space<vmem>>, vector<16x128xf32>
    %c0_1 = arith.constant 0 : index
    %c0_2 = arith.constant 0 : index
    %1 = vector.load %arg2[%c0_1, %c0_2] : memref<32x128xf32, #tpu.memory_space<vmem>>, vector<32x128xf32>
    %c0_3 = arith.constant 0 : index
    %c0_4 = arith.constant 0 : index
    %2 = vector.load %arg3[%c0_3, %c0_4] : memref<1x128xf32, #tpu.memory_space<vmem>>, vector<1x128xf32>
    %c0_5 = arith.constant 0 : index
    %c0_6 = arith.constant 0 : index
    %3 = vector.load %arg0[%c0_5, %c0_6] : memref<64x16xf32, #tpu.memory_space<vmem>>, vector<64x16xf32>
    %cst = arith.constant dense<0.000000e+00> : vector<64x128xf32>
    %4 = tpu.matmul %3, %0, %cst {dimension_numbers = #tpu.dot_dimension_numbers<[1], [0], [0], [1], [0, 0, 1, 1], [], []>} : vector<64x16xf32>, vector<16x128xf32>, vector<64x128xf32> -> vector<64x128xf32>
    %5 = vector.broadcast %2 : vector<1x128xf32> to vector<64x128xf32>
    %6 = arith.addf %4, %5 : vector<64x128xf32>
    %c0_7 = arith.constant 0 : index
    %c0_8 = arith.constant 0 : index
    %7 = vector.load %arg15[%c0_7, %c0_8] : memref<64x128xf32, #tpu.memory_space<vmem>>, vector<64x128xf32>
    tpu.vector_store %arg15[%c0_7, %c0_8], %6 {strides = array<i32>} : memref<64x128xf32, #tpu.memory_space<vmem>>, vector<64x128xf32>,
    %cst_9 = arith.constant 0.000000e+00 : f32
    %8 = vector.broadcast %cst_9 : f32 to vector<8x32xf32>
    %c0_10 = arith.constant 0 : index
    %c0_11 = arith.constant 0 : index
    %9 = vector.load %arg12[%c0_10, %c0_11] : memref<8x32xf32, #tpu.memory_space<vmem>>, vector<8x32xf32>
    tpu.vector_store %arg12[%c0_10, %c0_11], %8 {strides = array<i32>} : memref<8x32xf32, #tpu.memory_space<vmem>>, vector<8x32xf32>,
    %cst_12 = arith.constant 0.000000e+00 : f32
    %10 = vector.broadcast %cst_12 : f32 to vector<8x32xf32>
    %c0_13 = arith.constant 0 : index
    %c0_14 = arith.constant 0 : index
    %11 = vector.load %arg13[%c0_13, %c0_14] : memref<8x32xf32, #tpu.memory_space<vmem>>, vector<8x32xf32>
    tpu.vector_store %arg13[%c0_13, %c0_14], %10 {strides = array<i32>} : memref<8x32xf32, #tpu.memory_space<vmem>>, vector<8x32xf32>,
    %c0_i32 = arith.constant 0 : i32
    %c8_i32 = arith.constant 8 : i32
    %12 = arith.muli %c0_i32, %c8_i32 : i32
    %13 = tpu.assume_multiple %12, 8 : i32
    %c0_15 = arith.constant 0 : index
    %c0_16 = arith.constant 0 : index
    %14 = vector.load %arg12[%c0_15, %c0_16] : memref<8x32xf32, #tpu.memory_space<vmem>>, vector<8x32xf32>
    %c0_17 = arith.constant 0 : index
    %c0_18 = arith.constant 0 : index
    %15 = vector.load %arg13[%c0_17, %c0_18] : memref<8x32xf32, #tpu.memory_space<vmem>>, vector<8x32xf32>
    %16 = arith.index_cast %13 : i32 to index
    %c0_19 = arith.constant 0 : index
    %17 = vector.load %arg15[%16, %c0_19] : memref<64x128xf32, #tpu.memory_space<vmem>>, vector<8x128xf32>
    %cst_20 = arith.constant dense<0.000000e+00> : vector<8x128xf32>
    %18 = tpu.matmul %14, %1, %cst_20 {dimension_numbers = #tpu.dot_dimension_numbers<[1], [0], [0], [1], [0, 0, 1, 1], [], []>} : vector<8x32xf32>, vector<32x128xf32>, vector<8x128xf32> -> vector<8x128xf32>
    %19 = arith.addf %17, %18 : vector<8x128xf32>
    %20 = arith.negf %19 : vector<8x128xf32>
    %21 = math.exp %20 : vector<8x128xf32>
    %cst_21 = arith.constant 1.000000e+00 : f32
    %22 = vector.broadcast %cst_21 : f32 to vector<8x128xf32>
    %23 = arith.addf %22, %21 : vector<8x128xf32>
    %24 = arith.divf %22, %23 : vector<8x128xf32>
    %25 = math.tanh %19 : vector<8x128xf32>
    %26 = vector.extract_strided_slice %24 {offsets = [0, 0], sizes = [8, 32], strides = [1, 1]} : vector<8x128xf32> to vector<8x32xf32>
    %27 = vector.extract_strided_slice %24 {offsets = [0, 32], sizes = [8, 32], strides = [1, 1]} : vector<8x128xf32> to vector<8x32xf32>
    %28 = vector.extract_strided_slice %25 {offsets = [0, 64], sizes = [8, 32], strides = [1, 1]} : vector<8x128xf32> to vector<8x32xf32>
    %29 = vector.extract_strided_slice %24 {offsets = [0, 96], sizes = [8, 32], strides = [1, 1]} : vector<8x128xf32> to vector<8x32xf32>
    %30 = arith.mulf %27, %15 : vector<8x32xf32>
    %31 = arith.mulf %26, %28 : vector<8x32xf32>
    %32 = arith.addf %30, %31 : vector<8x32xf32>
    %33 = math.tanh %32 : vector<8x32xf32>
    %34 = arith.mulf %29, %33 : vector<8x32xf32>
    %c0_22 = arith.constant 0 : index
    %c0_23 = arith.constant 0 : index
    %35 = vector.load %arg13[%c0_22, %c0_23] : memref<8x32xf32, #tpu.memory_space<vmem>>, vector<8x32xf32>
    tpu.vector_store %arg13[%c0_22, %c0_23], %32 {strides = array<i32>} : memref<8x32xf32, #tpu.memory_space<vmem>>, vector<8x32xf32>,
    %c0_24 = arith.constant 0 : index
    %c0_25 = arith.constant 0 : index
    %36 = vector.load %arg12[%c0_24, %c0_25] : memref<8x32xf32, #tpu.memory_space<vmem>>, vector<8x32xf32>
    tpu.vector_store %arg12[%c0_24, %c0_25], %34 {strides = array<i32>} : memref<8x32xf32, #tpu.memory_space<vmem>>, vector<8x32xf32>,
    %37 = arith.index_cast %13 : i32 to index
    %c0_26 = arith.constant 0 : index
    %38 = vector.load %arg14[%37, %c0_26] : memref<64x32xf32, #tpu.memory_space<vmem>>, vector<8x32xf32>
    tpu.vector_store %arg14[%37, %c0_26], %34 {strides = array<i32>} : memref<64x32xf32, #tpu.memory_space<vmem>>, vector<8x32xf32>,
    %c1_i32 = arith.constant 1 : i32
    %c8_i32_27 = arith.constant 8 : i32
    %39 = arith.muli %c1_i32, %c8_i32_27 : i32
    %40 = tpu.assume_multiple %39, 8 : i32
    %c0_28 = arith.constant 0 : index
    %c0_29 = arith.constant 0 : index
    %41 = vector.load %arg12[%c0_28, %c0_29] : memref<8x32xf32, #tpu.memory_space<vmem>>, vector<8x32xf32>
    %c0_30 = arith.constant 0 : index
    %c0_31 = arith.constant 0 : index
    %42 = vector.load %arg13[%c0_30, %c0_31] : memref<8x32xf32, #tpu.memory_space<vmem>>, vector<8x32xf32>
    %43 = arith.index_cast %40 : i32 to index
    %c0_32 = arith.constant 0 : index
    %44 = vector.load %arg15[%43, %c0_32] : memref<64x128xf32, #tpu.memory_space<vmem>>, vector<8x128xf32>
    %cst_33 = arith.constant dense<0.000000e+00> : vector<8x128xf32>
    %45 = tpu.matmul %41, %1, %cst_33 {dimension_numbers = #tpu.dot_dimension_numbers<[1], [0], [0], [1], [0, 0, 1, 1], [], []>} : vector<8x32xf32>, vector<32x128xf32>, vector<8x128xf32> -> vector<8x128xf32>
    %46 = arith.addf %44, %45 : vector<8x128xf32>
    %47 = arith.negf %46 : vector<8x128xf32>
    %48 = math.exp %47 : vector<8x128xf32>
    %cst_34 = arith.constant 1.000000e+00 : f32
    %49 = vector.broadcast %cst_34 : f32 to vector<8x128xf32>
    %50 = arith.addf %49, %48 : vector<8x128xf32>
    %51 = arith.divf %49, %50 : vector<8x128xf32>
    %52 = math.tanh %46 : vector<8x128xf32>
    %53 = vector.extract_strided_slice %51 {offsets = [0, 0], sizes = [8, 32], strides = [1, 1]} : vector<8x128xf32> to vector<8x32xf32>
    %54 = vector.extract_strided_slice %51 {offsets = [0, 32], sizes = [8, 32], strides = [1, 1]} : vector<8x128xf32> to vector<8x32xf32>
    %55 = vector.extract_strided_slice %52 {offsets = [0, 64], sizes = [8, 32], strides = [1, 1]} : vector<8x128xf32> to vector<8x32xf32>
    %56 = vector.extract_strided_slice %51 {offsets = [0, 96], sizes = [8, 32], strides = [1, 1]} : vector<8x128xf32> to vector<8x32xf32>
    %57 = arith.mulf %54, %42 : vector<8x32xf32>
    %58 = arith.mulf %53, %55 : vector<8x32xf32>
    %59 = arith.addf %57, %58 : vector<8x32xf32>
    %60 = math.tanh %59 : vector<8x32xf32>
    %61 = arith.mulf %56, %60 : vector<8x32xf32>
    %c0_35 = arith.constant 0 : index
    %c0_36 = arith.constant 0 : index
    %62 = vector.load %arg13[%c0_35, %c0_36] : memref<8x32xf32, #tpu.memory_space<vmem>>, vector<8x32xf32>
    tpu.vector_store %arg13[%c0_35, %c0_36], %59 {strides = array<i32>} : memref<8x32xf32, #tpu.memory_space<vmem>>, vector<8x32xf32>,
    %c0_37 = arith.constant 0 : index
    %c0_38 = arith.constant 0 : index
    %63 = vector.load %arg12[%c0_37, %c0_38] : memref<8x32xf32, #tpu.memory_space<vmem>>, vector<8x32xf32>
    tpu.vector_store %arg12[%c0_37, %c0_38], %61 {strides = array<i32>} : memref<8x32xf32, #tpu.memory_space<vmem>>, vector<8x32xf32>,
    %64 = arith.index_cast %40 : i32 to index
    %c0_39 = arith.constant 0 : index
    %65 = vector.load %arg14[%64, %c0_39] : memref<64x32xf32, #tpu.memory_space<vmem>>, vector<8x32xf32>
    tpu.vector_store %arg14[%64, %c0_39], %61 {strides = array<i32>} : memref<64x32xf32, #tpu.memory_space<vmem>>, vector<8x32xf32>,
    %c2_i32 = arith.constant 2 : i32
    %c8_i32_40 = arith.constant 8 : i32
    %66 = arith.muli %c2_i32, %c8_i32_40 : i32
    %67 = tpu.assume_multiple %66, 8 : i32
    %c0_41 = arith.constant 0 : index
    %c0_42 = arith.constant 0 : index
    %68 = vector.load %arg12[%c0_41, %c0_42] : memref<8x32xf32, #tpu.memory_space<vmem>>, vector<8x32xf32>
    %c0_43 = arith.constant 0 : index
    %c0_44 = arith.constant 0 : index
    %69 = vector.load %arg13[%c0_43, %c0_44] : memref<8x32xf32, #tpu.memory_space<vmem>>, vector<8x32xf32>
    %70 = arith.index_cast %67 : i32 to index
    %c0_45 = arith.constant 0 : index
    %71 = vector.load %arg15[%70, %c0_45] : memref<64x128xf32, #tpu.memory_space<vmem>>, vector<8x128xf32>
    %cst_46 = arith.constant dense<0.000000e+00> : vector<8x128xf32>
    %72 = tpu.matmul %68, %1, %cst_46 {dimension_numbers = #tpu.dot_dimension_numbers<[1], [0], [0], [1], [0, 0, 1, 1], [], []>} : vector<8x32xf32>, vector<32x128xf32>, vector<8x128xf32> -> vector<8x128xf32>
    %73 = arith.addf %71, %72 : vector<8x128xf32>
    %74 = arith.negf %73 : vector<8x128xf32>
    %75 = math.exp %74 : vector<8x128xf32>
    %cst_47 = arith.constant 1.000000e+00 : f32
    %76 = vector.broadcast %cst_47 : f32 to vector<8x128xf32>
    %77 = arith.addf %76, %75 : vector<8x128xf32>
    %78 = arith.divf %76, %77 : vector<8x128xf32>
    %79 = math.tanh %73 : vector<8x128xf32>
    %80 = vector.extract_strided_slice %78 {offsets = [0, 0], sizes = [8, 32], strides = [1, 1]} : vector<8x128xf32> to vector<8x32xf32>
    %81 = vector.extract_strided_slice %78 {offsets = [0, 32], sizes = [8, 32], strides = [1, 1]} : vector<8x128xf32> to vector<8x32xf32>
    %82 = vector.extract_strided_slice %79 {offsets = [0, 64], sizes = [8, 32], strides = [1, 1]} : vector<8x128xf32> to vector<8x32xf32>
    %83 = vector.extract_strided_slice %78 {offsets = [0, 96], sizes = [8, 32], strides = [1, 1]} : vector<8x128xf32> to vector<8x32xf32>
    %84 = arith.mulf %81, %69 : vector<8x32xf32>
    %85 = arith.mulf %80, %82 : vector<8x32xf32>
    %86 = arith.addf %84, %85 : vector<8x32xf32>
    %87 = math.tanh %86 : vector<8x32xf32>
    %88 = arith.mulf %83, %87 : vector<8x32xf32>
    %c0_48 = arith.constant 0 : index
    %c0_49 = arith.constant 0 : index
    %89 = vector.load %arg13[%c0_48, %c0_49] : memref<8x32xf32, #tpu.memory_space<vmem>>, vector<8x32xf32>
    tpu.vector_store %arg13[%c0_48, %c0_49], %86 {strides = array<i32>} : memref<8x32xf32, #tpu.memory_space<vmem>>, vector<8x32xf32>,
    %c0_50 = arith.constant 0 : index
    %c0_51 = arith.constant 0 : index
    %90 = vector.load %arg12[%c0_50, %c0_51] : memref<8x32xf32, #tpu.memory_space<vmem>>, vector<8x32xf32>
    tpu.vector_store %arg12[%c0_50, %c0_51], %88 {strides = array<i32>} : memref<8x32xf32, #tpu.memory_space<vmem>>, vector<8x32xf32>,
    %91 = arith.index_cast %67 : i32 to index
    %c0_52 = arith.constant 0 : index
    %92 = vector.load %arg14[%91, %c0_52] : memref<64x32xf32, #tpu.memory_space<vmem>>, vector<8x32xf32>
    tpu.vector_store %arg14[%91, %c0_52], %88 {strides = array<i32>} : memref<64x32xf32, #tpu.memory_space<vmem>>, vector<8x32xf32>,
    %c3_i32 = arith.constant 3 : i32
    %c8_i32_53 = arith.constant 8 : i32
    %93 = arith.muli %c3_i32, %c8_i32_53 : i32
    %94 = tpu.assume_multiple %93, 8 : i32
    %c0_54 = arith.constant 0 : index
    %c0_55 = arith.constant 0 : index
    %95 = vector.load %arg12[%c0_54, %c0_55] : memref<8x32xf32, #tpu.memory_space<vmem>>, vector<8x32xf32>
    %c0_56 = arith.constant 0 : index
    %c0_57 = arith.constant 0 : index
    %96 = vector.load %arg13[%c0_56, %c0_57] : memref<8x32xf32, #tpu.memory_space<vmem>>, vector<8x32xf32>
    %97 = arith.index_cast %94 : i32 to index
    %c0_58 = arith.constant 0 : index
    %98 = vector.load %arg15[%97, %c0_58] : memref<64x128xf32, #tpu.memory_space<vmem>>, vector<8x128xf32>
    %cst_59 = arith.constant dense<0.000000e+00> : vector<8x128xf32>
    %99 = tpu.matmul %95, %1, %cst_59 {dimension_numbers = #tpu.dot_dimension_numbers<[1], [0], [0], [1], [0, 0, 1, 1], [], []>} : vector<8x32xf32>, vector<32x128xf32>, vector<8x128xf32> -> vector<8x128xf32>
    %100 = arith.addf %98, %99 : vector<8x128xf32>
    %101 = arith.negf %100 : vector<8x128xf32>
    %102 = math.exp %101 : vector<8x128xf32>
    %cst_60 = arith.constant 1.000000e+00 : f32
    %103 = vector.broadcast %cst_60 : f32 to vector<8x128xf32>
    %104 = arith.addf %103, %102 : vector<8x128xf32>
    %105 = arith.divf %103, %104 : vector<8x128xf32>
    %106 = math.tanh %100 : vector<8x128xf32>
    %107 = vector.extract_strided_slice %105 {offsets = [0, 0], sizes = [8, 32], strides = [1, 1]} : vector<8x128xf32> to vector<8x32xf32>
    %108 = vector.extract_strided_slice %105 {offsets = [0, 32], sizes = [8, 32], strides = [1, 1]} : vector<8x128xf32> to vector<8x32xf32>
    %109 = vector.extract_strided_slice %106 {offsets = [0, 64], sizes = [8, 32], strides = [1, 1]} : vector<8x128xf32> to vector<8x32xf32>
    %110 = vector.extract_strided_slice %105 {offsets = [0, 96], sizes = [8, 32], strides = [1, 1]} : vector<8x128xf32> to vector<8x32xf32>
    %111 = arith.mulf %108, %96 : vector<8x32xf32>
    %112 = arith.mulf %107, %109 : vector<8x32xf32>
    %113 = arith.addf %111, %112 : vector<8x32xf32>
    %114 = math.tanh %113 : vector<8x32xf32>
    %115 = arith.mulf %110, %114 : vector<8x32xf32>
    %c0_61 = arith.constant 0 : index
    %c0_62 = arith.constant 0 : index
    %116 = vector.load %arg13[%c0_61, %c0_62] : memref<8x32xf32, #tpu.memory_space<vmem>>, vector<8x32xf32>
    tpu.vector_store %arg13[%c0_61, %c0_62], %113 {strides = array<i32>} : memref<8x32xf32, #tpu.memory_space<vmem>>, vector<8x32xf32>,
    %c0_63 = arith.constant 0 : index
    %c0_64 = arith.constant 0 : index
    %117 = vector.load %arg12[%c0_63, %c0_64] : memref<8x32xf32, #tpu.memory_space<vmem>>, vector<8x32xf32>
    tpu.vector_store %arg12[%c0_63, %c0_64], %115 {strides = array<i32>} : memref<8x32xf32, #tpu.memory_space<vmem>>, vector<8x32xf32>,
    %118 = arith.index_cast %94 : i32 to index
    %c0_65 = arith.constant 0 : index
    %119 = vector.load %arg14[%118, %c0_65] : memref<64x32xf32, #tpu.memory_space<vmem>>, vector<8x32xf32>
    tpu.vector_store %arg14[%118, %c0_65], %115 {strides = array<i32>} : memref<64x32xf32, #tpu.memory_space<vmem>>, vector<8x32xf32>,
    %c4_i32 = arith.constant 4 : i32
    %c8_i32_66 = arith.constant 8 : i32
    %120 = arith.muli %c4_i32, %c8_i32_66 : i32
    %121 = tpu.assume_multiple %120, 8 : i32
    %c0_67 = arith.constant 0 : index
    %c0_68 = arith.constant 0 : index
    %122 = vector.load %arg12[%c0_67, %c0_68] : memref<8x32xf32, #tpu.memory_space<vmem>>, vector<8x32xf32>
    %c0_69 = arith.constant 0 : index
    %c0_70 = arith.constant 0 : index
    %123 = vector.load %arg13[%c0_69, %c0_70] : memref<8x32xf32, #tpu.memory_space<vmem>>, vector<8x32xf32>
    %124 = arith.index_cast %121 : i32 to index
    %c0_71 = arith.constant 0 : index
    %125 = vector.load %arg15[%124, %c0_71] : memref<64x128xf32, #tpu.memory_space<vmem>>, vector<8x128xf32>
    %cst_72 = arith.constant dense<0.000000e+00> : vector<8x128xf32>
    %126 = tpu.matmul %122, %1, %cst_72 {dimension_numbers = #tpu.dot_dimension_numbers<[1], [0], [0], [1], [0, 0, 1, 1], [], []>} : vector<8x32xf32>, vector<32x128xf32>, vector<8x128xf32> -> vector<8x128xf32>
    %127 = arith.addf %125, %126 : vector<8x128xf32>
    %128 = arith.negf %127 : vector<8x128xf32>
    %129 = math.exp %128 : vector<8x128xf32>
    %cst_73 = arith.constant 1.000000e+00 : f32
    %130 = vector.broadcast %cst_73 : f32 to vector<8x128xf32>
    %131 = arith.addf %130, %129 : vector<8x128xf32>
    %132 = arith.divf %130, %131 : vector<8x128xf32>
    %133 = math.tanh %127 : vector<8x128xf32>
    %134 = vector.extract_strided_slice %132 {offsets = [0, 0], sizes = [8, 32], strides = [1, 1]} : vector<8x128xf32> to vector<8x32xf32>
    %135 = vector.extract_strided_slice %132 {offsets = [0, 32], sizes = [8, 32], strides = [1, 1]} : vector<8x128xf32> to vector<8x32xf32>
    %136 = vector.extract_strided_slice %133 {offsets = [0, 64], sizes = [8, 32], strides = [1, 1]} : vector<8x128xf32> to vector<8x32xf32>
    %137 = vector.extract_strided_slice %132 {offsets = [0, 96], sizes = [8, 32], strides = [1, 1]} : vector<8x128xf32> to vector<8x32xf32>
    %138 = arith.mulf %135, %123 : vector<8x32xf32>
    %139 = arith.mulf %134, %136 : vector<8x32xf32>
    %140 = arith.addf %138, %139 : vector<8x32xf32>
    %141 = math.tanh %140 : vector<8x32xf32>
    %142 = arith.mulf %137, %141 : vector<8x32xf32>
    %c0_74 = arith.constant 0 : index
    %c0_75 = arith.constant 0 : index
    %143 = vector.load %arg13[%c0_74, %c0_75] : memref<8x32xf32, #tpu.memory_space<vmem>>, vector<8x32xf32>
    tpu.vector_store %arg13[%c0_74, %c0_75], %140 {strides = array<i32>} : memref<8x32xf32, #tpu.memory_space<vmem>>, vector<8x32xf32>,
    %c0_76 = arith.constant 0 : index
    %c0_77 = arith.constant 0 : index
    %144 = vector.load %arg12[%c0_76, %c0_77] : memref<8x32xf32, #tpu.memory_space<vmem>>, vector<8x32xf32>
    tpu.vector_store %arg12[%c0_76, %c0_77], %142 {strides = array<i32>} : memref<8x32xf32, #tpu.memory_space<vmem>>, vector<8x32xf32>,
    %145 = arith.index_cast %121 : i32 to index
    %c0_78 = arith.constant 0 : index
    %146 = vector.load %arg14[%145, %c0_78] : memref<64x32xf32, #tpu.memory_space<vmem>>, vector<8x32xf32>
    tpu.vector_store %arg14[%145, %c0_78], %142 {strides = array<i32>} : memref<64x32xf32, #tpu.memory_space<vmem>>, vector<8x32xf32>,
    %c5_i32 = arith.constant 5 : i32
    %c8_i32_79 = arith.constant 8 : i32
    %147 = arith.muli %c5_i32, %c8_i32_79 : i32
    %148 = tpu.assume_multiple %147, 8 : i32
    %c0_80 = arith.constant 0 : index
    %c0_81 = arith.constant 0 : index
    %149 = vector.load %arg12[%c0_80, %c0_81] : memref<8x32xf32, #tpu.memory_space<vmem>>, vector<8x32xf32>
    %c0_82 = arith.constant 0 : index
    %c0_83 = arith.constant 0 : index
    %150 = vector.load %arg13[%c0_82, %c0_83] : memref<8x32xf32, #tpu.memory_space<vmem>>, vector<8x32xf32>
    %151 = arith.index_cast %148 : i32 to index
    %c0_84 = arith.constant 0 : index
    %152 = vector.load %arg15[%151, %c0_84] : memref<64x128xf32, #tpu.memory_space<vmem>>, vector<8x128xf32>
    %cst_85 = arith.constant dense<0.000000e+00> : vector<8x128xf32>
    %153 = tpu.matmul %149, %1, %cst_85 {dimension_numbers = #tpu.dot_dimension_numbers<[1], [0], [0], [1], [0, 0, 1, 1], [], []>} : vector<8x32xf32>, vector<32x128xf32>, vector<8x128xf32> -> vector<8x128xf32>
    %154 = arith.addf %152, %153 : vector<8x128xf32>
    %155 = arith.negf %154 : vector<8x128xf32>
    %156 = math.exp %155 : vector<8x128xf32>
    %cst_86 = arith.constant 1.000000e+00 : f32
    %157 = vector.broadcast %cst_86 : f32 to vector<8x128xf32>
    %158 = arith.addf %157, %156 : vector<8x128xf32>
    %159 = arith.divf %157, %158 : vector<8x128xf32>
    %160 = math.tanh %154 : vector<8x128xf32>
    %161 = vector.extract_strided_slice %159 {offsets = [0, 0], sizes = [8, 32], strides = [1, 1]} : vector<8x128xf32> to vector<8x32xf32>
    %162 = vector.extract_strided_slice %159 {offsets = [0, 32], sizes = [8, 32], strides = [1, 1]} : vector<8x128xf32> to vector<8x32xf32>
    %163 = vector.extract_strided_slice %160 {offsets = [0, 64], sizes = [8, 32], strides = [1, 1]} : vector<8x128xf32> to vector<8x32xf32>
    %164 = vector.extract_strided_slice %159 {offsets = [0, 96], sizes = [8, 32], strides = [1, 1]} : vector<8x128xf32> to vector<8x32xf32>
    %165 = arith.mulf %162, %150 : vector<8x32xf32>
    %166 = arith.mulf %161, %163 : vector<8x32xf32>
    %167 = arith.addf %165, %166 : vector<8x32xf32>
    %168 = math.tanh %167 : vector<8x32xf32>
    %169 = arith.mulf %164, %168 : vector<8x32xf32>
    %c0_87 = arith.constant 0 : index
    %c0_88 = arith.constant 0 : index
    %170 = vector.load %arg13[%c0_87, %c0_88] : memref<8x32xf32, #tpu.memory_space<vmem>>, vector<8x32xf32>
    tpu.vector_store %arg13[%c0_87, %c0_88], %167 {strides = array<i32>} : memref<8x32xf32, #tpu.memory_space<vmem>>, vector<8x32xf32>,
    %c0_89 = arith.constant 0 : index
    %c0_90 = arith.constant 0 : index
    %171 = vector.load %arg12[%c0_89, %c0_90] : memref<8x32xf32, #tpu.memory_space<vmem>>, vector<8x32xf32>
    tpu.vector_store %arg12[%c0_89, %c0_90], %169 {strides = array<i32>} : memref<8x32xf32, #tpu.memory_space<vmem>>, vector<8x32xf32>,
    %172 = arith.index_cast %148 : i32 to index
    %c0_91 = arith.constant 0 : index
    %173 = vector.load %arg14[%172, %c0_91] : memref<64x32xf32, #tpu.memory_space<vmem>>, vector<8x32xf32>
    tpu.vector_store %arg14[%172, %c0_91], %169 {strides = array<i32>} : memref<64x32xf32, #tpu.memory_space<vmem>>, vector<8x32xf32>,
    %c6_i32 = arith.constant 6 : i32
    %c8_i32_92 = arith.constant 8 : i32
    %174 = arith.muli %c6_i32, %c8_i32_92 : i32
    %175 = tpu.assume_multiple %174, 8 : i32
    %c0_93 = arith.constant 0 : index
    %c0_94 = arith.constant 0 : index
    %176 = vector.load %arg12[%c0_93, %c0_94] : memref<8x32xf32, #tpu.memory_space<vmem>>, vector<8x32xf32>
    %c0_95 = arith.constant 0 : index
    %c0_96 = arith.constant 0 : index
    %177 = vector.load %arg13[%c0_95, %c0_96] : memref<8x32xf32, #tpu.memory_space<vmem>>, vector<8x32xf32>
    %178 = arith.index_cast %175 : i32 to index
    %c0_97 = arith.constant 0 : index
    %179 = vector.load %arg15[%178, %c0_97] : memref<64x128xf32, #tpu.memory_space<vmem>>, vector<8x128xf32>
    %cst_98 = arith.constant dense<0.000000e+00> : vector<8x128xf32>
    %180 = tpu.matmul %176, %1, %cst_98 {dimension_numbers = #tpu.dot_dimension_numbers<[1], [0], [0], [1], [0, 0, 1, 1], [], []>} : vector<8x32xf32>, vector<32x128xf32>, vector<8x128xf32> -> vector<8x128xf32>
    %181 = arith.addf %179, %180 : vector<8x128xf32>
    %182 = arith.negf %181 : vector<8x128xf32>
    %183 = math.exp %182 : vector<8x128xf32>
    %cst_99 = arith.constant 1.000000e+00 : f32
    %184 = vector.broadcast %cst_99 : f32 to vector<8x128xf32>
    %185 = arith.addf %184, %183 : vector<8x128xf32>
    %186 = arith.divf %184, %185 : vector<8x128xf32>
    %187 = math.tanh %181 : vector<8x128xf32>
    %188 = vector.extract_strided_slice %186 {offsets = [0, 0], sizes = [8, 32], strides = [1, 1]} : vector<8x128xf32> to vector<8x32xf32>
    %189 = vector.extract_strided_slice %186 {offsets = [0, 32], sizes = [8, 32], strides = [1, 1]} : vector<8x128xf32> to vector<8x32xf32>
    %190 = vector.extract_strided_slice %187 {offsets = [0, 64], sizes = [8, 32], strides = [1, 1]} : vector<8x128xf32> to vector<8x32xf32>
    %191 = vector.extract_strided_slice %186 {offsets = [0, 96], sizes = [8, 32], strides = [1, 1]} : vector<8x128xf32> to vector<8x32xf32>
    %192 = arith.mulf %189, %177 : vector<8x32xf32>
    %193 = arith.mulf %188, %190 : vector<8x32xf32>
    %194 = arith.addf %192, %193 : vector<8x32xf32>
    %195 = math.tanh %194 : vector<8x32xf32>
    %196 = arith.mulf %191, %195 : vector<8x32xf32>
    %c0_100 = arith.constant 0 : index
    %c0_101 = arith.constant 0 : index
    %197 = vector.load %arg13[%c0_100, %c0_101] : memref<8x32xf32, #tpu.memory_space<vmem>>, vector<8x32xf32>
    tpu.vector_store %arg13[%c0_100, %c0_101], %194 {strides = array<i32>} : memref<8x32xf32, #tpu.memory_space<vmem>>, vector<8x32xf32>,
    %c0_102 = arith.constant 0 : index
    %c0_103 = arith.constant 0 : index
    %198 = vector.load %arg12[%c0_102, %c0_103] : memref<8x32xf32, #tpu.memory_space<vmem>>, vector<8x32xf32>
    tpu.vector_store %arg12[%c0_102, %c0_103], %196 {strides = array<i32>} : memref<8x32xf32, #tpu.memory_space<vmem>>, vector<8x32xf32>,
    %199 = arith.index_cast %175 : i32 to index
    %c0_104 = arith.constant 0 : index
    %200 = vector.load %arg14[%199, %c0_104] : memref<64x32xf32, #tpu.memory_space<vmem>>, vector<8x32xf32>
    tpu.vector_store %arg14[%199, %c0_104], %196 {strides = array<i32>} : memref<64x32xf32, #tpu.memory_space<vmem>>, vector<8x32xf32>,
    %c7_i32 = arith.constant 7 : i32
    %c8_i32_105 = arith.constant 8 : i32
    %201 = arith.muli %c7_i32, %c8_i32_105 : i32
    %202 = tpu.assume_multiple %201, 8 : i32
    %c0_106 = arith.constant 0 : index
    %c0_107 = arith.constant 0 : index
    %203 = vector.load %arg12[%c0_106, %c0_107] : memref<8x32xf32, #tpu.memory_space<vmem>>, vector<8x32xf32>
    %c0_108 = arith.constant 0 : index
    %c0_109 = arith.constant 0 : index
    %204 = vector.load %arg13[%c0_108, %c0_109] : memref<8x32xf32, #tpu.memory_space<vmem>>, vector<8x32xf32>
    %205 = arith.index_cast %202 : i32 to index
    %c0_110 = arith.constant 0 : index
    %206 = vector.load %arg15[%205, %c0_110] : memref<64x128xf32, #tpu.memory_space<vmem>>, vector<8x128xf32>
    %cst_111 = arith.constant dense<0.000000e+00> : vector<8x128xf32>
    %207 = tpu.matmul %203, %1, %cst_111 {dimension_numbers = #tpu.dot_dimension_numbers<[1], [0], [0], [1], [0, 0, 1, 1], [], []>} : vector<8x32xf32>, vector<32x128xf32>, vector<8x128xf32> -> vector<8x128xf32>
    %208 = arith.addf %206, %207 : vector<8x128xf32>
    %209 = arith.negf %208 : vector<8x128xf32>
    %210 = math.exp %209 : vector<8x128xf32>
    %cst_112 = arith.constant 1.000000e+00 : f32
    %211 = vector.broadcast %cst_112 : f32 to vector<8x128xf32>
    %212 = arith.addf %211, %210 : vector<8x128xf32>
    %213 = arith.divf %211, %212 : vector<8x128xf32>
    %214 = math.tanh %208 : vector<8x128xf32>
    %215 = vector.extract_strided_slice %213 {offsets = [0, 0], sizes = [8, 32], strides = [1, 1]} : vector<8x128xf32> to vector<8x32xf32>
    %216 = vector.extract_strided_slice %213 {offsets = [0, 32], sizes = [8, 32], strides = [1, 1]} : vector<8x128xf32> to vector<8x32xf32>
    %217 = vector.extract_strided_slice %214 {offsets = [0, 64], sizes = [8, 32], strides = [1, 1]} : vector<8x128xf32> to vector<8x32xf32>
    %218 = vector.extract_strided_slice %213 {offsets = [0, 96], sizes = [8, 32], strides = [1, 1]} : vector<8x128xf32> to vector<8x32xf32>
    %219 = arith.mulf %216, %204 : vector<8x32xf32>
    %220 = arith.mulf %215, %217 : vector<8x32xf32>
    %221 = arith.addf %219, %220 : vector<8x32xf32>
    %222 = math.tanh %221 : vector<8x32xf32>
    %223 = arith.mulf %218, %222 : vector<8x32xf32>
    %c0_113 = arith.constant 0 : index
    %c0_114 = arith.constant 0 : index
    %224 = vector.load %arg13[%c0_113, %c0_114] : memref<8x32xf32, #tpu.memory_space<vmem>>, vector<8x32xf32>
    tpu.vector_store %arg13[%c0_113, %c0_114], %221 {strides = array<i32>} : memref<8x32xf32, #tpu.memory_space<vmem>>, vector<8x32xf32>,
    %c0_115 = arith.constant 0 : index
    %c0_116 = arith.constant 0 : index
    %225 = vector.load %arg12[%c0_115, %c0_116] : memref<8x32xf32, #tpu.memory_space<vmem>>, vector<8x32xf32>
    tpu.vector_store %arg12[%c0_115, %c0_116], %223 {strides = array<i32>} : memref<8x32xf32, #tpu.memory_space<vmem>>, vector<8x32xf32>,
    %226 = arith.index_cast %202 : i32 to index
    %c0_117 = arith.constant 0 : index
    %227 = vector.load %arg14[%226, %c0_117] : memref<64x32xf32, #tpu.memory_space<vmem>>, vector<8x32xf32>
    tpu.vector_store %arg14[%226, %c0_117], %223 {strides = array<i32>} : memref<64x32xf32, #tpu.memory_space<vmem>>, vector<8x32xf32>,
    %c8_i32_118 = arith.constant 8 : i32
    %c0_119 = arith.constant 0 : index
    %c0_120 = arith.constant 0 : index
    %228 = vector.load %arg12[%c0_119, %c0_120] : memref<8x32xf32, #tpu.memory_space<vmem>>, vector<8x32xf32>
    %229 = math.tanh %228 : vector<8x32xf32>
    %c0_121 = arith.constant 0 : index
    %c0_122 = arith.constant 0 : index
    %230 = vector.load %arg16[%c0_121, %c0_122] : memref<16x32xf32, #tpu.memory_space<vmem>>, vector<8x32xf32>
    tpu.vector_store %arg16[%c0_121, %c0_122], %229 {strides = array<i32>} : memref<16x32xf32, #tpu.memory_space<vmem>>, vector<8x32xf32>,
    %c0_123 = arith.constant 0 : index
    %c0_124 = arith.constant 0 : index
    %231 = vector.load %arg4[%c0_123, %c0_124] : memref<32x128xf32, #tpu.memory_space<vmem>>, vector<32x128xf32>
    %c0_125 = arith.constant 0 : index
    %c0_126 = arith.constant 0 : index
    %232 = vector.load %arg5[%c0_125, %c0_126] : memref<32x128xf32, #tpu.memory_space<vmem>>, vector<32x128xf32>
    %c0_127 = arith.constant 0 : index
    %c0_128 = arith.constant 0 : index
    %233 = vector.load %arg6[%c0_127, %c0_128] : memref<1x128xf32, #tpu.memory_space<vmem>>, vector<1x128xf32>
    %c0_129 = arith.constant 0 : index
    %c0_130 = arith.constant 0 : index
    %234 = vector.load %arg14[%c0_129, %c0_130] : memref<64x32xf32, #tpu.memory_space<vmem>>, vector<64x32xf32>
    %cst_131 = arith.constant dense<0.000000e+00> : vector<64x128xf32>
    %235 = tpu.matmul %234, %231, %cst_131 {dimension_numbers = #tpu.dot_dimension_numbers<[1], [0], [0], [1], [0, 0, 1, 1], [], []>} : vector<64x32xf32>, vector<32x128xf32>, vector<64x128xf32> -> vector<64x128xf32>
    %236 = vector.broadcast %233 : vector<1x128xf32> to vector<64x128xf32>
    %237 = arith.addf %235, %236 : vector<64x128xf32>
    %c0_132 = arith.constant 0 : index
    %c0_133 = arith.constant 0 : index
    %238 = vector.load %arg15[%c0_132, %c0_133] : memref<64x128xf32, #tpu.memory_space<vmem>>, vector<64x128xf32>
    tpu.vector_store %arg15[%c0_132, %c0_133], %237 {strides = array<i32>} : memref<64x128xf32, #tpu.memory_space<vmem>>, vector<64x128xf32>,
    %cst_134 = arith.constant 0.000000e+00 : f32
    %239 = vector.broadcast %cst_134 : f32 to vector<8x32xf32>
    %c0_135 = arith.constant 0 : index
    %c0_136 = arith.constant 0 : index
    %240 = vector.load %arg12[%c0_135, %c0_136] : memref<8x32xf32, #tpu.memory_space<vmem>>, vector<8x32xf32>
    tpu.vector_store %arg12[%c0_135, %c0_136], %239 {strides = array<i32>} : memref<8x32xf32, #tpu.memory_space<vmem>>, vector<8x32xf32>,
    %cst_137 = arith.constant 0.000000e+00 : f32
    %241 = vector.broadcast %cst_137 : f32 to vector<8x32xf32>
    %c0_138 = arith.constant 0 : index
    %c0_139 = arith.constant 0 : index
    %242 = vector.load %arg13[%c0_138, %c0_139] : memref<8x32xf32, #tpu.memory_space<vmem>>, vector<8x32xf32>
    tpu.vector_store %arg13[%c0_138, %c0_139], %241 {strides = array<i32>} : memref<8x32xf32, #tpu.memory_space<vmem>>, vector<8x32xf32>,
    %c0_i32_140 = arith.constant 0 : i32
    %c8_i32_141 = arith.constant 8 : i32
    %243 = arith.muli %c0_i32_140, %c8_i32_141 : i32
    %244 = tpu.assume_multiple %243, 8 : i32
    %c0_142 = arith.constant 0 : index
    %c0_143 = arith.constant 0 : index
    %245 = vector.load %arg12[%c0_142, %c0_143] : memref<8x32xf32, #tpu.memory_space<vmem>>, vector<8x32xf32>
    %c0_144 = arith.constant 0 : index
    %c0_145 = arith.constant 0 : index
    %246 = vector.load %arg13[%c0_144, %c0_145] : memref<8x32xf32, #tpu.memory_space<vmem>>, vector<8x32xf32>
    %247 = arith.index_cast %244 : i32 to index
    %c0_146 = arith.constant 0 : index
    %248 = vector.load %arg15[%247, %c0_146] : memref<64x128xf32, #tpu.memory_space<vmem>>, vector<8x128xf32>
    %cst_147 = arith.constant dense<0.000000e+00> : vector<8x128xf32>
    %249 = tpu.matmul %245, %232, %cst_147 {dimension_numbers = #tpu.dot_dimension_numbers<[1], [0], [0], [1], [0, 0, 1, 1], [], []>} : vector<8x32xf32>, vector<32x128xf32>, vector<8x128xf32> -> vector<8x128xf32>
    %250 = arith.addf %248, %249 : vector<8x128xf32>
    %251 = arith.negf %250 : vector<8x128xf32>
    %252 = math.exp %251 : vector<8x128xf32>
    %cst_148 = arith.constant 1.000000e+00 : f32
    %253 = vector.broadcast %cst_148 : f32 to vector<8x128xf32>
    %254 = arith.addf %253, %252 : vector<8x128xf32>
    %255 = arith.divf %253, %254 : vector<8x128xf32>
    %256 = math.tanh %250 : vector<8x128xf32>
    %257 = vector.extract_strided_slice %255 {offsets = [0, 0], sizes = [8, 32], strides = [1, 1]} : vector<8x128xf32> to vector<8x32xf32>
    %258 = vector.extract_strided_slice %255 {offsets = [0, 32], sizes = [8, 32], strides = [1, 1]} : vector<8x128xf32> to vector<8x32xf32>
    %259 = vector.extract_strided_slice %256 {offsets = [0, 64], sizes = [8, 32], strides = [1, 1]} : vector<8x128xf32> to vector<8x32xf32>
    %260 = vector.extract_strided_slice %255 {offsets = [0, 96], sizes = [8, 32], strides = [1, 1]} : vector<8x128xf32> to vector<8x32xf32>
    %261 = arith.mulf %258, %246 : vector<8x32xf32>
    %262 = arith.mulf %257, %259 : vector<8x32xf32>
    %263 = arith.addf %261, %262 : vector<8x32xf32>
    %264 = math.tanh %263 : vector<8x32xf32>
    %265 = arith.mulf %260, %264 : vector<8x32xf32>
    %c0_149 = arith.constant 0 : index
    %c0_150 = arith.constant 0 : index
    %266 = vector.load %arg13[%c0_149, %c0_150] : memref<8x32xf32, #tpu.memory_space<vmem>>, vector<8x32xf32>
    tpu.vector_store %arg13[%c0_149, %c0_150], %263 {strides = array<i32>} : memref<8x32xf32, #tpu.memory_space<vmem>>, vector<8x32xf32>,
    %c0_151 = arith.constant 0 : index
    %c0_152 = arith.constant 0 : index
    %267 = vector.load %arg12[%c0_151, %c0_152] : memref<8x32xf32, #tpu.memory_space<vmem>>, vector<8x32xf32>
    tpu.vector_store %arg12[%c0_151, %c0_152], %265 {strides = array<i32>} : memref<8x32xf32, #tpu.memory_space<vmem>>, vector<8x32xf32>,
    %c1_i32_153 = arith.constant 1 : i32
    %c8_i32_154 = arith.constant 8 : i32
    %268 = arith.muli %c1_i32_153, %c8_i32_154 : i32
    %269 = tpu.assume_multiple %268, 8 : i32
    %c0_155 = arith.constant 0 : index
    %c0_156 = arith.constant 0 : index
    %270 = vector.load %arg12[%c0_155, %c0_156] : memref<8x32xf32, #tpu.memory_space<vmem>>, vector<8x32xf32>
    %c0_157 = arith.constant 0 : index
    %c0_158 = arith.constant 0 : index
    %271 = vector.load %arg13[%c0_157, %c0_158] : memref<8x32xf32, #tpu.memory_space<vmem>>, vector<8x32xf32>
    %272 = arith.index_cast %269 : i32 to index
    %c0_159 = arith.constant 0 : index
    %273 = vector.load %arg15[%272, %c0_159] : memref<64x128xf32, #tpu.memory_space<vmem>>, vector<8x128xf32>
    %cst_160 = arith.constant dense<0.000000e+00> : vector<8x128xf32>
    %274 = tpu.matmul %270, %232, %cst_160 {dimension_numbers = #tpu.dot_dimension_numbers<[1], [0], [0], [1], [0, 0, 1, 1], [], []>} : vector<8x32xf32>, vector<32x128xf32>, vector<8x128xf32> -> vector<8x128xf32>
    %275 = arith.addf %273, %274 : vector<8x128xf32>
    %276 = arith.negf %275 : vector<8x128xf32>
    %277 = math.exp %276 : vector<8x128xf32>
    %cst_161 = arith.constant 1.000000e+00 : f32
    %278 = vector.broadcast %cst_161 : f32 to vector<8x128xf32>
    %279 = arith.addf %278, %277 : vector<8x128xf32>
    %280 = arith.divf %278, %279 : vector<8x128xf32>
    %281 = math.tanh %275 : vector<8x128xf32>
    %282 = vector.extract_strided_slice %280 {offsets = [0, 0], sizes = [8, 32], strides = [1, 1]} : vector<8x128xf32> to vector<8x32xf32>
    %283 = vector.extract_strided_slice %280 {offsets = [0, 32], sizes = [8, 32], strides = [1, 1]} : vector<8x128xf32> to vector<8x32xf32>
    %284 = vector.extract_strided_slice %281 {offsets = [0, 64], sizes = [8, 32], strides = [1, 1]} : vector<8x128xf32> to vector<8x32xf32>
    %285 = vector.extract_strided_slice %280 {offsets = [0, 96], sizes = [8, 32], strides = [1, 1]} : vector<8x128xf32> to vector<8x32xf32>
    %286 = arith.mulf %283, %271 : vector<8x32xf32>
    %287 = arith.mulf %282, %284 : vector<8x32xf32>
    %288 = arith.addf %286, %287 : vector<8x32xf32>
    %289 = math.tanh %288 : vector<8x32xf32>
    %290 = arith.mulf %285, %289 : vector<8x32xf32>
    %c0_162 = arith.constant 0 : index
    %c0_163 = arith.constant 0 : index
    %291 = vector.load %arg13[%c0_162, %c0_163] : memref<8x32xf32, #tpu.memory_space<vmem>>, vector<8x32xf32>
    tpu.vector_store %arg13[%c0_162, %c0_163], %288 {strides = array<i32>} : memref<8x32xf32, #tpu.memory_space<vmem>>, vector<8x32xf32>,
    %c0_164 = arith.constant 0 : index
    %c0_165 = arith.constant 0 : index
    %292 = vector.load %arg12[%c0_164, %c0_165] : memref<8x32xf32, #tpu.memory_space<vmem>>, vector<8x32xf32>
    tpu.vector_store %arg12[%c0_164, %c0_165], %290 {strides = array<i32>} : memref<8x32xf32, #tpu.memory_space<vmem>>, vector<8x32xf32>,
    %c2_i32_166 = arith.constant 2 : i32
    %c8_i32_167 = arith.constant 8 : i32
    %293 = arith.muli %c2_i32_166, %c8_i32_167 : i32
    %294 = tpu.assume_multiple %293, 8 : i32
    %c0_168 = arith.constant 0 : index
    %c0_169 = arith.constant 0 : index
    %295 = vector.load %arg12[%c0_168, %c0_169] : memref<8x32xf32, #tpu.memory_space<vmem>>, vector<8x32xf32>
    %c0_170 = arith.constant 0 : index
    %c0_171 = arith.constant 0 : index
    %296 = vector.load %arg13[%c0_170, %c0_171] : memref<8x32xf32, #tpu.memory_space<vmem>>, vector<8x32xf32>
    %297 = arith.index_cast %294 : i32 to index
    %c0_172 = arith.constant 0 : index
    %298 = vector.load %arg15[%297, %c0_172] : memref<64x128xf32, #tpu.memory_space<vmem>>, vector<8x128xf32>
    %cst_173 = arith.constant dense<0.000000e+00> : vector<8x128xf32>
    %299 = tpu.matmul %295, %232, %cst_173 {dimension_numbers = #tpu.dot_dimension_numbers<[1], [0], [0], [1], [0, 0, 1, 1], [], []>} : vector<8x32xf32>, vector<32x128xf32>, vector<8x128xf32> -> vector<8x128xf32>
    %300 = arith.addf %298, %299 : vector<8x128xf32>
    %301 = arith.negf %300 : vector<8x128xf32>
    %302 = math.exp %301 : vector<8x128xf32>
    %cst_174 = arith.constant 1.000000e+00 : f32
    %303 = vector.broadcast %cst_174 : f32 to vector<8x128xf32>
    %304 = arith.addf %303, %302 : vector<8x128xf32>
    %305 = arith.divf %303, %304 : vector<8x128xf32>
    %306 = math.tanh %300 : vector<8x128xf32>
    %307 = vector.extract_strided_slice %305 {offsets = [0, 0], sizes = [8, 32], strides = [1, 1]} : vector<8x128xf32> to vector<8x32xf32>
    %308 = vector.extract_strided_slice %305 {offsets = [0, 32], sizes = [8, 32], strides = [1, 1]} : vector<8x128xf32> to vector<8x32xf32>
    %309 = vector.extract_strided_slice %306 {offsets = [0, 64], sizes = [8, 32], strides = [1, 1]} : vector<8x128xf32> to vector<8x32xf32>
    %310 = vector.extract_strided_slice %305 {offsets = [0, 96], sizes = [8, 32], strides = [1, 1]} : vector<8x128xf32> to vector<8x32xf32>
    %311 = arith.mulf %308, %296 : vector<8x32xf32>
    %312 = arith.mulf %307, %309 : vector<8x32xf32>
    %313 = arith.addf %311, %312 : vector<8x32xf32>
    %314 = math.tanh %313 : vector<8x32xf32>
    %315 = arith.mulf %310, %314 : vector<8x32xf32>
    %c0_175 = arith.constant 0 : index
    %c0_176 = arith.constant 0 : index
    %316 = vector.load %arg13[%c0_175, %c0_176] : memref<8x32xf32, #tpu.memory_space<vmem>>, vector<8x32xf32>
    tpu.vector_store %arg13[%c0_175, %c0_176], %313 {strides = array<i32>} : memref<8x32xf32, #tpu.memory_space<vmem>>, vector<8x32xf32>,
    %c0_177 = arith.constant 0 : index
    %c0_178 = arith.constant 0 : index
    %317 = vector.load %arg12[%c0_177, %c0_178] : memref<8x32xf32, #tpu.memory_space<vmem>>, vector<8x32xf32>
    tpu.vector_store %arg12[%c0_177, %c0_178], %315 {strides = array<i32>} : memref<8x32xf32, #tpu.memory_space<vmem>>, vector<8x32xf32>,
    %c3_i32_179 = arith.constant 3 : i32
    %c8_i32_180 = arith.constant 8 : i32
    %318 = arith.muli %c3_i32_179, %c8_i32_180 : i32
    %319 = tpu.assume_multiple %318, 8 : i32
    %c0_181 = arith.constant 0 : index
    %c0_182 = arith.constant 0 : index
    %320 = vector.load %arg12[%c0_181, %c0_182] : memref<8x32xf32, #tpu.memory_space<vmem>>, vector<8x32xf32>
    %c0_183 = arith.constant 0 : index
    %c0_184 = arith.constant 0 : index
    %321 = vector.load %arg13[%c0_183, %c0_184] : memref<8x32xf32, #tpu.memory_space<vmem>>, vector<8x32xf32>
    %322 = arith.index_cast %319 : i32 to index
    %c0_185 = arith.constant 0 : index
    %323 = vector.load %arg15[%322, %c0_185] : memref<64x128xf32, #tpu.memory_space<vmem>>, vector<8x128xf32>
    %cst_186 = arith.constant dense<0.000000e+00> : vector<8x128xf32>
    %324 = tpu.matmul %320, %232, %cst_186 {dimension_numbers = #tpu.dot_dimension_numbers<[1], [0], [0], [1], [0, 0, 1, 1], [], []>} : vector<8x32xf32>, vector<32x128xf32>, vector<8x128xf32> -> vector<8x128xf32>
    %325 = arith.addf %323, %324 : vector<8x128xf32>
    %326 = arith.negf %325 : vector<8x128xf32>
    %327 = math.exp %326 : vector<8x128xf32>
    %cst_187 = arith.constant 1.000000e+00 : f32
    %328 = vector.broadcast %cst_187 : f32 to vector<8x128xf32>
    %329 = arith.addf %328, %327 : vector<8x128xf32>
    %330 = arith.divf %328, %329 : vector<8x128xf32>
    %331 = math.tanh %325 : vector<8x128xf32>
    %332 = vector.extract_strided_slice %330 {offsets = [0, 0], sizes = [8, 32], strides = [1, 1]} : vector<8x128xf32> to vector<8x32xf32>
    %333 = vector.extract_strided_slice %330 {offsets = [0, 32], sizes = [8, 32], strides = [1, 1]} : vector<8x128xf32> to vector<8x32xf32>
    %334 = vector.extract_strided_slice %331 {offsets = [0, 64], sizes = [8, 32], strides = [1, 1]} : vector<8x128xf32> to vector<8x32xf32>
    %335 = vector.extract_strided_slice %330 {offsets = [0, 96], sizes = [8, 32], strides = [1, 1]} : vector<8x128xf32> to vector<8x32xf32>
    %336 = arith.mulf %333, %321 : vector<8x32xf32>
    %337 = arith.mulf %332, %334 : vector<8x32xf32>
    %338 = arith.addf %336, %337 : vector<8x32xf32>
    %339 = math.tanh %338 : vector<8x32xf32>
    %340 = arith.mulf %335, %339 : vector<8x32xf32>
    %c0_188 = arith.constant 0 : index
    %c0_189 = arith.constant 0 : index
    %341 = vector.load %arg13[%c0_188, %c0_189] : memref<8x32xf32, #tpu.memory_space<vmem>>, vector<8x32xf32>
    tpu.vector_store %arg13[%c0_188, %c0_189], %338 {strides = array<i32>} : memref<8x32xf32, #tpu.memory_space<vmem>>, vector<8x32xf32>,
    %c0_190 = arith.constant 0 : index
    %c0_191 = arith.constant 0 : index
    %342 = vector.load %arg12[%c0_190, %c0_191] : memref<8x32xf32, #tpu.memory_space<vmem>>, vector<8x32xf32>
    tpu.vector_store %arg12[%c0_190, %c0_191], %340 {strides = array<i32>} : memref<8x32xf32, #tpu.memory_space<vmem>>, vector<8x32xf32>,
    %c4_i32_192 = arith.constant 4 : i32
    %c8_i32_193 = arith.constant 8 : i32
    %343 = arith.muli %c4_i32_192, %c8_i32_193 : i32
    %344 = tpu.assume_multiple %343, 8 : i32
    %c0_194 = arith.constant 0 : index
    %c0_195 = arith.constant 0 : index
    %345 = vector.load %arg12[%c0_194, %c0_195] : memref<8x32xf32, #tpu.memory_space<vmem>>, vector<8x32xf32>
    %c0_196 = arith.constant 0 : index
    %c0_197 = arith.constant 0 : index
    %346 = vector.load %arg13[%c0_196, %c0_197] : memref<8x32xf32, #tpu.memory_space<vmem>>, vector<8x32xf32>
    %347 = arith.index_cast %344 : i32 to index
    %c0_198 = arith.constant 0 : index
    %348 = vector.load %arg15[%347, %c0_198] : memref<64x128xf32, #tpu.memory_space<vmem>>, vector<8x128xf32>
    %cst_199 = arith.constant dense<0.000000e+00> : vector<8x128xf32>
    %349 = tpu.matmul %345, %232, %cst_199 {dimension_numbers = #tpu.dot_dimension_numbers<[1], [0], [0], [1], [0, 0, 1, 1], [], []>} : vector<8x32xf32>, vector<32x128xf32>, vector<8x128xf32> -> vector<8x128xf32>
    %350 = arith.addf %348, %349 : vector<8x128xf32>
    %351 = arith.negf %350 : vector<8x128xf32>
    %352 = math.exp %351 : vector<8x128xf32>
    %cst_200 = arith.constant 1.000000e+00 : f32
    %353 = vector.broadcast %cst_200 : f32 to vector<8x128xf32>
    %354 = arith.addf %353, %352 : vector<8x128xf32>
    %355 = arith.divf %353, %354 : vector<8x128xf32>
    %356 = math.tanh %350 : vector<8x128xf32>
    %357 = vector.extract_strided_slice %355 {offsets = [0, 0], sizes = [8, 32], strides = [1, 1]} : vector<8x128xf32> to vector<8x32xf32>
    %358 = vector.extract_strided_slice %355 {offsets = [0, 32], sizes = [8, 32], strides = [1, 1]} : vector<8x128xf32> to vector<8x32xf32>
    %359 = vector.extract_strided_slice %356 {offsets = [0, 64], sizes = [8, 32], strides = [1, 1]} : vector<8x128xf32> to vector<8x32xf32>
    %360 = vector.extract_strided_slice %355 {offsets = [0, 96], sizes = [8, 32], strides = [1, 1]} : vector<8x128xf32> to vector<8x32xf32>
    %361 = arith.mulf %358, %346 : vector<8x32xf32>
    %362 = arith.mulf %357, %359 : vector<8x32xf32>
    %363 = arith.addf %361, %362 : vector<8x32xf32>
    %364 = math.tanh %363 : vector<8x32xf32>
    %365 = arith.mulf %360, %364 : vector<8x32xf32>
    %c0_201 = arith.constant 0 : index
    %c0_202 = arith.constant 0 : index
    %366 = vector.load %arg13[%c0_201, %c0_202] : memref<8x32xf32, #tpu.memory_space<vmem>>, vector<8x32xf32>
    tpu.vector_store %arg13[%c0_201, %c0_202], %363 {strides = array<i32>} : memref<8x32xf32, #tpu.memory_space<vmem>>, vector<8x32xf32>,
    %c0_203 = arith.constant 0 : index
    %c0_204 = arith.constant 0 : index
    %367 = vector.load %arg12[%c0_203, %c0_204] : memref<8x32xf32, #tpu.memory_space<vmem>>, vector<8x32xf32>
    tpu.vector_store %arg12[%c0_203, %c0_204], %365 {strides = array<i32>} : memref<8x32xf32, #tpu.memory_space<vmem>>, vector<8x32xf32>,
    %c5_i32_205 = arith.constant 5 : i32
    %c8_i32_206 = arith.constant 8 : i32
    %368 = arith.muli %c5_i32_205, %c8_i32_206 : i32
    %369 = tpu.assume_multiple %368, 8 : i32
    %c0_207 = arith.constant 0 : index
    %c0_208 = arith.constant 0 : index
    %370 = vector.load %arg12[%c0_207, %c0_208] : memref<8x32xf32, #tpu.memory_space<vmem>>, vector<8x32xf32>
    %c0_209 = arith.constant 0 : index
    %c0_210 = arith.constant 0 : index
    %371 = vector.load %arg13[%c0_209, %c0_210] : memref<8x32xf32, #tpu.memory_space<vmem>>, vector<8x32xf32>
    %372 = arith.index_cast %369 : i32 to index
    %c0_211 = arith.constant 0 : index
    %373 = vector.load %arg15[%372, %c0_211] : memref<64x128xf32, #tpu.memory_space<vmem>>, vector<8x128xf32>
    %cst_212 = arith.constant dense<0.000000e+00> : vector<8x128xf32>
    %374 = tpu.matmul %370, %232, %cst_212 {dimension_numbers = #tpu.dot_dimension_numbers<[1], [0], [0], [1], [0, 0, 1, 1], [], []>} : vector<8x32xf32>, vector<32x128xf32>, vector<8x128xf32> -> vector<8x128xf32>
    %375 = arith.addf %373, %374 : vector<8x128xf32>
    %376 = arith.negf %375 : vector<8x128xf32>
    %377 = math.exp %376 : vector<8x128xf32>
    %cst_213 = arith.constant 1.000000e+00 : f32
    %378 = vector.broadcast %cst_213 : f32 to vector<8x128xf32>
    %379 = arith.addf %378, %377 : vector<8x128xf32>
    %380 = arith.divf %378, %379 : vector<8x128xf32>
    %381 = math.tanh %375 : vector<8x128xf32>
    %382 = vector.extract_strided_slice %380 {offsets = [0, 0], sizes = [8, 32], strides = [1, 1]} : vector<8x128xf32> to vector<8x32xf32>
    %383 = vector.extract_strided_slice %380 {offsets = [0, 32], sizes = [8, 32], strides = [1, 1]} : vector<8x128xf32> to vector<8x32xf32>
    %384 = vector.extract_strided_slice %381 {offsets = [0, 64], sizes = [8, 32], strides = [1, 1]} : vector<8x128xf32> to vector<8x32xf32>
    %385 = vector.extract_strided_slice %380 {offsets = [0, 96], sizes = [8, 32], strides = [1, 1]} : vector<8x128xf32> to vector<8x32xf32>
    %386 = arith.mulf %383, %371 : vector<8x32xf32>
    %387 = arith.mulf %382, %384 : vector<8x32xf32>
    %388 = arith.addf %386, %387 : vector<8x32xf32>
    %389 = math.tanh %388 : vector<8x32xf32>
    %390 = arith.mulf %385, %389 : vector<8x32xf32>
    %c0_214 = arith.constant 0 : index
    %c0_215 = arith.constant 0 : index
    %391 = vector.load %arg13[%c0_214, %c0_215] : memref<8x32xf32, #tpu.memory_space<vmem>>, vector<8x32xf32>
    tpu.vector_store %arg13[%c0_214, %c0_215], %388 {strides = array<i32>} : memref<8x32xf32, #tpu.memory_space<vmem>>, vector<8x32xf32>,
    %c0_216 = arith.constant 0 : index
    %c0_217 = arith.constant 0 : index
    %392 = vector.load %arg12[%c0_216, %c0_217] : memref<8x32xf32, #tpu.memory_space<vmem>>, vector<8x32xf32>
    tpu.vector_store %arg12[%c0_216, %c0_217], %390 {strides = array<i32>} : memref<8x32xf32, #tpu.memory_space<vmem>>, vector<8x32xf32>,
    %c6_i32_218 = arith.constant 6 : i32
    %c8_i32_219 = arith.constant 8 : i32
    %393 = arith.muli %c6_i32_218, %c8_i32_219 : i32
    %394 = tpu.assume_multiple %393, 8 : i32
    %c0_220 = arith.constant 0 : index
    %c0_221 = arith.constant 0 : index
    %395 = vector.load %arg12[%c0_220, %c0_221] : memref<8x32xf32, #tpu.memory_space<vmem>>, vector<8x32xf32>
    %c0_222 = arith.constant 0 : index
    %c0_223 = arith.constant 0 : index
    %396 = vector.load %arg13[%c0_222, %c0_223] : memref<8x32xf32, #tpu.memory_space<vmem>>, vector<8x32xf32>
    %397 = arith.index_cast %394 : i32 to index
    %c0_224 = arith.constant 0 : index
    %398 = vector.load %arg15[%397, %c0_224] : memref<64x128xf32, #tpu.memory_space<vmem>>, vector<8x128xf32>
    %cst_225 = arith.constant dense<0.000000e+00> : vector<8x128xf32>
    %399 = tpu.matmul %395, %232, %cst_225 {dimension_numbers = #tpu.dot_dimension_numbers<[1], [0], [0], [1], [0, 0, 1, 1], [], []>} : vector<8x32xf32>, vector<32x128xf32>, vector<8x128xf32> -> vector<8x128xf32>
    %400 = arith.addf %398, %399 : vector<8x128xf32>
    %401 = arith.negf %400 : vector<8x128xf32>
    %402 = math.exp %401 : vector<8x128xf32>
    %cst_226 = arith.constant 1.000000e+00 : f32
    %403 = vector.broadcast %cst_226 : f32 to vector<8x128xf32>
    %404 = arith.addf %403, %402 : vector<8x128xf32>
    %405 = arith.divf %403, %404 : vector<8x128xf32>
    %406 = math.tanh %400 : vector<8x128xf32>
    %407 = vector.extract_strided_slice %405 {offsets = [0, 0], sizes = [8, 32], strides = [1, 1]} : vector<8x128xf32> to vector<8x32xf32>
    %408 = vector.extract_strided_slice %405 {offsets = [0, 32], sizes = [8, 32], strides = [1, 1]} : vector<8x128xf32> to vector<8x32xf32>
    %409 = vector.extract_strided_slice %406 {offsets = [0, 64], sizes = [8, 32], strides = [1, 1]} : vector<8x128xf32> to vector<8x32xf32>
    %410 = vector.extract_strided_slice %405 {offsets = [0, 96], sizes = [8, 32], strides = [1, 1]} : vector<8x128xf32> to vector<8x32xf32>
    %411 = arith.mulf %408, %396 : vector<8x32xf32>
    %412 = arith.mulf %407, %409 : vector<8x32xf32>
    %413 = arith.addf %411, %412 : vector<8x32xf32>
    %414 = math.tanh %413 : vector<8x32xf32>
    %415 = arith.mulf %410, %414 : vector<8x32xf32>
    %c0_227 = arith.constant 0 : index
    %c0_228 = arith.constant 0 : index
    %416 = vector.load %arg13[%c0_227, %c0_228] : memref<8x32xf32, #tpu.memory_space<vmem>>, vector<8x32xf32>
    tpu.vector_store %arg13[%c0_227, %c0_228], %413 {strides = array<i32>} : memref<8x32xf32, #tpu.memory_space<vmem>>, vector<8x32xf32>,
    %c0_229 = arith.constant 0 : index
    %c0_230 = arith.constant 0 : index
    %417 = vector.load %arg12[%c0_229, %c0_230] : memref<8x32xf32, #tpu.memory_space<vmem>>, vector<8x32xf32>
    tpu.vector_store %arg12[%c0_229, %c0_230], %415 {strides = array<i32>} : memref<8x32xf32, #tpu.memory_space<vmem>>, vector<8x32xf32>,
    %c7_i32_231 = arith.constant 7 : i32
    %c8_i32_232 = arith.constant 8 : i32
    %418 = arith.muli %c7_i32_231, %c8_i32_232 : i32
    %419 = tpu.assume_multiple %418, 8 : i32
    %c0_233 = arith.constant 0 : index
    %c0_234 = arith.constant 0 : index
    %420 = vector.load %arg12[%c0_233, %c0_234] : memref<8x32xf32, #tpu.memory_space<vmem>>, vector<8x32xf32>
    %c0_235 = arith.constant 0 : index
    %c0_236 = arith.constant 0 : index
    %421 = vector.load %arg13[%c0_235, %c0_236] : memref<8x32xf32, #tpu.memory_space<vmem>>, vector<8x32xf32>
    %422 = arith.index_cast %419 : i32 to index
    %c0_237 = arith.constant 0 : index
    %423 = vector.load %arg15[%422, %c0_237] : memref<64x128xf32, #tpu.memory_space<vmem>>, vector<8x128xf32>
    %cst_238 = arith.constant dense<0.000000e+00> : vector<8x128xf32>
    %424 = tpu.matmul %420, %232, %cst_238 {dimension_numbers = #tpu.dot_dimension_numbers<[1], [0], [0], [1], [0, 0, 1, 1], [], []>} : vector<8x32xf32>, vector<32x128xf32>, vector<8x128xf32> -> vector<8x128xf32>
    %425 = arith.addf %423, %424 : vector<8x128xf32>
    %426 = arith.negf %425 : vector<8x128xf32>
    %427 = math.exp %426 : vector<8x128xf32>
    %cst_239 = arith.constant 1.000000e+00 : f32
    %428 = vector.broadcast %cst_239 : f32 to vector<8x128xf32>
    %429 = arith.addf %428, %427 : vector<8x128xf32>
    %430 = arith.divf %428, %429 : vector<8x128xf32>
    %431 = math.tanh %425 : vector<8x128xf32>
    %432 = vector.extract_strided_slice %430 {offsets = [0, 0], sizes = [8, 32], strides = [1, 1]} : vector<8x128xf32> to vector<8x32xf32>
    %433 = vector.extract_strided_slice %430 {offsets = [0, 32], sizes = [8, 32], strides = [1, 1]} : vector<8x128xf32> to vector<8x32xf32>
    %434 = vector.extract_strided_slice %431 {offsets = [0, 64], sizes = [8, 32], strides = [1, 1]} : vector<8x128xf32> to vector<8x32xf32>
    %435 = vector.extract_strided_slice %430 {offsets = [0, 96], sizes = [8, 32], strides = [1, 1]} : vector<8x128xf32> to vector<8x32xf32>
    %436 = arith.mulf %433, %421 : vector<8x32xf32>
    %437 = arith.mulf %432, %434 : vector<8x32xf32>
    %438 = arith.addf %436, %437 : vector<8x32xf32>
    %439 = math.tanh %438 : vector<8x32xf32>
    %440 = arith.mulf %435, %439 : vector<8x32xf32>
    %c0_240 = arith.constant 0 : index
    %c0_241 = arith.constant 0 : index
    %441 = vector.load %arg13[%c0_240, %c0_241] : memref<8x32xf32, #tpu.memory_space<vmem>>, vector<8x32xf32>
    tpu.vector_store %arg13[%c0_240, %c0_241], %438 {strides = array<i32>} : memref<8x32xf32, #tpu.memory_space<vmem>>, vector<8x32xf32>,
    %c0_242 = arith.constant 0 : index
    %c0_243 = arith.constant 0 : index
    %442 = vector.load %arg12[%c0_242, %c0_243] : memref<8x32xf32, #tpu.memory_space<vmem>>, vector<8x32xf32>
    tpu.vector_store %arg12[%c0_242, %c0_243], %440 {strides = array<i32>} : memref<8x32xf32, #tpu.memory_space<vmem>>, vector<8x32xf32>,
    %c8_i32_244 = arith.constant 8 : i32
    %c0_245 = arith.constant 0 : index
    %c0_246 = arith.constant 0 : index
    %443 = vector.load %arg12[%c0_245, %c0_246] : memref<8x32xf32, #tpu.memory_space<vmem>>, vector<8x32xf32>
    %444 = math.tanh %443 : vector<8x32xf32>
    %c8 = arith.constant 8 : index
    %c0_247 = arith.constant 0 : index
    %445 = vector.load %arg16[%c8, %c0_247] : memref<16x32xf32, #tpu.memory_space<vmem>>, vector<8x32xf32>
    tpu.vector_store %arg16[%c8, %c0_247], %444 {strides = array<i32>} : memref<16x32xf32, #tpu.memory_space<vmem>>, vector<8x32xf32>,
    %c0_248 = arith.constant 0 : index
    %c0_249 = arith.constant 0 : index
    %446 = vector.load %arg16[%c0_248, %c0_249] : memref<16x32xf32, #tpu.memory_space<vmem>>, vector<16x32xf32>
    %c0_250 = arith.constant 0 : index
    %c0_251 = arith.constant 0 : index
    %447 = vector.load %arg7[%c0_250, %c0_251] : memref<32x128xf32, #tpu.memory_space<vmem>>, vector<32x128xf32>
    %cst_252 = arith.constant dense<0.000000e+00> : vector<16x128xf32>
    %448 = tpu.matmul %446, %447, %cst_252 {dimension_numbers = #tpu.dot_dimension_numbers<[1], [0], [0], [1], [0, 0, 1, 1], [], []>} : vector<16x32xf32>, vector<32x128xf32>, vector<16x128xf32> -> vector<16x128xf32>
    %c0_253 = arith.constant 0 : index
    %c0_254 = arith.constant 0 : index
    %449 = vector.load %arg8[%c0_253, %c0_254] : memref<1x128xf32, #tpu.memory_space<vmem>>, vector<1x128xf32>
    %450 = vector.broadcast %449 : vector<1x128xf32> to vector<16x128xf32>
    %451 = arith.addf %448, %450 : vector<16x128xf32>
    %452 = math.tanh %451 : vector<16x128xf32>
    %c0_255 = arith.constant 0 : index
    %c0_256 = arith.constant 0 : index
    %453 = vector.load %arg9[%c0_255, %c0_256] : memref<128x1xf32, #tpu.memory_space<vmem>>, vector<128x1xf32>
    %cst_257 = arith.constant dense<0.000000e+00> : vector<16x1xf32>
    %454 = tpu.matmul %452, %453, %cst_257 {dimension_numbers = #tpu.dot_dimension_numbers<[1], [0], [0], [1], [0, 0, 1, 1], [], []>} : vector<16x128xf32>, vector<128x1xf32>, vector<16x1xf32> -> vector<16x1xf32>
    %c0_258 = arith.constant 0 : index
    %c0_259 = arith.constant 0 : index
    %455 = vector.load %arg10[%c0_258, %c0_259] : memref<1x1xf32, #tpu.memory_space<vmem>>, vector<1x1xf32>
    %456 = vector.broadcast %455 : vector<1x1xf32> to vector<16x1xf32>
    %457 = arith.addf %454, %456 : vector<16x1xf32>
    %c0_260 = arith.constant 0 : index
    %c0_261 = arith.constant 0 : index
    %458 = vector.load %arg11[%c0_260, %c0_261] : memref<16x1xf32, #tpu.memory_space<vmem>>, vector<16x1xf32>
    tpu.vector_store %arg11[%c0_260, %c0_261], %457 {strides = array<i32>} : memref<16x1xf32, #tpu.memory_space<vmem>>, vector<16x1xf32>,
    return
  }
}

</mosaic_0001>

<llo_original>
// kernel: lstm_forward.1
$region0: #{lstm_forward.1}
  #allocation0 [shape = 'u32[]', space=smem, size = 0x4, offset = 0x4, fixed_abs, tag = 'smem constant byte address 0x4 - core index']
  #allocation1 [shape = 'u32[144,128]{1,0:T(1,128)}', space=vmem, size = 0x12000, scoped, tag = 'internal scratch']
  #allocation2 [shape = 'f32[8,32]{1,0:T(8,128)}', space=vmem, size = 0x1000, scoped, tag = 'scratch operand']
  #allocation3 [shape = 'f32[8,32]{1,0:T(8,128)}', space=vmem, size = 0x1000, scoped, tag = 'scratch operand']
  #allocation4 [shape = 'f32[64,32]{1,0:T(8,128)}', space=vmem, size = 0x8000, scoped, tag = 'scratch operand']
  #allocation5 [shape = 'f32[64,128]{1,0:T(8,128)}', space=vmem, size = 0x8000, scoped, tag = 'scratch operand']
  #allocation6 [shape = 'f32[16,32]{1,0:T(8,128)}', space=vmem, size = 0x2000, scoped, tag = 'scratch operand']
  #allocation7 [shape = 'f32[1,1]{1,0:T(1,128)S(1)}', space=vmem, size = 0x200, scoped, tag = 'scoped memory for lstm_forward.1']
  %s0 = inlined_call_operand.vmem [shape: f32[64,16], index: 0, kind: input, shape index: {}]
  %s1 = inlined_call_operand.vmem [shape: f32[16,128], index: 1, kind: input, shape index: {}]
  %s2 = inlined_call_operand.vmem [shape: f32[32,128], index: 2, kind: input, shape index: {}]
  %s3 = inlined_call_operand.vmem [shape: f32[1,128], index: 3, kind: input, shape index: {}]
  %s4 = inlined_call_operand.vmem [shape: f32[32,128], index: 4, kind: input, shape index: {}]
  %s5 = inlined_call_operand.vmem [shape: f32[32,128], index: 5, kind: input, shape index: {}]
  %s6 = inlined_call_operand.vmem [shape: f32[1,128], index: 6, kind: input, shape index: {}]
  %s7 = inlined_call_operand.vmem [shape: f32[32,128], index: 7, kind: input, shape index: {}]
  %s8 = inlined_call_operand.vmem [shape: f32[1,128], index: 8, kind: input, shape index: {}]
  %s9 = inlined_call_operand.vmem [shape: f32[128,1], index: 9, kind: input, shape index: {}]
  %s10 = inlined_call_operand.<no memory space> [shape: f32[1,1], index: 10, kind: input, shape index: {}]
  %s11 = inlined_call_operand.vmem [shape: f32[16,1], index: 11, kind: output, shape index: {}]
  %s12 = sld [smem:[#allocation0]]
  $region54: #{lstm_forward.1} parent=0
    _
  %s14 = ssub.s32 1, %s12
  %s15 = scalar_select 0, %s14, %s12
  %v16 = vstv %s10
  %17 = vst [vmem:[#allocation7] sm:$0x1] %v16
  // Predicated region
  $region2: #{lstm_forward.1} parent=0 // pred_check
    _
  $region3: #{lstm_forward.1} parent=0 // pred_check_branch
    %19 = sbr.rel (0) target = $region5
  $region4: #{lstm_forward.1} parent=0 // pred_region
    _
  $region5: #{lstm_forward.1} parent=0 // pred_fallthru
    _
  // Predicated region
  $region6: #{lstm_forward.1} parent=0 // pred_check
    _
  $region7: #{lstm_forward.1} parent=0 // pred_check_branch
    %21 = sbr.rel (0) target = $region9
  $region8: #{lstm_forward.1} parent=0 // pred_region
    _
  $region9: #{lstm_forward.1} parent=0 // pred_fallthru
    _
  // Predicated region
  $region10: #{lstm_forward.1} parent=0 // pred_check
    _
  $region11: #{lstm_forward.1} parent=0 // pred_check_branch
    %23 = sbr.rel (0) target = $region13
  $region12: #{lstm_forward.1} parent=0 // pred_region
    _
  $region13: #{lstm_forward.1} parent=0 // pred_fallthru
    _
  // Predicated region
  $region14: #{lstm_forward.1} parent=0 // pred_check
    _
  $region15: #{lstm_forward.1} parent=0 // pred_check_branch
    %25 = sbr.rel (0) target = $region17
  $region16: #{lstm_forward.1} parent=0 // pred_region
    _
  $region17: #{lstm_forward.1} parent=0 // pred_fallthru
    _
  // Predicated region
  $region18: #{lstm_forward.1} parent=0 // pred_check
    _
  $region19: #{lstm_forward.1} parent=0 // pred_check_branch
    %27 = sbr.rel (0) target = $region21
  $region20: #{lstm_forward.1} parent=0 // pred_region
    _
  $region21: #{lstm_forward.1} parent=0 // pred_fallthru
    _
  // Predicated region
  $region22: #{lstm_forward.1} parent=0 // pred_check
    _
  $region23: #{lstm_forward.1} parent=0 // pred_check_branch
    %29 = sbr.rel (0) target = $region25
  $region24: #{lstm_forward.1} parent=0 // pred_region
    _
  $region25: #{lstm_forward.1} parent=0 // pred_fallthru
    _
  // Predicated region
  $region26: #{lstm_forward.1} parent=0 // pred_check
    _
  $region27: #{lstm_forward.1} parent=0 // pred_check_branch
    %31 = sbr.rel (0) target = $region29
  $region28: #{lstm_forward.1} parent=0 // pred_region
    _
  $region29: #{lstm_forward.1} parent=0 // pred_fallthru
    _
  // Predicated region
  $region30: #{lstm_forward.1} parent=0 // pred_check
    _
  $region31: #{lstm_forward.1} parent=0 // pred_check_branch
    %33 = sbr.rel (0) target = $region33
  $region32: #{lstm_forward.1} parent=0 // pred_region
    _
  $region33: #{lstm_forward.1} parent=0 // pred_fallthru
    _
  // Predicated region
  $region34: #{lstm_forward.1} parent=0 // pred_check
    _
  $region35: #{lstm_forward.1} parent=0 // pred_check_branch
    %35 = sbr.rel (0) target = $region37
  $region36: #{lstm_forward.1} parent=0 // pred_region
    _
  $region37: #{lstm_forward.1} parent=0 // pred_fallthru
    _
  // Predicated region
  $region38: #{lstm_forward.1} parent=0 // pred_check
    _
  $region39: #{lstm_forward.1} parent=0 // pred_check_branch
    %37 = sbr.rel (0) target = $region41
  $region40: #{lstm_forward.1} parent=0 // pred_region
    _
  $region41: #{lstm_forward.1} parent=0 // pred_fallthru
    _
  // Predicated region
  $region42: #{lstm_forward.1} parent=0 // pred_check
    _
  $region43: #{lstm_forward.1} parent=0 // pred_check_branch
    %39 = sbr.rel (0) target = $region45
  $region44: #{lstm_forward.1} parent=0 // pred_region
    _
  $region45: #{lstm_forward.1} parent=0 // pred_fallthru
    _
  %v40 = vld [vmem:[%s1] sm:$0xff]
  %v41 = vld [vmem:[%s1 + $0x8] sm:$0xff]
  %v42 = vld [vmem:[%s2] sm:$0xff]
  %v43 = vld [vmem:[%s2 + $0x8] sm:$0xff]
  %v44 = vld [vmem:[%s2 + $0x10] sm:$0xff]
  %v45 = vld [vmem:[%s2 + $0x18] sm:$0xff]
  %v46 = vld [vmem:[%s3] sm:$0x1]
  %v47 = vld [vmem:[%s0] sm:$0xff]
  %v48 = vld [vmem:[%s0 + $0x8] sm:$0xff]
  %v49 = vld [vmem:[%s0 + $0x10] sm:$0xff]
  %v50 = vld [vmem:[%s0 + $0x18] sm:$0xff]
  %v51 = vld [vmem:[%s0 + $0x20] sm:$0xff]
  %v52 = vld [vmem:[%s0 + $0x28] sm:$0xff]
  %v53 = vld [vmem:[%s0 + $0x30] sm:$0xff]
  %v54 = vld [vmem:[%s0 + $0x38] sm:$0xff]
  %v56 = vlaneseq
  %v57 = vshrl.u32 %v56, 7
  %v58 = vsub.s32 0, %v57
  %v59 = vrot.slane %v46, %v58
  %vm61 = vcmask 130048
  %v63 = vsel %vm61, %v47, 0
  %v66 = vsel %vm61, %v48, 0
  %v69 = vsel %vm61, %v49, 0
  %v72 = vsel %vm61, %v50, 0
  %v75 = vsel %vm61, %v51, 0
  %v78 = vsel %vm61, %v52, 0
  %v81 = vsel %vm61, %v53, 0
  %v84 = vsel %vm61, %v54, 0
  %86 = vmatprep.subr.mxu0 0.0
  %87 = vmatpush1.msra.mxu0 0.0
  %88 = vmatprep.subr.mxu0 0.0
  %89 = vmatpush1.msra.mxu0 0.0
  %90 = vmatprep.subr.mxu0 0.0
  %91 = vmatpush1.msra.mxu0 0.0
  %92 = vmatprep.subr.mxu0 0.0
  %93 = vmatpush1.msra.mxu0 0.0
  %94 = vmatprep.subr.mxu0 0.0
  %95 = vmatpush1.msra.mxu0 0.0
  %96 = vmatprep.subr.mxu0 0.0
  %97 = vmatpush1.msra.mxu0 0.0
  %98 = vmatprep.subr.mxu0 0.0
  %99 = vmatpush1.msra.mxu0 0.0
  %100 = vmatprep.subr.mxu0 0.0
  %101 = vmatpush1.msra.mxu0 0.0
  %102 = vmatprep.subr.mxu0 0.0
  %103 = vmatpush1.msra.mxu0 0.0
  %104 = vmatprep.subr.mxu0 0.0
  %105 = vmatpush1.msra.mxu0 0.0
  %106 = vmatprep.subr.mxu0 0.0
  %107 = vmatpush1.msra.mxu0 0.0
  %108 = vmatprep.subr.mxu0 0.0
  %109 = vmatpush1.msra.mxu0 0.0
  %110 = vmatprep.subr.mxu0 0.0
  %111 = vmatpush1.msra.mxu0 0.0
  %112 = vmatprep.subr.mxu0 0.0
  %113 = vmatpush1.msra.mxu0 0.0
  %114 = vmatprep.subr.mxu0 0.0
  %115 = vmatpush1.msra.mxu0 %v41
  %116 = vmatprep.subr.mxu0 0.0
  %117 = vmatpush1.msra.mxu0 %v40
  %118 = vmatprep.subr.mxu0 0.0
  %119 = vmatpush2.msra.mxu0 0.0
  %120 = vmatprep.subr.mxu0 0.0
  %121 = vmatpush2.msra.mxu0 0.0
  %122 = vmatprep.subr.mxu0 0.0
  %123 = vmatpush2.msra.mxu0 0.0
  %124 = vmatprep.subr.mxu0 0.0
  %125 = vmatpush2.msra.mxu0 0.0
  %126 = vmatprep.subr.mxu0 0.0
  %127 = vmatpush2.msra.mxu0 0.0
  %128 = vmatprep.subr.mxu0 0.0
  %129 = vmatpush2.msra.mxu0 0.0
  %130 = vmatprep.subr.mxu0 0.0
  %131 = vmatpush2.msra.mxu0 0.0
  %132 = vmatprep.subr.mxu0 0.0
  %133 = vmatpush2.msra.mxu0 0.0
  %134 = vmatprep.subr.mxu0 0.0
  %135 = vmatpush2.msra.mxu0 0.0
  %136 = vmatprep.subr.mxu0 0.0
  %137 = vmatpush2.msra.mxu0 0.0
  %138 = vmatprep.subr.mxu0 0.0
  %139 = vmatpush2.msra.mxu0 0.0
  %140 = vmatprep.subr.mxu0 0.0
  %141 = vmatpush2.msra.mxu0 0.0
  %142 = vmatprep.subr.mxu0 0.0
  %143 = vmatpush2.msra.mxu0 0.0
  %144 = vmatprep.subr.mxu0 0.0
  %145 = vmatpush2.msra.mxu0 0.0
  %146 = vmatprep.subr.mxu0 0.0
  %147 = vmatpush2.msra.mxu0 0.0
  %148 = vmatprep.subr.mxu0 0.0
  %149 = vmatpush2.msra.mxu0 0.0
  %150 = vmatprep.mubr.f32.mxu0 0.0
  %151 = vmatmul.mubr.f32.gmra.mxu0 %v63
  %v152 = vpop.f32.mrf.mxu0
  %v153 = vadd.f32 %v59, %v152
  %v154 = vpop.f32.mrf.mxu0
  %155 = vmatprep.mubr.f32.mxu0 0.0
  %156 = vmatmul.mubr.f32.gmra.mxu0 %v66
  %v157 = vpop.f32.mrf.mxu0
  %v158 = vadd.f32 %v59, %v157
  %v159 = vpop.f32.mrf.mxu0
  %160 = vmatprep.mubr.f32.mxu0 0.0
  %161 = vmatmul.mubr.f32.gmra.mxu0 %v69
  %v162 = vpop.f32.mrf.mxu0
  %v163 = vadd.f32 %v59, %v162
  %v164 = vpop.f32.mrf.mxu0
  %165 = vmatprep.mubr.f32.mxu0 0.0
  %166 = vmatmul.mubr.f32.gmra.mxu0 %v72
  %v167 = vpop.f32.mrf.mxu0
  %v168 = vadd.f32 %v59, %v167
  %v169 = vpop.f32.mrf.mxu0
  %170 = vmatprep.mubr.f32.mxu0 0.0
  %171 = vmatmul.mubr.f32.gmra.mxu0 %v75
  %v172 = vpop.f32.mrf.mxu0
  %v173 = vadd.f32 %v59, %v172
  %v174 = vpop.f32.mrf.mxu0
  %175 = vmatprep.mubr.f32.mxu0 0.0
  %176 = vmatmul.mubr.f32.gmra.mxu0 %v78
  %v177 = vpop.f32.mrf.mxu0
  %v178 = vadd.f32 %v59, %v177
  %v179 = vpop.f32.mrf.mxu0
  %180 = vmatprep.mubr.f32.mxu0 0.0
  %181 = vmatmul.mubr.f32.gmra.mxu0 %v81
  %v182 = vpop.f32.mrf.mxu0
  %v183 = vadd.f32 %v59, %v182
  %v184 = vpop.f32.mrf.mxu0
  %185 = vmatprep.mubr.f32.mxu0 0.0
  %186 = vmatmul.mubr.f32.gmra.mxu0 %v84
  %v187 = vpop.f32.mrf.mxu0
  %v188 = vadd.f32 %v59, %v187
  %v189 = vpop.f32.mrf.mxu0
  %190 = vdwg.mxu0
  %191 = vst [vmem:[#allocation5] sm:$0xff] %v153
  %192 = vst [vmem:[#allocation5 + $0x8] sm:$0xff] %v158
  %193 = vst [vmem:[#allocation5 + $0x10] sm:$0xff] %v163
  %194 = vst [vmem:[#allocation5 + $0x18] sm:$0xff] %v168
  %195 = vst [vmem:[#allocation5 + $0x20] sm:$0xff] %v173
  %196 = vst [vmem:[#allocation5 + $0x28] sm:$0xff] %v178
  %197 = vst [vmem:[#allocation5 + $0x30] sm:$0xff] %v183
  %198 = vst [vmem:[#allocation5 + $0x38] sm:$0xff] %v188
  %vm199 = vcmask 261120
  %200 = vst.msk [vmem:[#allocation2] sm:$0xff] %vm199, 0.0
  %201 = vst.msk [vmem:[#allocation3] sm:$0xff] %vm199, 0.0
  %v202 = vld [vmem:[#allocation2] sm:$0xff]
  %v203 = vld [vmem:[#allocation3] sm:$0xff]
  %v204 = vld [vmem:[#allocation5] sm:$0xff]
  %v206 = vsel %vm199, %v202, 0
  %208 = vmatprep.subr.mxu0 0.0
  %209 = vmatpush1.msra.mxu0 0.0
  %210 = vmatprep.subr.mxu0 0.0
  %211 = vmatpush1.msra.mxu0 0.0
  %212 = vmatprep.subr.mxu0 0.0
  %213 = vmatpush1.msra.mxu0 0.0
  %214 = vmatprep.subr.mxu0 0.0
  %215 = vmatpush1.msra.mxu0 0.0
  %216 = vmatprep.subr.mxu0 0.0
  %217 = vmatpush1.msra.mxu0 0.0
  %218 = vmatprep.subr.mxu0 0.0
  %219 = vmatpush1.msra.mxu0 0.0
  %220 = vmatprep.subr.mxu0 0.0
  %221 = vmatpush1.msra.mxu0 0.0
  %222 = vmatprep.subr.mxu0 0.0
  %223 = vmatpush1.msra.mxu0 0.0
  %224 = vmatprep.subr.mxu0 0.0
  %225 = vmatpush1.msra.mxu0 0.0
  %226 = vmatprep.subr.mxu0 0.0
  %227 = vmatpush1.msra.mxu0 0.0
  %228 = vmatprep.subr.mxu0 0.0
  %229 = vmatpush1.msra.mxu0 0.0
  %230 = vmatprep.subr.mxu0 0.0
  %231 = vmatpush1.msra.mxu0 0.0
  %232 = vmatprep.subr.mxu0 0.0
  %233 = vmatpush1.msra.mxu0 %v45
  %234 = vmatprep.subr.mxu0 0.0
  %235 = vmatpush1.msra.mxu0 %v44
  %236 = vmatprep.subr.mxu0 0.0
  %237 = vmatpush1.msra.mxu0 %v43
  %238 = vmatprep.subr.mxu0 0.0
  %239 = vmatpush1.msra.mxu0 %v42
  %240 = vmatprep.subr.mxu0 0.0
  %241 = vmatpush2.msra.mxu0 0.0
  %242 = vmatprep.subr.mxu0 0.0
  %243 = vmatpush2.msra.mxu0 0.0
  %244 = vmatprep.subr.mxu0 0.0
  %245 = vmatpush2.msra.mxu0 0.0
  %246 = vmatprep.subr.mxu0 0.0
  %247 = vmatpush2.msra.mxu0 0.0
  %248 = vmatprep.subr.mxu0 0.0
  %249 = vmatpush2.msra.mxu0 0.0
  %250 = vmatprep.subr.mxu0 0.0
  %251 = vmatpush2.msra.mxu0 0.0
  %252 = vmatprep.subr.mxu0 0.0
  %253 = vmatpush2.msra.mxu0 0.0
  %254 = vmatprep.subr.mxu0 0.0
  %255 = vmatpush2.msra.mxu0 0.0
  %256 = vmatprep.subr.mxu0 0.0
  %257 = vmatpush2.msra.mxu0 0.0
  %258 = vmatprep.subr.mxu0 0.0
  %259 = vmatpush2.msra.mxu0 0.0
  %260 = vmatprep.subr.mxu0 0.0
  %261 = vmatpush2.msra.mxu0 0.0
  %262 = vmatprep.subr.mxu0 0.0
  %263 = vmatpush2.msra.mxu0 0.0
  %264 = vmatprep.subr.mxu0 0.0
  %265 = vmatpush2.msra.mxu0 0.0
  %266 = vmatprep.subr.mxu0 0.0
  %267 = vmatpush2.msra.mxu0 0.0
  %268 = vmatprep.subr.mxu0 0.0
  %269 = vmatpush2.msra.mxu0 0.0
  %270 = vmatprep.subr.mxu0 0.0
  %271 = vmatpush2.msra.mxu0 0.0
  %272 = vmatprep.mubr.f32.mxu0 0.0
  %273 = vmatmul.mubr.f32.gmra.mxu0 %v206
  %v274 = vpop.f32.mrf.mxu0
  %v275 = vadd.f32 0.0, %v274
  %v276 = vpop.f32.mrf.mxu0
  %277 = vdwg.mxu0
  %v278 = vadd.f32 %v204, %v275
  %v279 = vxor.u32 %v278, 2147483648
  %v280 = vmul.f32 %v279, 1.442695
  %v281 = vpow.pop %v280
  %v282 = vadd.f32 %v281, 1.0
  %v283 = vrcp.pop %v282
  %v284 = vmul.f32 1.0, %v283
  %v285 = vtanh.pop %v278
  %287 = vrot.lane.b32.xlu0 %v203, 32
  %v288 = vpop.permute.xlu0 %287
  %v290 = vmul.f32 %v284, %v288
  %292 = vrot.lane.b32.xlu0 %v285, 64
  %v293 = vpop.permute.xlu0 %292
  %v295 = vmul.f32 %v284, %v293
  %297 = vrot.lane.b32.xlu0 %v295, 32
  %v298 = vpop.permute.xlu0 %297
  %v300 = vadd.f32 %v290, %v298
  %v301 = vtanh.pop %v300
  %303 = vrot.lane.b32.xlu0 %v301, 64
  %v304 = vpop.permute.xlu0 %303
  %v306 = vmul.f32 %v284, %v304
  %308 = vrot.lane.b32.xlu0 %v300, 96
  %v309 = vpop.permute.xlu0 %308
  %311 = vst.msk [vmem:[#allocation3] sm:$0xff] %vm199, %v309
  %313 = vrot.lane.b32.xlu0 %v306, 32
  %v314 = vpop.permute.xlu0 %313
  %316 = vst.msk [vmem:[#allocation2] sm:$0xff] %vm199, %v314
  %317 = vst.msk [vmem:[#allocation4] sm:$0xff] %vm199, %v314
  %v318 = vld [vmem:[#allocation2] sm:$0xff]
  %v319 = vld [vmem:[#allocation3] sm:$0xff]
  %s320 = scalar_lea.vmem [#allocation5], 8
  %v321 = vld [vmem:[%s320] sm:$0xff]
  %v323 = vsel %vm199, %v318, 0
  %325 = vmatprep.subr.mxu0 0.0
  %326 = vmatpush1.msra.mxu0 0.0
  %327 = vmatprep.subr.mxu0 0.0
  %328 = vmatpush1.msra.mxu0 0.0
  %329 = vmatprep.subr.mxu0 0.0
  %330 = vmatpush1.msra.mxu0 0.0
  %331 = vmatprep.subr.mxu0 0.0
  %332 = vmatpush1.msra.mxu0 0.0
  %333 = vmatprep.subr.mxu0 0.0
  %334 = vmatpush1.msra.mxu0 0.0
  %335 = vmatprep.subr.mxu0 0.0
  %336 = vmatpush1.msra.mxu0 0.0
  %337 = vmatprep.subr.mxu0 0.0
  %338 = vmatpush1.msra.mxu0 0.0
  %339 = vmatprep.subr.mxu0 0.0
  %340 = vmatpush1.msra.mxu0 0.0
  %341 = vmatprep.subr.mxu0 0.0
  %342 = vmatpush1.msra.mxu0 0.0
  %343 = vmatprep.subr.mxu0 0.0
  %344 = vmatpush1.msra.mxu0 0.0
  %345 = vmatprep.subr.mxu0 0.0
  %346 = vmatpush1.msra.mxu0 0.0
  %347 = vmatprep.subr.mxu0 0.0
  %348 = vmatpush1.msra.mxu0 0.0
  %349 = vmatprep.subr.mxu0 0.0
  %350 = vmatpush1.msra.mxu0 %v45
  %351 = vmatprep.subr.mxu0 0.0
  %352 = vmatpush1.msra.mxu0 %v44
  %353 = vmatprep.subr.mxu0 0.0
  %354 = vmatpush1.msra.mxu0 %v43
  %355 = vmatprep.subr.mxu0 0.0
  %356 = vmatpush1.msra.mxu0 %v42
  %357 = vmatprep.subr.mxu0 0.0
  %358 = vmatpush2.msra.mxu0 0.0
  %359 = vmatprep.subr.mxu0 0.0
  %360 = vmatpush2.msra.mxu0 0.0
  %361 = vmatprep.subr.mxu0 0.0
  %362 = vmatpush2.msra.mxu0 0.0
  %363 = vmatprep.subr.mxu0 0.0
  %364 = vmatpush2.msra.mxu0 0.0
  %365 = vmatprep.subr.mxu0 0.0
  %366 = vmatpush2.msra.mxu0 0.0
  %367 = vmatprep.subr.mxu0 0.0
  %368 = vmatpush2.msra.mxu0 0.0
  %369 = vmatprep.subr.mxu0 0.0
  %370 = vmatpush2.msra.mxu0 0.0
  %371 = vmatprep.subr.mxu0 0.0
  %372 = vmatpush2.msra.mxu0 0.0
  %373 = vmatprep.subr.mxu0 0.0
  %374 = vmatpush2.msra.mxu0 0.0
  %375 = vmatprep.subr.mxu0 0.0
  %376 = vmatpush2.msra.mxu0 0.0
  %377 = vmatprep.subr.mxu0 0.0
  %378 = vmatpush2.msra.mxu0 0.0
  %379 = vmatprep.subr.mxu0 0.0
  %380 = vmatpush2.msra.mxu0 0.0
  %381 = vmatprep.subr.mxu0 0.0
  %382 = vmatpush2.msra.mxu0 0.0
  %383 = vmatprep.subr.mxu0 0.0
  %384 = vmatpush2.msra.mxu0 0.0
  %385 = vmatprep.subr.mxu0 0.0
  %386 = vmatpush2.msra.mxu0 0.0
  %387 = vmatprep.subr.mxu0 0.0
  %388 = vmatpush2.msra.mxu0 0.0
  %389 = vmatprep.mubr.f32.mxu0 0.0
  %390 = vmatmul.mubr.f32.gmra.mxu0 %v323
  %v391 = vpop.f32.mrf.mxu0
  %v392 = vadd.f32 0.0, %v391
  %v393 = vpop.f32.mrf.mxu0
  %394 = vdwg.mxu0
  %v395 = vadd.f32 %v321, %v392
  %v396 = vxor.u32 %v395, 2147483648
  %v397 = vmul.f32 %v396, 1.442695
  %v398 = vpow.pop %v397
  %v399 = vadd.f32 %v398, 1.0
  %v400 = vrcp.pop %v399
  %v401 = vmul.f32 1.0, %v400
  %v402 = vtanh.pop %v395
  %404 = vrot.lane.b32.xlu0 %v319, 32
  %v405 = vpop.permute.xlu0 %404
  %v407 = vmul.f32 %v401, %v405
  %409 = vrot.lane.b32.xlu0 %v402, 64
  %v410 = vpop.permute.xlu0 %409
  %v412 = vmul.f32 %v401, %v410
  %414 = vrot.lane.b32.xlu0 %v412, 32
  %v415 = vpop.permute.xlu0 %414
  %v417 = vadd.f32 %v407, %v415
  %v418 = vtanh.pop %v417
  %420 = vrot.lane.b32.xlu0 %v418, 64
  %v421 = vpop.permute.xlu0 %420
  %v423 = vmul.f32 %v401, %v421
  %425 = vrot.lane.b32.xlu0 %v417, 96
  %v426 = vpop.permute.xlu0 %425
  %428 = vst.msk [vmem:[#allocation3] sm:$0xff] %vm199, %v426
  %430 = vrot.lane.b32.xlu0 %v423, 32
  %v431 = vpop.permute.xlu0 %430
  %433 = vst.msk [vmem:[#allocation2] sm:$0xff] %vm199, %v431
  %s434 = scalar_lea.vmem [#allocation4], 8
  %435 = vst.msk [vmem:[%s434] sm:$0xff] %vm199, %v431
  %v436 = vld [vmem:[#allocation2] sm:$0xff]
  %v437 = vld [vmem:[#allocation3] sm:$0xff]
  %s438 = scalar_lea.vmem [#allocation5], 16
  %v439 = vld [vmem:[%s438] sm:$0xff]
  %v441 = vsel %vm199, %v436, 0
  %443 = vmatprep.subr.mxu0 0.0
  %444 = vmatpush1.msra.mxu0 0.0
  %445 = vmatprep.subr.mxu0 0.0
  %446 = vmatpush1.msra.mxu0 0.0
  %447 = vmatprep.subr.mxu0 0.0
  %448 = vmatpush1.msra.mxu0 0.0
  %449 = vmatprep.subr.mxu0 0.0
  %450 = vmatpush1.msra.mxu0 0.0
  %451 = vmatprep.subr.mxu0 0.0
  %452 = vmatpush1.msra.mxu0 0.0
  %453 = vmatprep.subr.mxu0 0.0
  %454 = vmatpush1.msra.mxu0 0.0
  %455 = vmatprep.subr.mxu0 0.0
  %456 = vmatpush1.msra.mxu0 0.0
  %457 = vmatprep.subr.mxu0 0.0
  %458 = vmatpush1.msra.mxu0 0.0
  %459 = vmatprep.subr.mxu0 0.0
  %460 = vmatpush1.msra.mxu0 0.0
  %461 = vmatprep.subr.mxu0 0.0
  %462 = vmatpush1.msra.mxu0 0.0
  %463 = vmatprep.subr.mxu0 0.0
  %464 = vmatpush1.msra.mxu0 0.0
  %465 = vmatprep.subr.mxu0 0.0
  %466 = vmatpush1.msra.mxu0 0.0
  %467 = vmatprep.subr.mxu0 0.0
  %468 = vmatpush1.msra.mxu0 %v45
  %469 = vmatprep.subr.mxu0 0.0
  %470 = vmatpush1.msra.mxu0 %v44
  %471 = vmatprep.subr.mxu0 0.0
  %472 = vmatpush1.msra.mxu0 %v43
  %473 = vmatprep.subr.mxu0 0.0
  %474 = vmatpush1.msra.mxu0 %v42
  %475 = vmatprep.subr.mxu0 0.0
  %476 = vmatpush2.msra.mxu0 0.0
  %477 = vmatprep.subr.mxu0 0.0
  %478 = vmatpush2.msra.mxu0 0.0
  %479 = vmatprep.subr.mxu0 0.0
  %480 = vmatpush2.msra.mxu0 0.0
  %481 = vmatprep.subr.mxu0 0.0
  %482 = vmatpush2.msra.mxu0 0.0
  %483 = vmatprep.subr.mxu0 0.0
  %484 = vmatpush2.msra.mxu0 0.0
  %485 = vmatprep.subr.mxu0 0.0
  %486 = vmatpush2.msra.mxu0 0.0
  %487 = vmatprep.subr.mxu0 0.0
  %488 = vmatpush2.msra.mxu0 0.0
  %489 = vmatprep.subr.mxu0 0.0
  %490 = vmatpush2.msra.mxu0 0.0
  %491 = vmatprep.subr.mxu0 0.0
  %492 = vmatpush2.msra.mxu0 0.0
  %493 = vmatprep.subr.mxu0 0.0
  %494 = vmatpush2.msra.mxu0 0.0
  %495 = vmatprep.subr.mxu0 0.0
  %496 = vmatpush2.msra.mxu0 0.0
  %497 = vmatprep.subr.mxu0 0.0
  %498 = vmatpush2.msra.mxu0 0.0
  %499 = vmatprep.subr.mxu0 0.0
  %500 = vmatpush2.msra.mxu0 0.0
  %501 = vmatprep.subr.mxu0 0.0
  %502 = vmatpush2.msra.mxu0 0.0
  %503 = vmatprep.subr.mxu0 0.0
  %504 = vmatpush2.msra.mxu0 0.0
  %505 = vmatprep.subr.mxu0 0.0
  %506 = vmatpush2.msra.mxu0 0.0
  %507 = vmatprep.mubr.f32.mxu0 0.0
  %508 = vmatmul.mubr.f32.gmra.mxu0 %v441
  %v509 = vpop.f32.mrf.mxu0
  %v510 = vadd.f32 0.0, %v509
  %v511 = vpop.f32.mrf.mxu0
  %512 = vdwg.mxu0
  %v513 = vadd.f32 %v439, %v510
  %v514 = vxor.u32 %v513, 2147483648
  %v515 = vmul.f32 %v514, 1.442695
  %v516 = vpow.pop %v515
  %v517 = vadd.f32 %v516, 1.0
  %v518 = vrcp.pop %v517
  %v519 = vmul.f32 1.0, %v518
  %v520 = vtanh.pop %v513
  %522 = vrot.lane.b32.xlu0 %v437, 32
  %v523 = vpop.permute.xlu0 %522
  %v525 = vmul.f32 %v519, %v523
  %527 = vrot.lane.b32.xlu0 %v520, 64
  %v528 = vpop.permute.xlu0 %527
  %v530 = vmul.f32 %v519, %v528
  %532 = vrot.lane.b32.xlu0 %v530, 32
  %v533 = vpop.permute.xlu0 %532
  %v535 = vadd.f32 %v525, %v533
  %v536 = vtanh.pop %v535
  %538 = vrot.lane.b32.xlu0 %v536, 64
  %v539 = vpop.permute.xlu0 %538
  %v541 = vmul.f32 %v519, %v539
  %543 = vrot.lane.b32.xlu0 %v535, 96
  %v544 = vpop.permute.xlu0 %543
  %546 = vst.msk [vmem:[#allocation3] sm:$0xff] %vm199, %v544
  %548 = vrot.lane.b32.xlu0 %v541, 32
  %v549 = vpop.permute.xlu0 %548
  %551 = vst.msk [vmem:[#allocation2] sm:$0xff] %vm199, %v549
  %s552 = scalar_lea.vmem [#allocation4], 16
  %553 = vst.msk [vmem:[%s552] sm:$0xff] %vm199, %v549
  %v554 = vld [vmem:[#allocation2] sm:$0xff]
  %v555 = vld [vmem:[#allocation3] sm:$0xff]
  %s556 = scalar_lea.vmem [#allocation5], 24
  %v557 = vld [vmem:[%s556] sm:$0xff]
  %v559 = vsel %vm199, %v554, 0
  %561 = vmatprep.subr.mxu0 0.0
  %562 = vmatpush1.msra.mxu0 0.0
  %563 = vmatprep.subr.mxu0 0.0
  %564 = vmatpush1.msra.mxu0 0.0
  %565 = vmatprep.subr.mxu0 0.0
  %566 = vmatpush1.msra.mxu0 0.0
  %567 = vmatprep.subr.mxu0 0.0
  %568 = vmatpush1.msra.mxu0 0.0
  %569 = vmatprep.subr.mxu0 0.0
  %570 = vmatpush1.msra.mxu0 0.0
  %571 = vmatprep.subr.mxu0 0.0
  %572 = vmatpush1.msra.mxu0 0.0
  %573 = vmatprep.subr.mxu0 0.0
  %574 = vmatpush1.msra.mxu0 0.0
  %575 = vmatprep.subr.mxu0 0.0
  %576 = vmatpush1.msra.mxu0 0.0
  %577 = vmatprep.subr.mxu0 0.0
  %578 = vmatpush1.msra.mxu0 0.0
  %579 = vmatprep.subr.mxu0 0.0
  %580 = vmatpush1.msra.mxu0 0.0
  %581 = vmatprep.subr.mxu0 0.0
  %582 = vmatpush1.msra.mxu0 0.0
  %583 = vmatprep.subr.mxu0 0.0
  %584 = vmatpush1.msra.mxu0 0.0
  %585 = vmatprep.subr.mxu0 0.0
  %586 = vmatpush1.msra.mxu0 %v45
  %587 = vmatprep.subr.mxu0 0.0
  %588 = vmatpush1.msra.mxu0 %v44
  %589 = vmatprep.subr.mxu0 0.0
  %590 = vmatpush1.msra.mxu0 %v43
  %591 = vmatprep.subr.mxu0 0.0
  %592 = vmatpush1.msra.mxu0 %v42
  %593 = vmatprep.subr.mxu0 0.0
  %594 = vmatpush2.msra.mxu0 0.0
  %595 = vmatprep.subr.mxu0 0.0
  %596 = vmatpush2.msra.mxu0 0.0
  %597 = vmatprep.subr.mxu0 0.0
  %598 = vmatpush2.msra.mxu0 0.0
  %599 = vmatprep.subr.mxu0 0.0
  %600 = vmatpush2.msra.mxu0 0.0
  %601 = vmatprep.subr.mxu0 0.0
  %602 = vmatpush2.msra.mxu0 0.0
  %603 = vmatprep.subr.mxu0 0.0
  %604 = vmatpush2.msra.mxu0 0.0
  %605 = vmatprep.subr.mxu0 0.0
  %606 = vmatpush2.msra.mxu0 0.0
  %607 = vmatprep.subr.mxu0 0.0
  %608 = vmatpush2.msra.mxu0 0.0
  %609 = vmatprep.subr.mxu0 0.0
  %610 = vmatpush2.msra.mxu0 0.0
  %611 = vmatprep.subr.mxu0 0.0
  %612 = vmatpush2.msra.mxu0 0.0
  %613 = vmatprep.subr.mxu0 0.0
  %614 = vmatpush2.msra.mxu0 0.0
  %615 = vmatprep.subr.mxu0 0.0
  %616 = vmatpush2.msra.mxu0 0.0
  %617 = vmatprep.subr.mxu0 0.0
  %618 = vmatpush2.msra.mxu0 0.0
  %619 = vmatprep.subr.mxu0 0.0
  %620 = vmatpush2.msra.mxu0 0.0
  %621 = vmatprep.subr.mxu0 0.0
  %622 = vmatpush2.msra.mxu0 0.0
  %623 = vmatprep.subr.mxu0 0.0
  %624 = vmatpush2.msra.mxu0 0.0
  %625 = vmatprep.mubr.f32.mxu0 0.0
  %626 = vmatmul.mubr.f32.gmra.mxu0 %v559
  %v627 = vpop.f32.mrf.mxu0
  %v628 = vadd.f32 0.0, %v627
  %v629 = vpop.f32.mrf.mxu0
  %630 = vdwg.mxu0
  %v631 = vadd.f32 %v557, %v628
  %v632 = vxor.u32 %v631, 2147483648
  %v633 = vmul.f32 %v632, 1.442695
  %v634 = vpow.pop %v633
  %v635 = vadd.f32 %v634, 1.0
  %v636 = vrcp.pop %v635
  %v637 = vmul.f32 1.0, %v636
  %v638 = vtanh.pop %v631
  %640 = vrot.lane.b32.xlu0 %v555, 32
  %v641 = vpop.permute.xlu0 %640
  %v643 = vmul.f32 %v637, %v641
  %645 = vrot.lane.b32.xlu0 %v638, 64
  %v646 = vpop.permute.xlu0 %645
  %v648 = vmul.f32 %v637, %v646
  %650 = vrot.lane.b32.xlu0 %v648, 32
  %v651 = vpop.permute.xlu0 %650
  %v653 = vadd.f32 %v643, %v651
  %v654 = vtanh.pop %v653
  %656 = vrot.lane.b32.xlu0 %v654, 64
  %v657 = vpop.permute.xlu0 %656
  %v659 = vmul.f32 %v637, %v657
  %661 = vrot.lane.b32.xlu0 %v653, 96
  %v662 = vpop.permute.xlu0 %661
  %664 = vst.msk [vmem:[#allocation3] sm:$0xff] %vm199, %v662
  %666 = vrot.lane.b32.xlu0 %v659, 32
  %v667 = vpop.permute.xlu0 %666
  %669 = vst.msk [vmem:[#allocation2] sm:$0xff] %vm199, %v667
  %s670 = scalar_lea.vmem [#allocation4], 24
  %671 = vst.msk [vmem:[%s670] sm:$0xff] %vm199, %v667
  %v672 = vld [vmem:[#allocation2] sm:$0xff]
  %v673 = vld [vmem:[#allocation3] sm:$0xff]
  %s674 = scalar_lea.vmem [#allocation5], 32
  %v675 = vld [vmem:[%s674] sm:$0xff]
  %v677 = vsel %vm199, %v672, 0
  %679 = vmatprep.subr.mxu0 0.0
  %680 = vmatpush1.msra.mxu0 0.0
  %681 = vmatprep.subr.mxu0 0.0
  %682 = vmatpush1.msra.mxu0 0.0
  %683 = vmatprep.subr.mxu0 0.0
  %684 = vmatpush1.msra.mxu0 0.0
  %685 = vmatprep.subr.mxu0 0.0
  %686 = vmatpush1.msra.mxu0 0.0
  %687 = vmatprep.subr.mxu0 0.0
  %688 = vmatpush1.msra.mxu0 0.0
  %689 = vmatprep.subr.mxu0 0.0
  %690 = vmatpush1.msra.mxu0 0.0
  %691 = vmatprep.subr.mxu0 0.0
  %692 = vmatpush1.msra.mxu0 0.0
  %693 = vmatprep.subr.mxu0 0.0
  %694 = vmatpush1.msra.mxu0 0.0
  %695 = vmatprep.subr.mxu0 0.0
  %696 = vmatpush1.msra.mxu0 0.0
  %697 = vmatprep.subr.mxu0 0.0
  %698 = vmatpush1.msra.mxu0 0.0
  %699 = vmatprep.subr.mxu0 0.0
  %700 = vmatpush1.msra.mxu0 0.0
  %701 = vmatprep.subr.mxu0 0.0
  %702 = vmatpush1.msra.mxu0 0.0
  %703 = vmatprep.subr.mxu0 0.0
  %704 = vmatpush1.msra.mxu0 %v45
  %705 = vmatprep.subr.mxu0 0.0
  %706 = vmatpush1.msra.mxu0 %v44
  %707 = vmatprep.subr.mxu0 0.0
  %708 = vmatpush1.msra.mxu0 %v43
  %709 = vmatprep.subr.mxu0 0.0
  %710 = vmatpush1.msra.mxu0 %v42
  %711 = vmatprep.subr.mxu0 0.0
  %712 = vmatpush2.msra.mxu0 0.0
  %713 = vmatprep.subr.mxu0 0.0
  %714 = vmatpush2.msra.mxu0 0.0
  %715 = vmatprep.subr.mxu0 0.0
  %716 = vmatpush2.msra.mxu0 0.0
  %717 = vmatprep.subr.mxu0 0.0
  %718 = vmatpush2.msra.mxu0 0.0
  %719 = vmatprep.subr.mxu0 0.0
  %720 = vmatpush2.msra.mxu0 0.0
  %721 = vmatprep.subr.mxu0 0.0
  %722 = vmatpush2.msra.mxu0 0.0
  %723 = vmatprep.subr.mxu0 0.0
  %724 = vmatpush2.msra.mxu0 0.0
  %725 = vmatprep.subr.mxu0 0.0
  %726 = vmatpush2.msra.mxu0 0.0
  %727 = vmatprep.subr.mxu0 0.0
  %728 = vmatpush2.msra.mxu0 0.0
  %729 = vmatprep.subr.mxu0 0.0
  %730 = vmatpush2.msra.mxu0 0.0
  %731 = vmatprep.subr.mxu0 0.0
  %732 = vmatpush2.msra.mxu0 0.0
  %733 = vmatprep.subr.mxu0 0.0
  %734 = vmatpush2.msra.mxu0 0.0
  %735 = vmatprep.subr.mxu0 0.0
  %736 = vmatpush2.msra.mxu0 0.0
  %737 = vmatprep.subr.mxu0 0.0
  %738 = vmatpush2.msra.mxu0 0.0
  %739 = vmatprep.subr.mxu0 0.0
  %740 = vmatpush2.msra.mxu0 0.0
  %741 = vmatprep.subr.mxu0 0.0
  %742 = vmatpush2.msra.mxu0 0.0
  %743 = vmatprep.mubr.f32.mxu0 0.0
  %744 = vmatmul.mubr.f32.gmra.mxu0 %v677
  %v745 = vpop.f32.mrf.mxu0
  %v746 = vadd.f32 0.0, %v745
  %v747 = vpop.f32.mrf.mxu0
  %748 = vdwg.mxu0
  %v749 = vadd.f32 %v675, %v746
  %v750 = vxor.u32 %v749, 2147483648
  %v751 = vmul.f32 %v750, 1.442695
  %v752 = vpow.pop %v751
  %v753 = vadd.f32 %v752, 1.0
  %v754 = vrcp.pop %v753
  %v755 = vmul.f32 1.0, %v754
  %v756 = vtanh.pop %v749
  %758 = vrot.lane.b32.xlu0 %v673, 32
  %v759 = vpop.permute.xlu0 %758
  %v761 = vmul.f32 %v755, %v759
  %763 = vrot.lane.b32.xlu0 %v756, 64
  %v764 = vpop.permute.xlu0 %763
  %v766 = vmul.f32 %v755, %v764
  %768 = vrot.lane.b32.xlu0 %v766, 32
  %v769 = vpop.permute.xlu0 %768
  %v771 = vadd.f32 %v761, %v769
  %v772 = vtanh.pop %v771
  %774 = vrot.lane.b32.xlu0 %v772, 64
  %v775 = vpop.permute.xlu0 %774
  %v777 = vmul.f32 %v755, %v775
  %779 = vrot.lane.b32.xlu0 %v771, 96
  %v780 = vpop.permute.xlu0 %779
  %782 = vst.msk [vmem:[#allocation3] sm:$0xff] %vm199, %v780
  %784 = vrot.lane.b32.xlu0 %v777, 32
  %v785 = vpop.permute.xlu0 %784
  %787 = vst.msk [vmem:[#allocation2] sm:$0xff] %vm199, %v785
  %s788 = scalar_lea.vmem [#allocation4], 32
  %789 = vst.msk [vmem:[%s788] sm:$0xff] %vm199, %v785
  %v790 = vld [vmem:[#allocation2] sm:$0xff]
  %v791 = vld [vmem:[#allocation3] sm:$0xff]
  %s792 = scalar_lea.vmem [#allocation5], 40
  %v793 = vld [vmem:[%s792] sm:$0xff]
  %v795 = vsel %vm199, %v790, 0
  %797 = vmatprep.subr.mxu0 0.0
  %798 = vmatpush1.msra.mxu0 0.0
  %799 = vmatprep.subr.mxu0 0.0
  %800 = vmatpush1.msra.mxu0 0.0
  %801 = vmatprep.subr.mxu0 0.0
  %802 = vmatpush1.msra.mxu0 0.0
  %803 = vmatprep.subr.mxu0 0.0
  %804 = vmatpush1.msra.mxu0 0.0
  %805 = vmatprep.subr.mxu0 0.0
  %806 = vmatpush1.msra.mxu0 0.0
  %807 = vmatprep.subr.mxu0 0.0
  %808 = vmatpush1.msra.mxu0 0.0
  %809 = vmatprep.subr.mxu0 0.0
  %810 = vmatpush1.msra.mxu0 0.0
  %811 = vmatprep.subr.mxu0 0.0
  %812 = vmatpush1.msra.mxu0 0.0
  %813 = vmatprep.subr.mxu0 0.0
  %814 = vmatpush1.msra.mxu0 0.0
  %815 = vmatprep.subr.mxu0 0.0
  %816 = vmatpush1.msra.mxu0 0.0
  %817 = vmatprep.subr.mxu0 0.0
  %818 = vmatpush1.msra.mxu0 0.0
  %819 = vmatprep.subr.mxu0 0.0
  %820 = vmatpush1.msra.mxu0 0.0
  %821 = vmatprep.subr.mxu0 0.0
  %822 = vmatpush1.msra.mxu0 %v45
  %823 = vmatprep.subr.mxu0 0.0
  %824 = vmatpush1.msra.mxu0 %v44
  %825 = vmatprep.subr.mxu0 0.0
  %826 = vmatpush1.msra.mxu0 %v43
  %827 = vmatprep.subr.mxu0 0.0
  %828 = vmatpush1.msra.mxu0 %v42
  %829 = vmatprep.subr.mxu0 0.0
  %830 = vmatpush2.msra.mxu0 0.0
  %831 = vmatprep.subr.mxu0 0.0
  %832 = vmatpush2.msra.mxu0 0.0
  %833 = vmatprep.subr.mxu0 0.0
  %834 = vmatpush2.msra.mxu0 0.0
  %835 = vmatprep.subr.mxu0 0.0
  %836 = vmatpush2.msra.mxu0 0.0
  %837 = vmatprep.subr.mxu0 0.0
  %838 = vmatpush2.msra.mxu0 0.0
  %839 = vmatprep.subr.mxu0 0.0
  %840 = vmatpush2.msra.mxu0 0.0
  %841 = vmatprep.subr.mxu0 0.0
  %842 = vmatpush2.msra.mxu0 0.0
  %843 = vmatprep.subr.mxu0 0.0
  %844 = vmatpush2.msra.mxu0 0.0
  %845 = vmatprep.subr.mxu0 0.0
  %846 = vmatpush2.msra.mxu0 0.0
  %847 = vmatprep.subr.mxu0 0.0
  %848 = vmatpush2.msra.mxu0 0.0
  %849 = vmatprep.subr.mxu0 0.0
  %850 = vmatpush2.msra.mxu0 0.0
  %851 = vmatprep.subr.mxu0 0.0
  %852 = vmatpush2.msra.mxu0 0.0
  %853 = vmatprep.subr.mxu0 0.0
  %854 = vmatpush2.msra.mxu0 0.0
  %855 = vmatprep.subr.mxu0 0.0
  %856 = vmatpush2.msra.mxu0 0.0
  %857 = vmatprep.subr.mxu0 0.0
  %858 = vmatpush2.msra.mxu0 0.0
  %859 = vmatprep.subr.mxu0 0.0
  %860 = vmatpush2.msra.mxu0 0.0
  %861 = vmatprep.mubr.f32.mxu0 0.0
  %862 = vmatmul.mubr.f32.gmra.mxu0 %v795
  %v863 = vpop.f32.mrf.mxu0
  %v864 = vadd.f32 0.0, %v863
  %v865 = vpop.f32.mrf.mxu0
  %866 = vdwg.mxu0
  %v867 = vadd.f32 %v793, %v864
  %v868 = vxor.u32 %v867, 2147483648
  %v869 = vmul.f32 %v868, 1.442695
  %v870 = vpow.pop %v869
  %v871 = vadd.f32 %v870, 1.0
  %v872 = vrcp.pop %v871
  %v873 = vmul.f32 1.0, %v872
  %v874 = vtanh.pop %v867
  %876 = vrot.lane.b32.xlu0 %v791, 32
  %v877 = vpop.permute.xlu0 %876
  %v879 = vmul.f32 %v873, %v877
  %881 = vrot.lane.b32.xlu0 %v874, 64
  %v882 = vpop.permute.xlu0 %881
  %v884 = vmul.f32 %v873, %v882
  %886 = vrot.lane.b32.xlu0 %v884, 32
  %v887 = vpop.permute.xlu0 %886
  %v889 = vadd.f32 %v879, %v887
  %v890 = vtanh.pop %v889
  %892 = vrot.lane.b32.xlu0 %v890, 64
  %v893 = vpop.permute.xlu0 %892
  %v895 = vmul.f32 %v873, %v893
  %897 = vrot.lane.b32.xlu0 %v889, 96
  %v898 = vpop.permute.xlu0 %897
  %900 = vst.msk [vmem:[#allocation3] sm:$0xff] %vm199, %v898
  %902 = vrot.lane.b32.xlu0 %v895, 32
  %v903 = vpop.permute.xlu0 %902
  %905 = vst.msk [vmem:[#allocation2] sm:$0xff] %vm199, %v903
  %s906 = scalar_lea.vmem [#allocation4], 40
  %907 = vst.msk [vmem:[%s906] sm:$0xff] %vm199, %v903
  %v908 = vld [vmem:[#allocation2] sm:$0xff]
  %v909 = vld [vmem:[#allocation3] sm:$0xff]
  %s910 = scalar_lea.vmem [#allocation5], 48
  %v911 = vld [vmem:[%s910] sm:$0xff]
  %v913 = vsel %vm199, %v908, 0
  %915 = vmatprep.subr.mxu0 0.0
  %916 = vmatpush1.msra.mxu0 0.0
  %917 = vmatprep.subr.mxu0 0.0
  %918 = vmatpush1.msra.mxu0 0.0
  %919 = vmatprep.subr.mxu0 0.0
  %920 = vmatpush1.msra.mxu0 0.0
  %921 = vmatprep.subr.mxu0 0.0
  %922 = vmatpush1.msra.mxu0 0.0
  %923 = vmatprep.subr.mxu0 0.0
  %924 = vmatpush1.msra.mxu0 0.0
  %925 = vmatprep.subr.mxu0 0.0
  %926 = vmatpush1.msra.mxu0 0.0
  %927 = vmatprep.subr.mxu0 0.0
  %928 = vmatpush1.msra.mxu0 0.0
  %929 = vmatprep.subr.mxu0 0.0
  %930 = vmatpush1.msra.mxu0 0.0
  %931 = vmatprep.subr.mxu0 0.0
  %932 = vmatpush1.msra.mxu0 0.0
  %933 = vmatprep.subr.mxu0 0.0
  %934 = vmatpush1.msra.mxu0 0.0
  %935 = vmatprep.subr.mxu0 0.0
  %936 = vmatpush1.msra.mxu0 0.0
  %937 = vmatprep.subr.mxu0 0.0
  %938 = vmatpush1.msra.mxu0 0.0
  %939 = vmatprep.subr.mxu0 0.0
  %940 = vmatpush1.msra.mxu0 %v45
  %941 = vmatprep.subr.mxu0 0.0
  %942 = vmatpush1.msra.mxu0 %v44
  %943 = vmatprep.subr.mxu0 0.0
  %944 = vmatpush1.msra.mxu0 %v43
  %945 = vmatprep.subr.mxu0 0.0
  %946 = vmatpush1.msra.mxu0 %v42
  %947 = vmatprep.subr.mxu0 0.0
  %948 = vmatpush2.msra.mxu0 0.0
  %949 = vmatprep.subr.mxu0 0.0
  %950 = vmatpush2.msra.mxu0 0.0
  %951 = vmatprep.subr.mxu0 0.0
  %952 = vmatpush2.msra.mxu0 0.0
  %953 = vmatprep.subr.mxu0 0.0
  %954 = vmatpush2.msra.mxu0 0.0
  %955 = vmatprep.subr.mxu0 0.0
  %956 = vmatpush2.msra.mxu0 0.0
  %957 = vmatprep.subr.mxu0 0.0
  %958 = vmatpush2.msra.mxu0 0.0
  %959 = vmatprep.subr.mxu0 0.0
  %960 = vmatpush2.msra.mxu0 0.0
  %961 = vmatprep.subr.mxu0 0.0
  %962 = vmatpush2.msra.mxu0 0.0
  %963 = vmatprep.subr.mxu0 0.0
  %964 = vmatpush2.msra.mxu0 0.0
  %965 = vmatprep.subr.mxu0 0.0
  %966 = vmatpush2.msra.mxu0 0.0
  %967 = vmatprep.subr.mxu0 0.0
  %968 = vmatpush2.msra.mxu0 0.0
  %969 = vmatprep.subr.mxu0 0.0
  %970 = vmatpush2.msra.mxu0 0.0
  %971 = vmatprep.subr.mxu0 0.0
  %972 = vmatpush2.msra.mxu0 0.0
  %973 = vmatprep.subr.mxu0 0.0
  %974 = vmatpush2.msra.mxu0 0.0
  %975 = vmatprep.subr.mxu0 0.0
  %976 = vmatpush2.msra.mxu0 0.0
  %977 = vmatprep.subr.mxu0 0.0
  %978 = vmatpush2.msra.mxu0 0.0
  %979 = vmatprep.mubr.f32.mxu0 0.0
  %980 = vmatmul.mubr.f32.gmra.mxu0 %v913
  %v981 = vpop.f32.mrf.mxu0
  %v982 = vadd.f32 0.0, %v981
  %v983 = vpop.f32.mrf.mxu0
  %984 = vdwg.mxu0
  %v985 = vadd.f32 %v911, %v982
  %v986 = vxor.u32 %v985, 2147483648
  %v987 = vmul.f32 %v986, 1.442695
  %v988 = vpow.pop %v987
  %v989 = vadd.f32 %v988, 1.0
  %v990 = vrcp.pop %v989
  %v991 = vmul.f32 1.0, %v990
  %v992 = vtanh.pop %v985
  %994 = vrot.lane.b32.xlu0 %v909, 32
  %v995 = vpop.permute.xlu0 %994
  %v997 = vmul.f32 %v991, %v995
  %999 = vrot.lane.b32.xlu0 %v992, 64
  %v1000 = vpop.permute.xlu0 %999
  %v1002 = vmul.f32 %v991, %v1000
  %1004 = vrot.lane.b32.xlu0 %v1002, 32
  %v1005 = vpop.permute.xlu0 %1004
  %v1007 = vadd.f32 %v997, %v1005
  %v1008 = vtanh.pop %v1007
  %1010 = vrot.lane.b32.xlu0 %v1008, 64
  %v1011 = vpop.permute.xlu0 %1010
  %v1013 = vmul.f32 %v991, %v1011
  %1015 = vrot.lane.b32.xlu0 %v1007, 96
  %v1016 = vpop.permute.xlu0 %1015
  %1018 = vst.msk [vmem:[#allocation3] sm:$0xff] %vm199, %v1016
  %1020 = vrot.lane.b32.xlu0 %v1013, 32
  %v1021 = vpop.permute.xlu0 %1020
  %1023 = vst.msk [vmem:[#allocation2] sm:$0xff] %vm199, %v1021
  %s1024 = scalar_lea.vmem [#allocation4], 48
  %1025 = vst.msk [vmem:[%s1024] sm:$0xff] %vm199, %v1021
  %v1026 = vld [vmem:[#allocation2] sm:$0xff]
  %v1027 = vld [vmem:[#allocation3] sm:$0xff]
  %s1028 = scalar_lea.vmem [#allocation5], 56
  %v1029 = vld [vmem:[%s1028] sm:$0xff]
  %v1031 = vsel %vm199, %v1026, 0
  %1033 = vmatprep.subr.mxu0 0.0
  %1034 = vmatpush1.msra.mxu0 0.0
  %1035 = vmatprep.subr.mxu0 0.0
  %1036 = vmatpush1.msra.mxu0 0.0
  %1037 = vmatprep.subr.mxu0 0.0
  %1038 = vmatpush1.msra.mxu0 0.0
  %1039 = vmatprep.subr.mxu0 0.0
  %1040 = vmatpush1.msra.mxu0 0.0
  %1041 = vmatprep.subr.mxu0 0.0
  %1042 = vmatpush1.msra.mxu0 0.0
  %1043 = vmatprep.subr.mxu0 0.0
  %1044 = vmatpush1.msra.mxu0 0.0
  %1045 = vmatprep.subr.mxu0 0.0
  %1046 = vmatpush1.msra.mxu0 0.0
  %1047 = vmatprep.subr.mxu0 0.0
  %1048 = vmatpush1.msra.mxu0 0.0
  %1049 = vmatprep.subr.mxu0 0.0
  %1050 = vmatpush1.msra.mxu0 0.0
  %1051 = vmatprep.subr.mxu0 0.0
  %1052 = vmatpush1.msra.mxu0 0.0
  %1053 = vmatprep.subr.mxu0 0.0
  %1054 = vmatpush1.msra.mxu0 0.0
  %1055 = vmatprep.subr.mxu0 0.0
  %1056 = vmatpush1.msra.mxu0 0.0
  %1057 = vmatprep.subr.mxu0 0.0
  %1058 = vmatpush1.msra.mxu0 %v45
  %1059 = vmatprep.subr.mxu0 0.0
  %1060 = vmatpush1.msra.mxu0 %v44
  %1061 = vmatprep.subr.mxu0 0.0
  %1062 = vmatpush1.msra.mxu0 %v43
  %1063 = vmatprep.subr.mxu0 0.0
  %1064 = vmatpush1.msra.mxu0 %v42
  %1065 = vmatprep.subr.mxu0 0.0
  %1066 = vmatpush2.msra.mxu0 0.0
  %1067 = vmatprep.subr.mxu0 0.0
  %1068 = vmatpush2.msra.mxu0 0.0
  %1069 = vmatprep.subr.mxu0 0.0
  %1070 = vmatpush2.msra.mxu0 0.0
  %1071 = vmatprep.subr.mxu0 0.0
  %1072 = vmatpush2.msra.mxu0 0.0
  %1073 = vmatprep.subr.mxu0 0.0
  %1074 = vmatpush2.msra.mxu0 0.0
  %1075 = vmatprep.subr.mxu0 0.0
  %1076 = vmatpush2.msra.mxu0 0.0
  %1077 = vmatprep.subr.mxu0 0.0
  %1078 = vmatpush2.msra.mxu0 0.0
  %1079 = vmatprep.subr.mxu0 0.0
  %1080 = vmatpush2.msra.mxu0 0.0
  %1081 = vmatprep.subr.mxu0 0.0
  %1082 = vmatpush2.msra.mxu0 0.0
  %1083 = vmatprep.subr.mxu0 0.0
  %1084 = vmatpush2.msra.mxu0 0.0
  %1085 = vmatprep.subr.mxu0 0.0
  %1086 = vmatpush2.msra.mxu0 0.0
  %1087 = vmatprep.subr.mxu0 0.0
  %1088 = vmatpush2.msra.mxu0 0.0
  %1089 = vmatprep.subr.mxu0 0.0
  %1090 = vmatpush2.msra.mxu0 0.0
  %1091 = vmatprep.subr.mxu0 0.0
  %1092 = vmatpush2.msra.mxu0 0.0
  %1093 = vmatprep.subr.mxu0 0.0
  %1094 = vmatpush2.msra.mxu0 0.0
  %1095 = vmatprep.subr.mxu0 0.0
  %1096 = vmatpush2.msra.mxu0 0.0
  %1097 = vmatprep.mubr.f32.mxu0 0.0
  %1098 = vmatmul.mubr.f32.gmra.mxu0 %v1031
  %v1099 = vpop.f32.mrf.mxu0
  %v1100 = vadd.f32 0.0, %v1099
  %v1101 = vpop.f32.mrf.mxu0
  %1102 = vdwg.mxu0
  %v1103 = vadd.f32 %v1029, %v1100
  %v1104 = vxor.u32 %v1103, 2147483648
  %v1105 = vmul.f32 %v1104, 1.442695
  %v1106 = vpow.pop %v1105
  %v1107 = vadd.f32 %v1106, 1.0
  %v1108 = vrcp.pop %v1107
  %v1109 = vmul.f32 1.0, %v1108
  %v1110 = vtanh.pop %v1103
  %1112 = vrot.lane.b32.xlu0 %v1027, 32
  %v1113 = vpop.permute.xlu0 %1112
  %v1115 = vmul.f32 %v1109, %v1113
  %1117 = vrot.lane.b32.xlu0 %v1110, 64
  %v1118 = vpop.permute.xlu0 %1117
  %v1120 = vmul.f32 %v1109, %v1118
  %1122 = vrot.lane.b32.xlu0 %v1120, 32
  %v1123 = vpop.permute.xlu0 %1122
  %v1125 = vadd.f32 %v1115, %v1123
  %v1126 = vtanh.pop %v1125
  %1128 = vrot.lane.b32.xlu0 %v1126, 64
  %v1129 = vpop.permute.xlu0 %1128
  %v1131 = vmul.f32 %v1109, %v1129
  %1133 = vrot.lane.b32.xlu0 %v1125, 96
  %v1134 = vpop.permute.xlu0 %1133
  %1136 = vst.msk [vmem:[#allocation3] sm:$0xff] %vm199, %v1134
  %1138 = vrot.lane.b32.xlu0 %v1131, 32
  %v1139 = vpop.permute.xlu0 %1138
  %1141 = vst.msk [vmem:[#allocation2] sm:$0xff] %vm199, %v1139
  %s1142 = scalar_lea.vmem [#allocation4], 56
  %1143 = vst.msk [vmem:[%s1142] sm:$0xff] %vm199, %v1139
  %v1144 = vld [vmem:[#allocation2] sm:$0xff]
  %v1145 = vtanh.pop %v1144
  %1146 = vst.msk [vmem:[#allocation6] sm:$0xff] %vm199, %v1145
  %v1147 = vld [vmem:[%s4] sm:$0xff]
  %v1148 = vld [vmem:[%s4 + $0x8] sm:$0xff]
  %v1149 = vld [vmem:[%s4 + $0x10] sm:$0xff]
  %v1150 = vld [vmem:[%s4 + $0x18] sm:$0xff]
  %v1151 = vld [vmem:[%s5] sm:$0xff]
  %v1152 = vld [vmem:[%s5 + $0x8] sm:$0xff]
  %v1153 = vld [vmem:[%s5 + $0x10] sm:$0xff]
  %v1154 = vld [vmem:[%s5 + $0x18] sm:$0xff]
  %v1155 = vld [vmem:[%s6] sm:$0x1]
  %v1156 = vld [vmem:[#allocation4] sm:$0xff]
  %v1157 = vld [vmem:[#allocation4 + $0x8] sm:$0xff]
  %v1158 = vld [vmem:[#allocation4 + $0x10] sm:$0xff]
  %v1159 = vld [vmem:[#allocation4 + $0x18] sm:$0xff]
  %v1160 = vld [vmem:[#allocation4 + $0x20] sm:$0xff]
  %v1161 = vld [vmem:[#allocation4 + $0x28] sm:$0xff]
  %v1162 = vld [vmem:[#allocation4 + $0x30] sm:$0xff]
  %v1163 = vld [vmem:[#allocation4 + $0x38] sm:$0xff]
  %v1165 = vlaneseq
  %v1166 = vshrl.u32 %v1165, 7
  %v1167 = vsub.s32 0, %v1166
  %v1168 = vrot.slane %v1155, %v1167
  %v1171 = vsel %vm199, %v1156, 0
  %v1174 = vsel %vm199, %v1157, 0
  %v1177 = vsel %vm199, %v1158, 0
  %v1180 = vsel %vm199, %v1159, 0
  %v1183 = vsel %vm199, %v1160, 0
  %v1186 = vsel %vm199, %v1161, 0
  %v1189 = vsel %vm199, %v1162, 0
  %v1192 = vsel %vm199, %v1163, 0
  %1194 = vmatprep.subr.mxu0 0.0
  %1195 = vmatpush1.msra.mxu0 0.0
  %1196 = vmatprep.subr.mxu0 0.0
  %1197 = vmatpush1.msra.mxu0 0.0
  %1198 = vmatprep.subr.mxu0 0.0
  %1199 = vmatpush1.msra.mxu0 0.0
  %1200 = vmatprep.subr.mxu0 0.0
  %1201 = vmatpush1.msra.mxu0 0.0
  %1202 = vmatprep.subr.mxu0 0.0
  %1203 = vmatpush1.msra.mxu0 0.0
  %1204 = vmatprep.subr.mxu0 0.0
  %1205 = vmatpush1.msra.mxu0 0.0
  %1206 = vmatprep.subr.mxu0 0.0
  %1207 = vmatpush1.msra.mxu0 0.0
  %1208 = vmatprep.subr.mxu0 0.0
  %1209 = vmatpush1.msra.mxu0 0.0
  %1210 = vmatprep.subr.mxu0 0.0
  %1211 = vmatpush1.msra.mxu0 0.0
  %1212 = vmatprep.subr.mxu0 0.0
  %1213 = vmatpush1.msra.mxu0 0.0
  %1214 = vmatprep.subr.mxu0 0.0
  %1215 = vmatpush1.msra.mxu0 0.0
  %1216 = vmatprep.subr.mxu0 0.0
  %1217 = vmatpush1.msra.mxu0 0.0
  %1218 = vmatprep.subr.mxu0 0.0
  %1219 = vmatpush1.msra.mxu0 %v1150
  %1220 = vmatprep.subr.mxu0 0.0
  %1221 = vmatpush1.msra.mxu0 %v1149
  %1222 = vmatprep.subr.mxu0 0.0
  %1223 = vmatpush1.msra.mxu0 %v1148
  %1224 = vmatprep.subr.mxu0 0.0
  %1225 = vmatpush1.msra.mxu0 %v1147
  %1226 = vmatprep.subr.mxu0 0.0
  %1227 = vmatpush2.msra.mxu0 0.0
  %1228 = vmatprep.subr.mxu0 0.0
  %1229 = vmatpush2.msra.mxu0 0.0
  %1230 = vmatprep.subr.mxu0 0.0
  %1231 = vmatpush2.msra.mxu0 0.0
  %1232 = vmatprep.subr.mxu0 0.0
  %1233 = vmatpush2.msra.mxu0 0.0
  %1234 = vmatprep.subr.mxu0 0.0
  %1235 = vmatpush2.msra.mxu0 0.0
  %1236 = vmatprep.subr.mxu0 0.0
  %1237 = vmatpush2.msra.mxu0 0.0
  %1238 = vmatprep.subr.mxu0 0.0
  %1239 = vmatpush2.msra.mxu0 0.0
  %1240 = vmatprep.subr.mxu0 0.0
  %1241 = vmatpush2.msra.mxu0 0.0
  %1242 = vmatprep.subr.mxu0 0.0
  %1243 = vmatpush2.msra.mxu0 0.0
  %1244 = vmatprep.subr.mxu0 0.0
  %1245 = vmatpush2.msra.mxu0 0.0
  %1246 = vmatprep.subr.mxu0 0.0
  %1247 = vmatpush2.msra.mxu0 0.0
  %1248 = vmatprep.subr.mxu0 0.0
  %1249 = vmatpush2.msra.mxu0 0.0
  %1250 = vmatprep.subr.mxu0 0.0
  %1251 = vmatpush2.msra.mxu0 0.0
  %1252 = vmatprep.subr.mxu0 0.0
  %1253 = vmatpush2.msra.mxu0 0.0
  %1254 = vmatprep.subr.mxu0 0.0
  %1255 = vmatpush2.msra.mxu0 0.0
  %1256 = vmatprep.subr.mxu0 0.0
  %1257 = vmatpush2.msra.mxu0 0.0
  %1258 = vmatprep.mubr.f32.mxu0 0.0
  %1259 = vmatmul.mubr.f32.gmra.mxu0 %v1171
  %v1260 = vpop.f32.mrf.mxu0
  %v1261 = vadd.f32 %v1168, %v1260
  %v1262 = vpop.f32.mrf.mxu0
  %1263 = vmatprep.mubr.f32.mxu0 0.0
  %1264 = vmatmul.mubr.f32.gmra.mxu0 %v1174
  %v1265 = vpop.f32.mrf.mxu0
  %v1266 = vadd.f32 %v1168, %v1265
  %v1267 = vpop.f32.mrf.mxu0
  %1268 = vmatprep.mubr.f32.mxu0 0.0
  %1269 = vmatmul.mubr.f32.gmra.mxu0 %v1177
  %v1270 = vpop.f32.mrf.mxu0
  %v1271 = vadd.f32 %v1168, %v1270
  %v1272 = vpop.f32.mrf.mxu0
  %1273 = vmatprep.mubr.f32.mxu0 0.0
  %1274 = vmatmul.mubr.f32.gmra.mxu0 %v1180
  %v1275 = vpop.f32.mrf.mxu0
  %v1276 = vadd.f32 %v1168, %v1275
  %v1277 = vpop.f32.mrf.mxu0
  %1278 = vmatprep.mubr.f32.mxu0 0.0
  %1279 = vmatmul.mubr.f32.gmra.mxu0 %v1183
  %v1280 = vpop.f32.mrf.mxu0
  %v1281 = vadd.f32 %v1168, %v1280
  %v1282 = vpop.f32.mrf.mxu0
  %1283 = vmatprep.mubr.f32.mxu0 0.0
  %1284 = vmatmul.mubr.f32.gmra.mxu0 %v1186
  %v1285 = vpop.f32.mrf.mxu0
  %v1286 = vadd.f32 %v1168, %v1285
  %v1287 = vpop.f32.mrf.mxu0
  %1288 = vmatprep.mubr.f32.mxu0 0.0
  %1289 = vmatmul.mubr.f32.gmra.mxu0 %v1189
  %v1290 = vpop.f32.mrf.mxu0
  %v1291 = vadd.f32 %v1168, %v1290
  %v1292 = vpop.f32.mrf.mxu0
  %1293 = vmatprep.mubr.f32.mxu0 0.0
  %1294 = vmatmul.mubr.f32.gmra.mxu0 %v1192
  %v1295 = vpop.f32.mrf.mxu0
  %v1296 = vadd.f32 %v1168, %v1295
  %v1297 = vpop.f32.mrf.mxu0
  %1298 = vdwg.mxu0
  %1299 = vst [vmem:[#allocation5] sm:$0xff] %v1261
  %1300 = vst [vmem:[#allocation5 + $0x8] sm:$0xff] %v1266
  %1301 = vst [vmem:[#allocation5 + $0x10] sm:$0xff] %v1271
  %1302 = vst [vmem:[#allocation5 + $0x18] sm:$0xff] %v1276
  %1303 = vst [vmem:[#allocation5 + $0x20] sm:$0xff] %v1281
  %1304 = vst [vmem:[#allocation5 + $0x28] sm:$0xff] %v1286
  %1305 = vst [vmem:[#allocation5 + $0x30] sm:$0xff] %v1291
  %1306 = vst [vmem:[#allocation5 + $0x38] sm:$0xff] %v1296
  %1307 = vst.msk [vmem:[#allocation2] sm:$0xff] %vm199, 0.0
  %1308 = vst.msk [vmem:[#allocation3] sm:$0xff] %vm199, 0.0
  %v1309 = vld [vmem:[#allocation2] sm:$0xff]
  %v1310 = vld [vmem:[#allocation3] sm:$0xff]
  %v1311 = vld [vmem:[#allocation5] sm:$0xff]
  %v1313 = vsel %vm199, %v1309, 0
  %1315 = vmatprep.subr.mxu0 0.0
  %1316 = vmatpush1.msra.mxu0 0.0
  %1317 = vmatprep.subr.mxu0 0.0
  %1318 = vmatpush1.msra.mxu0 0.0
  %1319 = vmatprep.subr.mxu0 0.0
  %1320 = vmatpush1.msra.mxu0 0.0
  %1321 = vmatprep.subr.mxu0 0.0
  %1322 = vmatpush1.msra.mxu0 0.0
  %1323 = vmatprep.subr.mxu0 0.0
  %1324 = vmatpush1.msra.mxu0 0.0
  %1325 = vmatprep.subr.mxu0 0.0
  %1326 = vmatpush1.msra.mxu0 0.0
  %1327 = vmatprep.subr.mxu0 0.0
  %1328 = vmatpush1.msra.mxu0 0.0
  %1329 = vmatprep.subr.mxu0 0.0
  %1330 = vmatpush1.msra.mxu0 0.0
  %1331 = vmatprep.subr.mxu0 0.0
  %1332 = vmatpush1.msra.mxu0 0.0
  %1333 = vmatprep.subr.mxu0 0.0
  %1334 = vmatpush1.msra.mxu0 0.0
  %1335 = vmatprep.subr.mxu0 0.0
  %1336 = vmatpush1.msra.mxu0 0.0
  %1337 = vmatprep.subr.mxu0 0.0
  %1338 = vmatpush1.msra.mxu0 0.0
  %1339 = vmatprep.subr.mxu0 0.0
  %1340 = vmatpush1.msra.mxu0 %v1154
  %1341 = vmatprep.subr.mxu0 0.0
  %1342 = vmatpush1.msra.mxu0 %v1153
  %1343 = vmatprep.subr.mxu0 0.0
  %1344 = vmatpush1.msra.mxu0 %v1152
  %1345 = vmatprep.subr.mxu0 0.0
  %1346 = vmatpush1.msra.mxu0 %v1151
  %1347 = vmatprep.subr.mxu0 0.0
  %1348 = vmatpush2.msra.mxu0 0.0
  %1349 = vmatprep.subr.mxu0 0.0
  %1350 = vmatpush2.msra.mxu0 0.0
  %1351 = vmatprep.subr.mxu0 0.0
  %1352 = vmatpush2.msra.mxu0 0.0
  %1353 = vmatprep.subr.mxu0 0.0
  %1354 = vmatpush2.msra.mxu0 0.0
  %1355 = vmatprep.subr.mxu0 0.0
  %1356 = vmatpush2.msra.mxu0 0.0
  %1357 = vmatprep.subr.mxu0 0.0
  %1358 = vmatpush2.msra.mxu0 0.0
  %1359 = vmatprep.subr.mxu0 0.0
  %1360 = vmatpush2.msra.mxu0 0.0
  %1361 = vmatprep.subr.mxu0 0.0
  %1362 = vmatpush2.msra.mxu0 0.0
  %1363 = vmatprep.subr.mxu0 0.0
  %1364 = vmatpush2.msra.mxu0 0.0
  %1365 = vmatprep.subr.mxu0 0.0
  %1366 = vmatpush2.msra.mxu0 0.0
  %1367 = vmatprep.subr.mxu0 0.0
  %1368 = vmatpush2.msra.mxu0 0.0
  %1369 = vmatprep.subr.mxu0 0.0
  %1370 = vmatpush2.msra.mxu0 0.0
  %1371 = vmatprep.subr.mxu0 0.0
  %1372 = vmatpush2.msra.mxu0 0.0
  %1373 = vmatprep.subr.mxu0 0.0
  %1374 = vmatpush2.msra.mxu0 0.0
  %1375 = vmatprep.subr.mxu0 0.0
  %1376 = vmatpush2.msra.mxu0 0.0
  %1377 = vmatprep.subr.mxu0 0.0
  %1378 = vmatpush2.msra.mxu0 0.0
  %1379 = vmatprep.mubr.f32.mxu0 0.0
  %1380 = vmatmul.mubr.f32.gmra.mxu0 %v1313
  %v1381 = vpop.f32.mrf.mxu0
  %v1382 = vadd.f32 0.0, %v1381
  %v1383 = vpop.f32.mrf.mxu0
  %1384 = vdwg.mxu0
  %v1385 = vadd.f32 %v1311, %v1382
  %v1386 = vxor.u32 %v1385, 2147483648
  %v1387 = vmul.f32 %v1386, 1.442695
  %v1388 = vpow.pop %v1387
  %v1389 = vadd.f32 %v1388, 1.0
  %v1390 = vrcp.pop %v1389
  %v1391 = vmul.f32 1.0, %v1390
  %v1392 = vtanh.pop %v1385
  %1394 = vrot.lane.b32.xlu0 %v1310, 32
  %v1395 = vpop.permute.xlu0 %1394
  %v1397 = vmul.f32 %v1391, %v1395
  %1399 = vrot.lane.b32.xlu0 %v1392, 64
  %v1400 = vpop.permute.xlu0 %1399
  %v1402 = vmul.f32 %v1391, %v1400
  %1404 = vrot.lane.b32.xlu0 %v1402, 32
  %v1405 = vpop.permute.xlu0 %1404
  %v1407 = vadd.f32 %v1397, %v1405
  %v1408 = vtanh.pop %v1407
  %1410 = vrot.lane.b32.xlu0 %v1408, 64
  %v1411 = vpop.permute.xlu0 %1410
  %v1413 = vmul.f32 %v1391, %v1411
  %1415 = vrot.lane.b32.xlu0 %v1407, 96
  %v1416 = vpop.permute.xlu0 %1415
  %1418 = vst.msk [vmem:[#allocation3] sm:$0xff] %vm199, %v1416
  %1420 = vrot.lane.b32.xlu0 %v1413, 32
  %v1421 = vpop.permute.xlu0 %1420
  %1423 = vst.msk [vmem:[#allocation2] sm:$0xff] %vm199, %v1421
  %v1424 = vld [vmem:[#allocation2] sm:$0xff]
  %v1425 = vld [vmem:[#allocation3] sm:$0xff]
  %v1426 = vld [vmem:[%s320] sm:$0xff]
  %v1428 = vsel %vm199, %v1424, 0
  %1430 = vmatprep.subr.mxu0 0.0
  %1431 = vmatpush1.msra.mxu0 0.0
  %1432 = vmatprep.subr.mxu0 0.0
  %1433 = vmatpush1.msra.mxu0 0.0
  %1434 = vmatprep.subr.mxu0 0.0
  %1435 = vmatpush1.msra.mxu0 0.0
  %1436 = vmatprep.subr.mxu0 0.0
  %1437 = vmatpush1.msra.mxu0 0.0
  %1438 = vmatprep.subr.mxu0 0.0
  %1439 = vmatpush1.msra.mxu0 0.0
  %1440 = vmatprep.subr.mxu0 0.0
  %1441 = vmatpush1.msra.mxu0 0.0
  %1442 = vmatprep.subr.mxu0 0.0
  %1443 = vmatpush1.msra.mxu0 0.0
  %1444 = vmatprep.subr.mxu0 0.0
  %1445 = vmatpush1.msra.mxu0 0.0
  %1446 = vmatprep.subr.mxu0 0.0
  %1447 = vmatpush1.msra.mxu0 0.0
  %1448 = vmatprep.subr.mxu0 0.0
  %1449 = vmatpush1.msra.mxu0 0.0
  %1450 = vmatprep.subr.mxu0 0.0
  %1451 = vmatpush1.msra.mxu0 0.0
  %1452 = vmatprep.subr.mxu0 0.0
  %1453 = vmatpush1.msra.mxu0 0.0
  %1454 = vmatprep.subr.mxu0 0.0
  %1455 = vmatpush1.msra.mxu0 %v1154
  %1456 = vmatprep.subr.mxu0 0.0
  %1457 = vmatpush1.msra.mxu0 %v1153
  %1458 = vmatprep.subr.mxu0 0.0
  %1459 = vmatpush1.msra.mxu0 %v1152
  %1460 = vmatprep.subr.mxu0 0.0
  %1461 = vmatpush1.msra.mxu0 %v1151
  %1462 = vmatprep.subr.mxu0 0.0
  %1463 = vmatpush2.msra.mxu0 0.0
  %1464 = vmatprep.subr.mxu0 0.0
  %1465 = vmatpush2.msra.mxu0 0.0
  %1466 = vmatprep.subr.mxu0 0.0
  %1467 = vmatpush2.msra.mxu0 0.0
  %1468 = vmatprep.subr.mxu0 0.0
  %1469 = vmatpush2.msra.mxu0 0.0
  %1470 = vmatprep.subr.mxu0 0.0
  %1471 = vmatpush2.msra.mxu0 0.0
  %1472 = vmatprep.subr.mxu0 0.0
  %1473 = vmatpush2.msra.mxu0 0.0
  %1474 = vmatprep.subr.mxu0 0.0
  %1475 = vmatpush2.msra.mxu0 0.0
  %1476 = vmatprep.subr.mxu0 0.0
  %1477 = vmatpush2.msra.mxu0 0.0
  %1478 = vmatprep.subr.mxu0 0.0
  %1479 = vmatpush2.msra.mxu0 0.0
  %1480 = vmatprep.subr.mxu0 0.0
  %1481 = vmatpush2.msra.mxu0 0.0
  %1482 = vmatprep.subr.mxu0 0.0
  %1483 = vmatpush2.msra.mxu0 0.0
  %1484 = vmatprep.subr.mxu0 0.0
  %1485 = vmatpush2.msra.mxu0 0.0
  %1486 = vmatprep.subr.mxu0 0.0
  %1487 = vmatpush2.msra.mxu0 0.0
  %1488 = vmatprep.subr.mxu0 0.0
  %1489 = vmatpush2.msra.mxu0 0.0
  %1490 = vmatprep.subr.mxu0 0.0
  %1491 = vmatpush2.msra.mxu0 0.0
  %1492 = vmatprep.subr.mxu0 0.0
  %1493 = vmatpush2.msra.mxu0 0.0
  %1494 = vmatprep.mubr.f32.mxu0 0.0
  %1495 = vmatmul.mubr.f32.gmra.mxu0 %v1428
  %v1496 = vpop.f32.mrf.mxu0
  %v1497 = vadd.f32 0.0, %v1496
  %v1498 = vpop.f32.mrf.mxu0
  %1499 = vdwg.mxu0
  %v1500 = vadd.f32 %v1426, %v1497
  %v1501 = vxor.u32 %v1500, 2147483648
  %v1502 = vmul.f32 %v1501, 1.442695
  %v1503 = vpow.pop %v1502
  %v1504 = vadd.f32 %v1503, 1.0
  %v1505 = vrcp.pop %v1504
  %v1506 = vmul.f32 1.0, %v1505
  %v1507 = vtanh.pop %v1500
  %1509 = vrot.lane.b32.xlu0 %v1425, 32
  %v1510 = vpop.permute.xlu0 %1509
  %v1512 = vmul.f32 %v1506, %v1510
  %1514 = vrot.lane.b32.xlu0 %v1507, 64
  %v1515 = vpop.permute.xlu0 %1514
  %v1517 = vmul.f32 %v1506, %v1515
  %1519 = vrot.lane.b32.xlu0 %v1517, 32
  %v1520 = vpop.permute.xlu0 %1519
  %v1522 = vadd.f32 %v1512, %v1520
  %v1523 = vtanh.pop %v1522
  %1525 = vrot.lane.b32.xlu0 %v1523, 64
  %v1526 = vpop.permute.xlu0 %1525
  %v1528 = vmul.f32 %v1506, %v1526
  %1530 = vrot.lane.b32.xlu0 %v1522, 96
  %v1531 = vpop.permute.xlu0 %1530
  %1533 = vst.msk [vmem:[#allocation3] sm:$0xff] %vm199, %v1531
  %1535 = vrot.lane.b32.xlu0 %v1528, 32
  %v1536 = vpop.permute.xlu0 %1535
  %1538 = vst.msk [vmem:[#allocation2] sm:$0xff] %vm199, %v1536
  %v1539 = vld [vmem:[#allocation2] sm:$0xff]
  %v1540 = vld [vmem:[#allocation3] sm:$0xff]
  %v1541 = vld [vmem:[%s438] sm:$0xff]
  %v1543 = vsel %vm199, %v1539, 0
  %1545 = vmatprep.subr.mxu0 0.0
  %1546 = vmatpush1.msra.mxu0 0.0
  %1547 = vmatprep.subr.mxu0 0.0
  %1548 = vmatpush1.msra.mxu0 0.0
  %1549 = vmatprep.subr.mxu0 0.0
  %1550 = vmatpush1.msra.mxu0 0.0
  %1551 = vmatprep.subr.mxu0 0.0
  %1552 = vmatpush1.msra.mxu0 0.0
  %1553 = vmatprep.subr.mxu0 0.0
  %1554 = vmatpush1.msra.mxu0 0.0
  %1555 = vmatprep.subr.mxu0 0.0
  %1556 = vmatpush1.msra.mxu0 0.0
  %1557 = vmatprep.subr.mxu0 0.0
  %1558 = vmatpush1.msra.mxu0 0.0
  %1559 = vmatprep.subr.mxu0 0.0
  %1560 = vmatpush1.msra.mxu0 0.0
  %1561 = vmatprep.subr.mxu0 0.0
  %1562 = vmatpush1.msra.mxu0 0.0
  %1563 = vmatprep.subr.mxu0 0.0
  %1564 = vmatpush1.msra.mxu0 0.0
  %1565 = vmatprep.subr.mxu0 0.0
  %1566 = vmatpush1.msra.mxu0 0.0
  %1567 = vmatprep.subr.mxu0 0.0
  %1568 = vmatpush1.msra.mxu0 0.0
  %1569 = vmatprep.subr.mxu0 0.0
  %1570 = vmatpush1.msra.mxu0 %v1154
  %1571 = vmatprep.subr.mxu0 0.0
  %1572 = vmatpush1.msra.mxu0 %v1153
  %1573 = vmatprep.subr.mxu0 0.0
  %1574 = vmatpush1.msra.mxu0 %v1152
  %1575 = vmatprep.subr.mxu0 0.0
  %1576 = vmatpush1.msra.mxu0 %v1151
  %1577 = vmatprep.subr.mxu0 0.0
  %1578 = vmatpush2.msra.mxu0 0.0
  %1579 = vmatprep.subr.mxu0 0.0
  %1580 = vmatpush2.msra.mxu0 0.0
  %1581 = vmatprep.subr.mxu0 0.0
  %1582 = vmatpush2.msra.mxu0 0.0
  %1583 = vmatprep.subr.mxu0 0.0
  %1584 = vmatpush2.msra.mxu0 0.0
  %1585 = vmatprep.subr.mxu0 0.0
  %1586 = vmatpush2.msra.mxu0 0.0
  %1587 = vmatprep.subr.mxu0 0.0
  %1588 = vmatpush2.msra.mxu0 0.0
  %1589 = vmatprep.subr.mxu0 0.0
  %1590 = vmatpush2.msra.mxu0 0.0
  %1591 = vmatprep.subr.mxu0 0.0
  %1592 = vmatpush2.msra.mxu0 0.0
  %1593 = vmatprep.subr.mxu0 0.0
  %1594 = vmatpush2.msra.mxu0 0.0
  %1595 = vmatprep.subr.mxu0 0.0
  %1596 = vmatpush2.msra.mxu0 0.0
  %1597 = vmatprep.subr.mxu0 0.0
  %1598 = vmatpush2.msra.mxu0 0.0
  %1599 = vmatprep.subr.mxu0 0.0
  %1600 = vmatpush2.msra.mxu0 0.0
  %1601 = vmatprep.subr.mxu0 0.0
  %1602 = vmatpush2.msra.mxu0 0.0
  %1603 = vmatprep.subr.mxu0 0.0
  %1604 = vmatpush2.msra.mxu0 0.0
  %1605 = vmatprep.subr.mxu0 0.0
  %1606 = vmatpush2.msra.mxu0 0.0
  %1607 = vmatprep.subr.mxu0 0.0
  %1608 = vmatpush2.msra.mxu0 0.0
  %1609 = vmatprep.mubr.f32.mxu0 0.0
  %1610 = vmatmul.mubr.f32.gmra.mxu0 %v1543
  %v1611 = vpop.f32.mrf.mxu0
  %v1612 = vadd.f32 0.0, %v1611
  %v1613 = vpop.f32.mrf.mxu0
  %1614 = vdwg.mxu0
  %v1615 = vadd.f32 %v1541, %v1612
  %v1616 = vxor.u32 %v1615, 2147483648
  %v1617 = vmul.f32 %v1616, 1.442695
  %v1618 = vpow.pop %v1617
  %v1619 = vadd.f32 %v1618, 1.0
  %v1620 = vrcp.pop %v1619
  %v1621 = vmul.f32 1.0, %v1620
  %v1622 = vtanh.pop %v1615
  %1624 = vrot.lane.b32.xlu0 %v1540, 32
  %v1625 = vpop.permute.xlu0 %1624
  %v1627 = vmul.f32 %v1621, %v1625
  %1629 = vrot.lane.b32.xlu0 %v1622, 64
  %v1630 = vpop.permute.xlu0 %1629
  %v1632 = vmul.f32 %v1621, %v1630
  %1634 = vrot.lane.b32.xlu0 %v1632, 32
  %v1635 = vpop.permute.xlu0 %1634
  %v1637 = vadd.f32 %v1627, %v1635
  %v1638 = vtanh.pop %v1637
  %1640 = vrot.lane.b32.xlu0 %v1638, 64
  %v1641 = vpop.permute.xlu0 %1640
  %v1643 = vmul.f32 %v1621, %v1641
  %1645 = vrot.lane.b32.xlu0 %v1637, 96
  %v1646 = vpop.permute.xlu0 %1645
  %1648 = vst.msk [vmem:[#allocation3] sm:$0xff] %vm199, %v1646
  %1650 = vrot.lane.b32.xlu0 %v1643, 32
  %v1651 = vpop.permute.xlu0 %1650
  %1653 = vst.msk [vmem:[#allocation2] sm:$0xff] %vm199, %v1651
  %v1654 = vld [vmem:[#allocation2] sm:$0xff]
  %v1655 = vld [vmem:[#allocation3] sm:$0xff]
  %v1656 = vld [vmem:[%s556] sm:$0xff]
  %v1658 = vsel %vm199, %v1654, 0
  %1660 = vmatprep.subr.mxu0 0.0
  %1661 = vmatpush1.msra.mxu0 0.0
  %1662 = vmatprep.subr.mxu0 0.0
  %1663 = vmatpush1.msra.mxu0 0.0
  %1664 = vmatprep.subr.mxu0 0.0
  %1665 = vmatpush1.msra.mxu0 0.0
  %1666 = vmatprep.subr.mxu0 0.0
  %1667 = vmatpush1.msra.mxu0 0.0
  %1668 = vmatprep.subr.mxu0 0.0
  %1669 = vmatpush1.msra.mxu0 0.0
  %1670 = vmatprep.subr.mxu0 0.0
  %1671 = vmatpush1.msra.mxu0 0.0
  %1672 = vmatprep.subr.mxu0 0.0
  %1673 = vmatpush1.msra.mxu0 0.0
  %1674 = vmatprep.subr.mxu0 0.0
  %1675 = vmatpush1.msra.mxu0 0.0
  %1676 = vmatprep.subr.mxu0 0.0
  %1677 = vmatpush1.msra.mxu0 0.0
  %1678 = vmatprep.subr.mxu0 0.0
  %1679 = vmatpush1.msra.mxu0 0.0
  %1680 = vmatprep.subr.mxu0 0.0
  %1681 = vmatpush1.msra.mxu0 0.0
  %1682 = vmatprep.subr.mxu0 0.0
  %1683 = vmatpush1.msra.mxu0 0.0
  %1684 = vmatprep.subr.mxu0 0.0
  %1685 = vmatpush1.msra.mxu0 %v1154
  %1686 = vmatprep.subr.mxu0 0.0
  %1687 = vmatpush1.msra.mxu0 %v1153
  %1688 = vmatprep.subr.mxu0 0.0
  %1689 = vmatpush1.msra.mxu0 %v1152
  %1690 = vmatprep.subr.mxu0 0.0
  %1691 = vmatpush1.msra.mxu0 %v1151
  %1692 = vmatprep.subr.mxu0 0.0
  %1693 = vmatpush2.msra.mxu0 0.0
  %1694 = vmatprep.subr.mxu0 0.0
  %1695 = vmatpush2.msra.mxu0 0.0
  %1696 = vmatprep.subr.mxu0 0.0
  %1697 = vmatpush2.msra.mxu0 0.0
  %1698 = vmatprep.subr.mxu0 0.0
  %1699 = vmatpush2.msra.mxu0 0.0
  %1700 = vmatprep.subr.mxu0 0.0
  %1701 = vmatpush2.msra.mxu0 0.0
  %1702 = vmatprep.subr.mxu0 0.0
  %1703 = vmatpush2.msra.mxu0 0.0
  %1704 = vmatprep.subr.mxu0 0.0
  %1705 = vmatpush2.msra.mxu0 0.0
  %1706 = vmatprep.subr.mxu0 0.0
  %1707 = vmatpush2.msra.mxu0 0.0
  %1708 = vmatprep.subr.mxu0 0.0
  %1709 = vmatpush2.msra.mxu0 0.0
  %1710 = vmatprep.subr.mxu0 0.0
  %1711 = vmatpush2.msra.mxu0 0.0
  %1712 = vmatprep.subr.mxu0 0.0
  %1713 = vmatpush2.msra.mxu0 0.0
  %1714 = vmatprep.subr.mxu0 0.0
  %1715 = vmatpush2.msra.mxu0 0.0
  %1716 = vmatprep.subr.mxu0 0.0
  %1717 = vmatpush2.msra.mxu0 0.0
  %1718 = vmatprep.subr.mxu0 0.0
  %1719 = vmatpush2.msra.mxu0 0.0
  %1720 = vmatprep.subr.mxu0 0.0
  %1721 = vmatpush2.msra.mxu0 0.0
  %1722 = vmatprep.subr.mxu0 0.0
  %1723 = vmatpush2.msra.mxu0 0.0
  %1724 = vmatprep.mubr.f32.mxu0 0.0
  %1725 = vmatmul.mubr.f32.gmra.mxu0 %v1658
  %v1726 = vpop.f32.mrf.mxu0
  %v1727 = vadd.f32 0.0, %v1726
  %v1728 = vpop.f32.mrf.mxu0
  %1729 = vdwg.mxu0
  %v1730 = vadd.f32 %v1656, %v1727
  %v1731 = vxor.u32 %v1730, 2147483648
  %v1732 = vmul.f32 %v1731, 1.442695
  %v1733 = vpow.pop %v1732
  %v1734 = vadd.f32 %v1733, 1.0
  %v1735 = vrcp.pop %v1734
  %v1736 = vmul.f32 1.0, %v1735
  %v1737 = vtanh.pop %v1730
  %1739 = vrot.lane.b32.xlu0 %v1655, 32
  %v1740 = vpop.permute.xlu0 %1739
  %v1742 = vmul.f32 %v1736, %v1740
  %1744 = vrot.lane.b32.xlu0 %v1737, 64
  %v1745 = vpop.permute.xlu0 %1744
  %v1747 = vmul.f32 %v1736, %v1745
  %1749 = vrot.lane.b32.xlu0 %v1747, 32
  %v1750 = vpop.permute.xlu0 %1749
  %v1752 = vadd.f32 %v1742, %v1750
  %v1753 = vtanh.pop %v1752
  %1755 = vrot.lane.b32.xlu0 %v1753, 64
  %v1756 = vpop.permute.xlu0 %1755
  %v1758 = vmul.f32 %v1736, %v1756
  %1760 = vrot.lane.b32.xlu0 %v1752, 96
  %v1761 = vpop.permute.xlu0 %1760
  %1763 = vst.msk [vmem:[#allocation3] sm:$0xff] %vm199, %v1761
  %1765 = vrot.lane.b32.xlu0 %v1758, 32
  %v1766 = vpop.permute.xlu0 %1765
  %1768 = vst.msk [vmem:[#allocation2] sm:$0xff] %vm199, %v1766
  %v1769 = vld [vmem:[#allocation2] sm:$0xff]
  %v1770 = vld [vmem:[#allocation3] sm:$0xff]
  %v1771 = vld [vmem:[%s674] sm:$0xff]
  %v1773 = vsel %vm199, %v1769, 0
  %1775 = vmatprep.subr.mxu0 0.0
  %1776 = vmatpush1.msra.mxu0 0.0
  %1777 = vmatprep.subr.mxu0 0.0
  %1778 = vmatpush1.msra.mxu0 0.0
  %1779 = vmatprep.subr.mxu0 0.0
  %1780 = vmatpush1.msra.mxu0 0.0
  %1781 = vmatprep.subr.mxu0 0.0
  %1782 = vmatpush1.msra.mxu0 0.0
  %1783 = vmatprep.subr.mxu0 0.0
  %1784 = vmatpush1.msra.mxu0 0.0
  %1785 = vmatprep.subr.mxu0 0.0
  %1786 = vmatpush1.msra.mxu0 0.0
  %1787 = vmatprep.subr.mxu0 0.0
  %1788 = vmatpush1.msra.mxu0 0.0
  %1789 = vmatprep.subr.mxu0 0.0
  %1790 = vmatpush1.msra.mxu0 0.0
  %1791 = vmatprep.subr.mxu0 0.0
  %1792 = vmatpush1.msra.mxu0 0.0
  %1793 = vmatprep.subr.mxu0 0.0
  %1794 = vmatpush1.msra.mxu0 0.0
  %1795 = vmatprep.subr.mxu0 0.0
  %1796 = vmatpush1.msra.mxu0 0.0
  %1797 = vmatprep.subr.mxu0 0.0
  %1798 = vmatpush1.msra.mxu0 0.0
  %1799 = vmatprep.subr.mxu0 0.0
  %1800 = vmatpush1.msra.mxu0 %v1154
  %1801 = vmatprep.subr.mxu0 0.0
  %1802 = vmatpush1.msra.mxu0 %v1153
  %1803 = vmatprep.subr.mxu0 0.0
  %1804 = vmatpush1.msra.mxu0 %v1152
  %1805 = vmatprep.subr.mxu0 0.0
  %1806 = vmatpush1.msra.mxu0 %v1151
  %1807 = vmatprep.subr.mxu0 0.0
  %1808 = vmatpush2.msra.mxu0 0.0
  %1809 = vmatprep.subr.mxu0 0.0
  %1810 = vmatpush2.msra.mxu0 0.0
  %1811 = vmatprep.subr.mxu0 0.0
  %1812 = vmatpush2.msra.mxu0 0.0
  %1813 = vmatprep.subr.mxu0 0.0
  %1814 = vmatpush2.msra.mxu0 0.0
  %1815 = vmatprep.subr.mxu0 0.0
  %1816 = vmatpush2.msra.mxu0 0.0
  %1817 = vmatprep.subr.mxu0 0.0
  %1818 = vmatpush2.msra.mxu0 0.0
  %1819 = vmatprep.subr.mxu0 0.0
  %1820 = vmatpush2.msra.mxu0 0.0
  %1821 = vmatprep.subr.mxu0 0.0
  %1822 = vmatpush2.msra.mxu0 0.0
  %1823 = vmatprep.subr.mxu0 0.0
  %1824 = vmatpush2.msra.mxu0 0.0
  %1825 = vmatprep.subr.mxu0 0.0
  %1826 = vmatpush2.msra.mxu0 0.0
  %1827 = vmatprep.subr.mxu0 0.0
  %1828 = vmatpush2.msra.mxu0 0.0
  %1829 = vmatprep.subr.mxu0 0.0
  %1830 = vmatpush2.msra.mxu0 0.0
  %1831 = vmatprep.subr.mxu0 0.0
  %1832 = vmatpush2.msra.mxu0 0.0
  %1833 = vmatprep.subr.mxu0 0.0
  %1834 = vmatpush2.msra.mxu0 0.0
  %1835 = vmatprep.subr.mxu0 0.0
  %1836 = vmatpush2.msra.mxu0 0.0
  %1837 = vmatprep.subr.mxu0 0.0
  %1838 = vmatpush2.msra.mxu0 0.0
  %1839 = vmatprep.mubr.f32.mxu0 0.0
  %1840 = vmatmul.mubr.f32.gmra.mxu0 %v1773
  %v1841 = vpop.f32.mrf.mxu0
  %v1842 = vadd.f32 0.0, %v1841
  %v1843 = vpop.f32.mrf.mxu0
  %1844 = vdwg.mxu0
  %v1845 = vadd.f32 %v1771, %v1842
  %v1846 = vxor.u32 %v1845, 2147483648
  %v1847 = vmul.f32 %v1846, 1.442695
  %v1848 = vpow.pop %v1847
  %v1849 = vadd.f32 %v1848, 1.0
  %v1850 = vrcp.pop %v1849
  %v1851 = vmul.f32 1.0, %v1850
  %v1852 = vtanh.pop %v1845
  %1854 = vrot.lane.b32.xlu0 %v1770, 32
  %v1855 = vpop.permute.xlu0 %1854
  %v1857 = vmul.f32 %v1851, %v1855
  %1859 = vrot.lane.b32.xlu0 %v1852, 64
  %v1860 = vpop.permute.xlu0 %1859
  %v1862 = vmul.f32 %v1851, %v1860
  %1864 = vrot.lane.b32.xlu0 %v1862, 32
  %v1865 = vpop.permute.xlu0 %1864
  %v1867 = vadd.f32 %v1857, %v1865
  %v1868 = vtanh.pop %v1867
  %1870 = vrot.lane.b32.xlu0 %v1868, 64
  %v1871 = vpop.permute.xlu0 %1870
  %v1873 = vmul.f32 %v1851, %v1871
  %1875 = vrot.lane.b32.xlu0 %v1867, 96
  %v1876 = vpop.permute.xlu0 %1875
  %1878 = vst.msk [vmem:[#allocation3] sm:$0xff] %vm199, %v1876
  %1880 = vrot.lane.b32.xlu0 %v1873, 32
  %v1881 = vpop.permute.xlu0 %1880
  %1883 = vst.msk [vmem:[#allocation2] sm:$0xff] %vm199, %v1881
  %v1884 = vld [vmem:[#allocation2] sm:$0xff]
  %v1885 = vld [vmem:[#allocation3] sm:$0xff]
  %v1886 = vld [vmem:[%s792] sm:$0xff]
  %v1888 = vsel %vm199, %v1884, 0
  %1890 = vmatprep.subr.mxu0 0.0
  %1891 = vmatpush1.msra.mxu0 0.0
  %1892 = vmatprep.subr.mxu0 0.0
  %1893 = vmatpush1.msra.mxu0 0.0
  %1894 = vmatprep.subr.mxu0 0.0
  %1895 = vmatpush1.msra.mxu0 0.0
  %1896 = vmatprep.subr.mxu0 0.0
  %1897 = vmatpush1.msra.mxu0 0.0
  %1898 = vmatprep.subr.mxu0 0.0
  %1899 = vmatpush1.msra.mxu0 0.0
  %1900 = vmatprep.subr.mxu0 0.0
  %1901 = vmatpush1.msra.mxu0 0.0
  %1902 = vmatprep.subr.mxu0 0.0
  %1903 = vmatpush1.msra.mxu0 0.0
  %1904 = vmatprep.subr.mxu0 0.0
  %1905 = vmatpush1.msra.mxu0 0.0
  %1906 = vmatprep.subr.mxu0 0.0
  %1907 = vmatpush1.msra.mxu0 0.0
  %1908 = vmatprep.subr.mxu0 0.0
  %1909 = vmatpush1.msra.mxu0 0.0
  %1910 = vmatprep.subr.mxu0 0.0
  %1911 = vmatpush1.msra.mxu0 0.0
  %1912 = vmatprep.subr.mxu0 0.0
  %1913 = vmatpush1.msra.mxu0 0.0
  %1914 = vmatprep.subr.mxu0 0.0
  %1915 = vmatpush1.msra.mxu0 %v1154
  %1916 = vmatprep.subr.mxu0 0.0
  %1917 = vmatpush1.msra.mxu0 %v1153
  %1918 = vmatprep.subr.mxu0 0.0
  %1919 = vmatpush1.msra.mxu0 %v1152
  %1920 = vmatprep.subr.mxu0 0.0
  %1921 = vmatpush1.msra.mxu0 %v1151
  %1922 = vmatprep.subr.mxu0 0.0
  %1923 = vmatpush2.msra.mxu0 0.0
  %1924 = vmatprep.subr.mxu0 0.0
  %1925 = vmatpush2.msra.mxu0 0.0
  %1926 = vmatprep.subr.mxu0 0.0
  %1927 = vmatpush2.msra.mxu0 0.0
  %1928 = vmatprep.subr.mxu0 0.0
  %1929 = vmatpush2.msra.mxu0 0.0
  %1930 = vmatprep.subr.mxu0 0.0
  %1931 = vmatpush2.msra.mxu0 0.0
  %1932 = vmatprep.subr.mxu0 0.0
  %1933 = vmatpush2.msra.mxu0 0.0
  %1934 = vmatprep.subr.mxu0 0.0
  %1935 = vmatpush2.msra.mxu0 0.0
  %1936 = vmatprep.subr.mxu0 0.0
  %1937 = vmatpush2.msra.mxu0 0.0
  %1938 = vmatprep.subr.mxu0 0.0
  %1939 = vmatpush2.msra.mxu0 0.0
  %1940 = vmatprep.subr.mxu0 0.0
  %1941 = vmatpush2.msra.mxu0 0.0
  %1942 = vmatprep.subr.mxu0 0.0
  %1943 = vmatpush2.msra.mxu0 0.0
  %1944 = vmatprep.subr.mxu0 0.0
  %1945 = vmatpush2.msra.mxu0 0.0
  %1946 = vmatprep.subr.mxu0 0.0
  %1947 = vmatpush2.msra.mxu0 0.0
  %1948 = vmatprep.subr.mxu0 0.0
  %1949 = vmatpush2.msra.mxu0 0.0
  %1950 = vmatprep.subr.mxu0 0.0
  %1951 = vmatpush2.msra.mxu0 0.0
  %1952 = vmatprep.subr.mxu0 0.0
  %1953 = vmatpush2.msra.mxu0 0.0
  %1954 = vmatprep.mubr.f32.mxu0 0.0
  %1955 = vmatmul.mubr.f32.gmra.mxu0 %v1888
  %v1956 = vpop.f32.mrf.mxu0
  %v1957 = vadd.f32 0.0, %v1956
  %v1958 = vpop.f32.mrf.mxu0
  %1959 = vdwg.mxu0
  %v1960 = vadd.f32 %v1886, %v1957
  %v1961 = vxor.u32 %v1960, 2147483648
  %v1962 = vmul.f32 %v1961, 1.442695
  %v1963 = vpow.pop %v1962
  %v1964 = vadd.f32 %v1963, 1.0
  %v1965 = vrcp.pop %v1964
  %v1966 = vmul.f32 1.0, %v1965
  %v1967 = vtanh.pop %v1960
  %1969 = vrot.lane.b32.xlu0 %v1885, 32
  %v1970 = vpop.permute.xlu0 %1969
  %v1972 = vmul.f32 %v1966, %v1970
  %1974 = vrot.lane.b32.xlu0 %v1967, 64
  %v1975 = vpop.permute.xlu0 %1974
  %v1977 = vmul.f32 %v1966, %v1975
  %1979 = vrot.lane.b32.xlu0 %v1977, 32
  %v1980 = vpop.permute.xlu0 %1979
  %v1982 = vadd.f32 %v1972, %v1980
  %v1983 = vtanh.pop %v1982
  %1985 = vrot.lane.b32.xlu0 %v1983, 64
  %v1986 = vpop.permute.xlu0 %1985
  %v1988 = vmul.f32 %v1966, %v1986
  %1990 = vrot.lane.b32.xlu0 %v1982, 96
  %v1991 = vpop.permute.xlu0 %1990
  %1993 = vst.msk [vmem:[#allocation3] sm:$0xff] %vm199, %v1991
  %1995 = vrot.lane.b32.xlu0 %v1988, 32
  %v1996 = vpop.permute.xlu0 %1995
  %1998 = vst.msk [vmem:[#allocation2] sm:$0xff] %vm199, %v1996
  %v1999 = vld [vmem:[#allocation2] sm:$0xff]
  %v2000 = vld [vmem:[#allocation3] sm:$0xff]
  %v2001 = vld [vmem:[%s910] sm:$0xff]
  %v2003 = vsel %vm199, %v1999, 0
  %2005 = vmatprep.subr.mxu0 0.0
  %2006 = vmatpush1.msra.mxu0 0.0
  %2007 = vmatprep.subr.mxu0 0.0
  %2008 = vmatpush1.msra.mxu0 0.0
  %2009 = vmatprep.subr.mxu0 0.0
  %2010 = vmatpush1.msra.mxu0 0.0
  %2011 = vmatprep.subr.mxu0 0.0
  %2012 = vmatpush1.msra.mxu0 0.0
  %2013 = vmatprep.subr.mxu0 0.0
  %2014 = vmatpush1.msra.mxu0 0.0
  %2015 = vmatprep.subr.mxu0 0.0
  %2016 = vmatpush1.msra.mxu0 0.0
  %2017 = vmatprep.subr.mxu0 0.0
  %2018 = vmatpush1.msra.mxu0 0.0
  %2019 = vmatprep.subr.mxu0 0.0
  %2020 = vmatpush1.msra.mxu0 0.0
  %2021 = vmatprep.subr.mxu0 0.0
  %2022 = vmatpush1.msra.mxu0 0.0
  %2023 = vmatprep.subr.mxu0 0.0
  %2024 = vmatpush1.msra.mxu0 0.0
  %2025 = vmatprep.subr.mxu0 0.0
  %2026 = vmatpush1.msra.mxu0 0.0
  %2027 = vmatprep.subr.mxu0 0.0
  %2028 = vmatpush1.msra.mxu0 0.0
  %2029 = vmatprep.subr.mxu0 0.0
  %2030 = vmatpush1.msra.mxu0 %v1154
  %2031 = vmatprep.subr.mxu0 0.0
  %2032 = vmatpush1.msra.mxu0 %v1153
  %2033 = vmatprep.subr.mxu0 0.0
  %2034 = vmatpush1.msra.mxu0 %v1152
  %2035 = vmatprep.subr.mxu0 0.0
  %2036 = vmatpush1.msra.mxu0 %v1151
  %2037 = vmatprep.subr.mxu0 0.0
  %2038 = vmatpush2.msra.mxu0 0.0
  %2039 = vmatprep.subr.mxu0 0.0
  %2040 = vmatpush2.msra.mxu0 0.0
  %2041 = vmatprep.subr.mxu0 0.0
  %2042 = vmatpush2.msra.mxu0 0.0
  %2043 = vmatprep.subr.mxu0 0.0
  %2044 = vmatpush2.msra.mxu0 0.0
  %2045 = vmatprep.subr.mxu0 0.0
  %2046 = vmatpush2.msra.mxu0 0.0
  %2047 = vmatprep.subr.mxu0 0.0
  %2048 = vmatpush2.msra.mxu0 0.0
  %2049 = vmatprep.subr.mxu0 0.0
  %2050 = vmatpush2.msra.mxu0 0.0
  %2051 = vmatprep.subr.mxu0 0.0
  %2052 = vmatpush2.msra.mxu0 0.0
  %2053 = vmatprep.subr.mxu0 0.0
  %2054 = vmatpush2.msra.mxu0 0.0
  %2055 = vmatprep.subr.mxu0 0.0
  %2056 = vmatpush2.msra.mxu0 0.0
  %2057 = vmatprep.subr.mxu0 0.0
  %2058 = vmatpush2.msra.mxu0 0.0
  %2059 = vmatprep.subr.mxu0 0.0
  %2060 = vmatpush2.msra.mxu0 0.0
  %2061 = vmatprep.subr.mxu0 0.0
  %2062 = vmatpush2.msra.mxu0 0.0
  %2063 = vmatprep.subr.mxu0 0.0
  %2064 = vmatpush2.msra.mxu0 0.0
  %2065 = vmatprep.subr.mxu0 0.0
  %2066 = vmatpush2.msra.mxu0 0.0
  %2067 = vmatprep.subr.mxu0 0.0
  %2068 = vmatpush2.msra.mxu0 0.0
  %2069 = vmatprep.mubr.f32.mxu0 0.0
  %2070 = vmatmul.mubr.f32.gmra.mxu0 %v2003
  %v2071 = vpop.f32.mrf.mxu0
  %v2072 = vadd.f32 0.0, %v2071
  %v2073 = vpop.f32.mrf.mxu0
  %2074 = vdwg.mxu0
  %v2075 = vadd.f32 %v2001, %v2072
  %v2076 = vxor.u32 %v2075, 2147483648
  %v2077 = vmul.f32 %v2076, 1.442695
  %v2078 = vpow.pop %v2077
  %v2079 = vadd.f32 %v2078, 1.0
  %v2080 = vrcp.pop %v2079
  %v2081 = vmul.f32 1.0, %v2080
  %v2082 = vtanh.pop %v2075
  %2084 = vrot.lane.b32.xlu0 %v2000, 32
  %v2085 = vpop.permute.xlu0 %2084
  %v2087 = vmul.f32 %v2081, %v2085
  %2089 = vrot.lane.b32.xlu0 %v2082, 64
  %v2090 = vpop.permute.xlu0 %2089
  %v2092 = vmul.f32 %v2081, %v2090
  %2094 = vrot.lane.b32.xlu0 %v2092, 32
  %v2095 = vpop.permute.xlu0 %2094
  %v2097 = vadd.f32 %v2087, %v2095
  %v2098 = vtanh.pop %v2097
  %2100 = vrot.lane.b32.xlu0 %v2098, 64
  %v2101 = vpop.permute.xlu0 %2100
  %v2103 = vmul.f32 %v2081, %v2101
  %2105 = vrot.lane.b32.xlu0 %v2097, 96
  %v2106 = vpop.permute.xlu0 %2105
  %2108 = vst.msk [vmem:[#allocation3] sm:$0xff] %vm199, %v2106
  %2110 = vrot.lane.b32.xlu0 %v2103, 32
  %v2111 = vpop.permute.xlu0 %2110
  %2113 = vst.msk [vmem:[#allocation2] sm:$0xff] %vm199, %v2111
  %v2114 = vld [vmem:[#allocation2] sm:$0xff]
  %v2115 = vld [vmem:[#allocation3] sm:$0xff]
  %v2116 = vld [vmem:[%s1028] sm:$0xff]
  %v2118 = vsel %vm199, %v2114, 0
  %2120 = vmatprep.subr.mxu0 0.0
  %2121 = vmatpush1.msra.mxu0 0.0
  %2122 = vmatprep.subr.mxu0 0.0
  %2123 = vmatpush1.msra.mxu0 0.0
  %2124 = vmatprep.subr.mxu0 0.0
  %2125 = vmatpush1.msra.mxu0 0.0
  %2126 = vmatprep.subr.mxu0 0.0
  %2127 = vmatpush1.msra.mxu0 0.0
  %2128 = vmatprep.subr.mxu0 0.0
  %2129 = vmatpush1.msra.mxu0 0.0
  %2130 = vmatprep.subr.mxu0 0.0
  %2131 = vmatpush1.msra.mxu0 0.0
  %2132 = vmatprep.subr.mxu0 0.0
  %2133 = vmatpush1.msra.mxu0 0.0
  %2134 = vmatprep.subr.mxu0 0.0
  %2135 = vmatpush1.msra.mxu0 0.0
  %2136 = vmatprep.subr.mxu0 0.0
  %2137 = vmatpush1.msra.mxu0 0.0
  %2138 = vmatprep.subr.mxu0 0.0
  %2139 = vmatpush1.msra.mxu0 0.0
  %2140 = vmatprep.subr.mxu0 0.0
  %2141 = vmatpush1.msra.mxu0 0.0
  %2142 = vmatprep.subr.mxu0 0.0
  %2143 = vmatpush1.msra.mxu0 0.0
  %2144 = vmatprep.subr.mxu0 0.0
  %2145 = vmatpush1.msra.mxu0 %v1154
  %2146 = vmatprep.subr.mxu0 0.0
  %2147 = vmatpush1.msra.mxu0 %v1153
  %2148 = vmatprep.subr.mxu0 0.0
  %2149 = vmatpush1.msra.mxu0 %v1152
  %2150 = vmatprep.subr.mxu0 0.0
  %2151 = vmatpush1.msra.mxu0 %v1151
  %2152 = vmatprep.subr.mxu0 0.0
  %2153 = vmatpush2.msra.mxu0 0.0
  %2154 = vmatprep.subr.mxu0 0.0
  %2155 = vmatpush2.msra.mxu0 0.0
  %2156 = vmatprep.subr.mxu0 0.0
  %2157 = vmatpush2.msra.mxu0 0.0
  %2158 = vmatprep.subr.mxu0 0.0
  %2159 = vmatpush2.msra.mxu0 0.0
  %2160 = vmatprep.subr.mxu0 0.0
  %2161 = vmatpush2.msra.mxu0 0.0
  %2162 = vmatprep.subr.mxu0 0.0
  %2163 = vmatpush2.msra.mxu0 0.0
  %2164 = vmatprep.subr.mxu0 0.0
  %2165 = vmatpush2.msra.mxu0 0.0
  %2166 = vmatprep.subr.mxu0 0.0
  %2167 = vmatpush2.msra.mxu0 0.0
  %2168 = vmatprep.subr.mxu0 0.0
  %2169 = vmatpush2.msra.mxu0 0.0
  %2170 = vmatprep.subr.mxu0 0.0
  %2171 = vmatpush2.msra.mxu0 0.0
  %2172 = vmatprep.subr.mxu0 0.0
  %2173 = vmatpush2.msra.mxu0 0.0
  %2174 = vmatprep.subr.mxu0 0.0
  %2175 = vmatpush2.msra.mxu0 0.0
  %2176 = vmatprep.subr.mxu0 0.0
  %2177 = vmatpush2.msra.mxu0 0.0
  %2178 = vmatprep.subr.mxu0 0.0
  %2179 = vmatpush2.msra.mxu0 0.0
  %2180 = vmatprep.subr.mxu0 0.0
  %2181 = vmatpush2.msra.mxu0 0.0
  %2182 = vmatprep.subr.mxu0 0.0
  %2183 = vmatpush2.msra.mxu0 0.0
  %2184 = vmatprep.mubr.f32.mxu0 0.0
  %2185 = vmatmul.mubr.f32.gmra.mxu0 %v2118
  %v2186 = vpop.f32.mrf.mxu0
  %v2187 = vadd.f32 0.0, %v2186
  %v2188 = vpop.f32.mrf.mxu0
  %2189 = vdwg.mxu0
  %v2190 = vadd.f32 %v2116, %v2187
  %v2191 = vxor.u32 %v2190, 2147483648
  %v2192 = vmul.f32 %v2191, 1.442695
  %v2193 = vpow.pop %v2192
  %v2194 = vadd.f32 %v2193, 1.0
  %v2195 = vrcp.pop %v2194
  %v2196 = vmul.f32 1.0, %v2195
  %v2197 = vtanh.pop %v2190
  %2199 = vrot.lane.b32.xlu0 %v2115, 32
  %v2200 = vpop.permute.xlu0 %2199
  %v2202 = vmul.f32 %v2196, %v2200
  %2204 = vrot.lane.b32.xlu0 %v2197, 64
  %v2205 = vpop.permute.xlu0 %2204
  %v2207 = vmul.f32 %v2196, %v2205
  %2209 = vrot.lane.b32.xlu0 %v2207, 32
  %v2210 = vpop.permute.xlu0 %2209
  %v2212 = vadd.f32 %v2202, %v2210
  %v2213 = vtanh.pop %v2212
  %2215 = vrot.lane.b32.xlu0 %v2213, 64
  %v2216 = vpop.permute.xlu0 %2215
  %v2218 = vmul.f32 %v2196, %v2216
  %2220 = vrot.lane.b32.xlu0 %v2212, 96
  %v2221 = vpop.permute.xlu0 %2220
  %2223 = vst.msk [vmem:[#allocation3] sm:$0xff] %vm199, %v2221
  %2225 = vrot.lane.b32.xlu0 %v2218, 32
  %v2226 = vpop.permute.xlu0 %2225
  %2228 = vst.msk [vmem:[#allocation2] sm:$0xff] %vm199, %v2226
  %v2229 = vld [vmem:[#allocation2] sm:$0xff]
  %v2230 = vtanh.pop %v2229
  %2231 = vst.msk [vmem:[#allocation6 + $0x8] sm:$0xff] %vm199, %v2230
  %v2232 = vld [vmem:[#allocation6] sm:$0xff]
  %v2233 = vld [vmem:[#allocation6 + $0x8] sm:$0xff]
  %v2234 = vld [vmem:[%s7] sm:$0xff]
  %v2235 = vld [vmem:[%s7 + $0x8] sm:$0xff]
  %v2236 = vld [vmem:[%s7 + $0x10] sm:$0xff]
  %v2237 = vld [vmem:[%s7 + $0x18] sm:$0xff]
  %v2238 = vld [vmem:[%s8] sm:$0x1]
  %v2240 = vlaneseq
  %v2241 = vshrl.u32 %v2240, 7
  %v2242 = vsub.s32 0, %v2241
  %v2243 = vrot.slane %v2238, %v2242
  %v2246 = vsel %vm199, %v2232, 0
  %v2249 = vsel %vm199, %v2233, 0
  %2251 = vmatprep.subr.mxu0 0.0
  %2252 = vmatpush1.msra.mxu0 0.0
  %2253 = vmatprep.subr.mxu0 0.0
  %2254 = vmatpush1.msra.mxu0 0.0
  %2255 = vmatprep.subr.mxu0 0.0
  %2256 = vmatpush1.msra.mxu0 0.0
  %2257 = vmatprep.subr.mxu0 0.0
  %2258 = vmatpush1.msra.mxu0 0.0
  %2259 = vmatprep.subr.mxu0 0.0
  %2260 = vmatpush1.msra.mxu0 0.0
  %2261 = vmatprep.subr.mxu0 0.0
  %2262 = vmatpush1.msra.mxu0 0.0
  %2263 = vmatprep.subr.mxu0 0.0
  %2264 = vmatpush1.msra.mxu0 0.0
  %2265 = vmatprep.subr.mxu0 0.0
  %2266 = vmatpush1.msra.mxu0 0.0
  %2267 = vmatprep.subr.mxu0 0.0
  %2268 = vmatpush1.msra.mxu0 0.0
  %2269 = vmatprep.subr.mxu0 0.0
  %2270 = vmatpush1.msra.mxu0 0.0
  %2271 = vmatprep.subr.mxu0 0.0
  %2272 = vmatpush1.msra.mxu0 0.0
  %2273 = vmatprep.subr.mxu0 0.0
  %2274 = vmatpush1.msra.mxu0 0.0
  %2275 = vmatprep.subr.mxu0 0.0
  %2276 = vmatpush1.msra.mxu0 %v2237
  %2277 = vmatprep.subr.mxu0 0.0
  %2278 = vmatpush1.msra.mxu0 %v2236
  %2279 = vmatprep.subr.mxu0 0.0
  %2280 = vmatpush1.msra.mxu0 %v2235
  %2281 = vmatprep.subr.mxu0 0.0
  %2282 = vmatpush1.msra.mxu0 %v2234
  %2283 = vmatprep.subr.mxu0 0.0
  %2284 = vmatpush2.msra.mxu0 0.0
  %2285 = vmatprep.subr.mxu0 0.0
  %2286 = vmatpush2.msra.mxu0 0.0
  %2287 = vmatprep.subr.mxu0 0.0
  %2288 = vmatpush2.msra.mxu0 0.0
  %2289 = vmatprep.subr.mxu0 0.0
  %2290 = vmatpush2.msra.mxu0 0.0
  %2291 = vmatprep.subr.mxu0 0.0
  %2292 = vmatpush2.msra.mxu0 0.0
  %2293 = vmatprep.subr.mxu0 0.0
  %2294 = vmatpush2.msra.mxu0 0.0
  %2295 = vmatprep.subr.mxu0 0.0
  %2296 = vmatpush2.msra.mxu0 0.0
  %2297 = vmatprep.subr.mxu0 0.0
  %2298 = vmatpush2.msra.mxu0 0.0
  %2299 = vmatprep.subr.mxu0 0.0
  %2300 = vmatpush2.msra.mxu0 0.0
  %2301 = vmatprep.subr.mxu0 0.0
  %2302 = vmatpush2.msra.mxu0 0.0
  %2303 = vmatprep.subr.mxu0 0.0
  %2304 = vmatpush2.msra.mxu0 0.0
  %2305 = vmatprep.subr.mxu0 0.0
  %2306 = vmatpush2.msra.mxu0 0.0
  %2307 = vmatprep.subr.mxu0 0.0
  %2308 = vmatpush2.msra.mxu0 0.0
  %2309 = vmatprep.subr.mxu0 0.0
  %2310 = vmatpush2.msra.mxu0 0.0
  %2311 = vmatprep.subr.mxu0 0.0
  %2312 = vmatpush2.msra.mxu0 0.0
  %2313 = vmatprep.subr.mxu0 0.0
  %2314 = vmatpush2.msra.mxu0 0.0
  %2315 = vmatprep.mubr.f32.mxu0 0.0
  %2316 = vmatmul.mubr.f32.gmra.mxu0 %v2246
  %v2317 = vpop.f32.mrf.mxu0
  %v2318 = vadd.f32 %v2243, %v2317
  %v2319 = vpop.f32.mrf.mxu0
  %2320 = vmatprep.mubr.f32.mxu0 0.0
  %2321 = vmatmul.mubr.f32.gmra.mxu0 %v2249
  %v2322 = vpop.f32.mrf.mxu0
  %v2323 = vadd.f32 %v2243, %v2322
  %v2324 = vpop.f32.mrf.mxu0
  %2325 = vdwg.mxu0
  %v2326 = vtanh.pop %v2318
  %v2327 = vtanh.pop %v2323
  %v2328 = vld [vmem:[%s9] sm:$0xff]
  %v2329 = vld [vmem:[%s9 + $0x8] sm:$0xff]
  %v2330 = vld [vmem:[%s9 + $0x10] sm:$0xff]
  %v2331 = vld [vmem:[%s9 + $0x18] sm:$0xff]
  %v2332 = vld [vmem:[%s9 + $0x20] sm:$0xff]
  %v2333 = vld [vmem:[%s9 + $0x28] sm:$0xff]
  %v2334 = vld [vmem:[%s9 + $0x30] sm:$0xff]
  %v2335 = vld [vmem:[%s9 + $0x38] sm:$0xff]
  %v2336 = vld [vmem:[%s9 + $0x40] sm:$0xff]
  %v2337 = vld [vmem:[%s9 + $0x48] sm:$0xff]
  %v2338 = vld [vmem:[%s9 + $0x50] sm:$0xff]
  %v2339 = vld [vmem:[%s9 + $0x58] sm:$0xff]
  %v2340 = vld [vmem:[%s9 + $0x60] sm:$0xff]
  %v2341 = vld [vmem:[%s9 + $0x68] sm:$0xff]
  %v2342 = vld [vmem:[%s9 + $0x70] sm:$0xff]
  %v2343 = vld [vmem:[%s9 + $0x78] sm:$0xff]
  %v2344 = vld [vmem:[#allocation7] sm:$0x1]
  %v2346 = vlaneseq
  %v2347 = vshrl.u32 %v2346, 7
  %v2348 = vsub.s32 0, %v2347
  %v2349 = vrot.slane %v2344, %v2348
  %2351 = vmatprep.subr.mxu0 0.0
  %2352 = vmatpush1.msra.mxu0 %v2343
  %2353 = vmatprep.subr.mxu0 0.0
  %2354 = vmatpush1.msra.mxu0 %v2342
  %2355 = vmatprep.subr.mxu0 0.0
  %2356 = vmatpush1.msra.mxu0 %v2341
  %2357 = vmatprep.subr.mxu0 0.0
  %2358 = vmatpush1.msra.mxu0 %v2340
  %2359 = vmatprep.subr.mxu0 0.0
  %2360 = vmatpush1.msra.mxu0 %v2339
  %2361 = vmatprep.subr.mxu0 0.0
  %2362 = vmatpush1.msra.mxu0 %v2338
  %2363 = vmatprep.subr.mxu0 0.0
  %2364 = vmatpush1.msra.mxu0 %v2337
  %2365 = vmatprep.subr.mxu0 0.0
  %2366 = vmatpush1.msra.mxu0 %v2336
  %2367 = vmatprep.subr.mxu0 0.0
  %2368 = vmatpush1.msra.mxu0 %v2335
  %2369 = vmatprep.subr.mxu0 0.0
  %2370 = vmatpush1.msra.mxu0 %v2334
  %2371 = vmatprep.subr.mxu0 0.0
  %2372 = vmatpush1.msra.mxu0 %v2333
  %2373 = vmatprep.subr.mxu0 0.0
  %2374 = vmatpush1.msra.mxu0 %v2332
  %2375 = vmatprep.subr.mxu0 0.0
  %2376 = vmatpush1.msra.mxu0 %v2331
  %2377 = vmatprep.subr.mxu0 0.0
  %2378 = vmatpush1.msra.mxu0 %v2330
  %2379 = vmatprep.subr.mxu0 0.0
  %2380 = vmatpush1.msra.mxu0 %v2329
  %2381 = vmatprep.subr.mxu0 0.0
  %2382 = vmatpush1.msra.mxu0 %v2328
  %2383 = vmatprep.subr.mxu0 0.0
  %2384 = vmatpush2.msra.mxu0 0.0
  %2385 = vmatprep.subr.mxu0 0.0
  %2386 = vmatpush2.msra.mxu0 0.0
  %2387 = vmatprep.subr.mxu0 0.0
  %2388 = vmatpush2.msra.mxu0 0.0
  %2389 = vmatprep.subr.mxu0 0.0
  %2390 = vmatpush2.msra.mxu0 0.0
  %2391 = vmatprep.subr.mxu0 0.0
  %2392 = vmatpush2.msra.mxu0 0.0
  %2393 = vmatprep.subr.mxu0 0.0
  %2394 = vmatpush2.msra.mxu0 0.0
  %2395 = vmatprep.subr.mxu0 0.0
  %2396 = vmatpush2.msra.mxu0 0.0
  %2397 = vmatprep.subr.mxu0 0.0
  %2398 = vmatpush2.msra.mxu0 0.0
  %2399 = vmatprep.subr.mxu0 0.0
  %2400 = vmatpush2.msra.mxu0 0.0
  %2401 = vmatprep.subr.mxu0 0.0
  %2402 = vmatpush2.msra.mxu0 0.0
  %2403 = vmatprep.subr.mxu0 0.0
  %2404 = vmatpush2.msra.mxu0 0.0
  %2405 = vmatprep.subr.mxu0 0.0
  %2406 = vmatpush2.msra.mxu0 0.0
  %2407 = vmatprep.subr.mxu0 0.0
  %2408 = vmatpush2.msra.mxu0 0.0
  %2409 = vmatprep.subr.mxu0 0.0
  %2410 = vmatpush2.msra.mxu0 0.0
  %2411 = vmatprep.subr.mxu0 0.0
  %2412 = vmatpush2.msra.mxu0 0.0
  %2413 = vmatprep.subr.mxu0 0.0
  %2414 = vmatpush2.msra.mxu0 0.0
  %2415 = vmatprep.mubr.f32.mxu0 0.0
  %2416 = vmatmul.mubr.f32.gmra.mxu0 %v2326
  %v2417 = vpop.f32.mrf.mxu0
  %v2418 = vadd.f32 %v2349, %v2417
  %v2419 = vpop.f32.mrf.mxu0
  %2420 = vmatprep.mubr.f32.mxu0 0.0
  %2421 = vmatmul.mubr.f32.gmra.mxu0 %v2327
  %v2422 = vpop.f32.mrf.mxu0
  %v2423 = vadd.f32 %v2349, %v2422
  %v2424 = vpop.f32.mrf.mxu0
  %2425 = vdwg.mxu0
  %vm2426 = vcmask 7168
  %2427 = vst.msk [vmem:[%s11] sm:$0xff] %vm2426, %v2418
  %2428 = vst.msk [vmem:[%s11 + $0x8] sm:$0xff] %vm2426, %v2423
  // Predicated region
  $region46: #{lstm_forward.1} parent=0 // pred_check
    _
  $region47: #{lstm_forward.1} parent=0 // pred_check_branch
    %2430 = sbr.rel (0) target = $region49
  $region48: #{lstm_forward.1} parent=0 // pred_region
    _
  $region49: #{lstm_forward.1} parent=0 // pred_fallthru
    _
  // Predicated region
  $region50: #{lstm_forward.1} parent=0 // pred_check
    _
  $region51: #{lstm_forward.1} parent=0 // pred_check_branch
    %2432 = sbr.rel (0) target = $region53
  $region52: #{lstm_forward.1} parent=0 // pred_region
    _
  $region53: #{lstm_forward.1} parent=0 // pred_fallthru
    _

</llo_original>
